<compile_context>
chip_gen: v7x
topology: tpu7x:2x2x1
jax: 0.10.0
libtpu: 0.0.40
codegen_flags: <defaults>
</compile_context>

<pallas_src>
import functools

import jax
import jax.numpy as jnp
from jax import lax
from jax.experimental import pallas as pl
from jax.experimental.pallas import tpu as pltpu

NEG_INF = -1e30              # additive mask value (exp underflows to 0)
MATMUL_DTYPE = jnp.bfloat16
LN_EPS = 1e-5
# Safe on v5e/v6e/v7x (v7x has 64 MiB physical VMEM). On v6e (128 MiB) this can
# be raised to ~64-100 MiB together with larger row tiles.
VMEM_LIMIT = 32 * 1024 * 1024


# ----------------------------------------------------------------------------
# Small helpers
# ----------------------------------------------------------------------------
def _row_tile(n, cap):
    """Largest tile <= cap that divides n (falls back to full extent)."""
    for t in (1024, 512, 256, 128, 64, 32, 16, 8):
        if t <= cap and t <= n and n % t == 0:
            return t
    return n


def _layernorm(z, g, b):
    mu = jnp.mean(z, axis=-1, keepdims=True)
    var = jnp.mean(jnp.square(z - mu), axis=-1, keepdims=True)
    return (z - mu) * lax.rsqrt(var + LN_EPS) * g + b


def _with_pos(x, pos):
    return x if pos is None else x + pos


def _add_opt(a, b):
    if a is None:
        return b
    if b is None:
        return a
    return a + b


def _augment_xyz(xyz):
    """[B, N, 3] -> (qa, ka) [B, N, 5] such that qa @ ka^T = squared distance."""
    if xyz is None:
        return None, None
    sq = jnp.sum(xyz * xyz, axis=-1, keepdims=True)
    one = jnp.ones_like(sq)
    qa = jnp.concatenate([xyz, sq, one], axis=-1)
    ka = jnp.concatenate([-2.0 * xyz, one, sq], axis=-1)
    return qa, ka


def _kpm_bias(kpm):
    """key_padding_mask [B, Nk] bool (True = ignore) -> additive [B, 1, Nk]."""
    if kpm is None:
        return None
    return jnp.where(kpm, NEG_INF, 0.0).astype(jnp.float32)[:, None, :]


def _cat_bias(a, b, B, Nq, Nk):
    """Concatenate per-stream biases ([B,1,Nk] or [B,Nq,Nk] or None) on batch."""
    if a is None and b is None:
        return None
    if a is None:
        a = jnp.zeros((B, 1, Nk), jnp.float32)
    if b is None:
        b = jnp.zeros((B, 1, Nk), jnp.float32)
    if a.shape[1] != b.shape[1]:
        a = jnp.broadcast_to(a, (B, Nq, Nk))
        b = jnp.broadcast_to(b, (B, Nq, Nk))
    return jnp.concatenate([a, b], axis=0)


# ----------------------------------------------------------------------------
# Kernel 1: row-tiled linear projection that writes head-major output
#   y = x @ W^T + b ;  out[b, h, n, :] = y[n, h*dh:(h+1)*dh]
# ----------------------------------------------------------------------------
def _head_proj_kernel(x_ref, w_ref, b_ref, o_ref, *, nhead, dh):
    y = lax.dot_general(
        x_ref[0].astype(MATMUL_DTYPE), w_ref[...],
        dimension_numbers=(((1,), (1,)), ((), ())),
        preferred_element_type=jnp.float32) + b_ref[...]
    # Head-major layout lets the attention kernel use batch-dim-0 contractions
    # (no in-kernel transposes, no concat).
    for h in range(nhead):
        o_ref[0, h] = y[:, h * dh:(h + 1) * dh].astype(MATMUL_DTYPE)


def head_proj(x, w_bf16, b, nhead):
    """x [B, N, D] -> per-head projection [B, nhead, N, dh] (bf16)."""
    B, N, D = x.shape
    dh = D // nhead
    TM = _row_tile(N, 256)
    kernel = functools.partial(_head_proj_kernel, nhead=nhead, dh=dh)
    return pl.pallas_call(
        kernel,
        out_shape=jax.ShapeDtypeStruct((B, nhead, N, dh), MATMUL_DTYPE),
        grid=(B, N // TM),
        in_specs=[
            pl.BlockSpec((1, TM, D), lambda b, i: (b, i, 0)),
            pl.BlockSpec((D, D), lambda b, i: (0, 0)),      # resident bf16 weight
            pl.BlockSpec((1, D), lambda b, i: (0, 0)),
        ],
        out_specs=pl.BlockSpec((1, nhead, TM, dh), lambda b, i: (b, 0, i, 0)),
        compiler_params=pltpu.CompilerParams(
            dimension_semantics=("parallel", "parallel"),
            vmem_limit_bytes=VMEM_LIMIT),
    )(x, w_bf16, b)


# ----------------------------------------------------------------------------
# Kernel 2: fused attention core
#   per-head scores -> (fused radius / padding masks) -> softmax -> p@V
#   -> out-proj (per-head, summed) -> + residual -> LayerNorm
# Grid: (batch, Nq / TQ); heads handled with batched MXU contractions.
# ----------------------------------------------------------------------------
def _attn_core_kernel(*refs, scale, radius_sq, has_xyz, has_bias):
    q_ref, k_ref, v_ref, res_ref = refs[0], refs[1], refs[2], refs[3]
    i = 4
    if has_xyz:
        qa_ref, ka_ref = refs[i], refs[i + 1]
        i += 2
    if has_bias:
        bias_ref = refs[i]
        i += 1
    wo_ref, bo_ref, g_ref, beta_ref, out_ref = refs[i:i + 5]

    q = q_ref[0]          # [H, TQ, dh] bf16
    k = k_ref[0]          # [H, Nk, dh] bf16
    v = v_ref[0]          # [H, Nk, dh] bf16

    # Scores for every head in one batched contraction (batch dim = head).
    s = lax.dot_general(
        q, k, dimension_numbers=(((2,), (2,)), ((0,), (0,))),
        preferred_element_type=jnp.float32) * scale            # [H, TQ, Nk]

    if has_xyz:
        # Fused radius mask: squared distance via one small matmul on the
        # host-augmented coordinates; no [B, N, N] bias tensor in HBM.
        d2 = lax.dot_general(
            qa_ref[0], ka_ref[0],
            dimension_numbers=(((1,), (1,)), ((), ())),
            preferred_element_type=jnp.float32)                 # [TQ, Nk]
        s = s + jnp.where(d2 >= radius_sq, NEG_INF, 0.0)
    if has_bias:
        s = s + bias_ref[0]                                     # [R, Nk], R in {1, TQ}

    # Softmax. Note: rows whose keys are all masked become uniform (finite)
    # rather than NaN as in torch's nn.MultiheadAttention.
    s = s - jnp.max(s, axis=-1, keepdims=True)
    e = jnp.exp(s)
    p = e * pl.reciprocal(jnp.sum(e, axis=-1, keepdims=True), approx=True)

    attn = lax.dot_general(
        p.astype(MATMUL_DTYPE), v,
        dimension_numbers=(((2,), (1,)), ((0,), (0,))),
        preferred_element_type=jnp.float32)                     # [H, TQ, dh]

    # Output projection: per-head [TQ, dh] @ [dh, D], summed over heads
    # (replaces slice + concat entirely).
    proj = lax.dot_general(
        attn.astype(MATMUL_DTYPE), wo_ref[...],
        dimension_numbers=(((2,), (1,)), ((0,), (0,))),
        preferred_element_type=jnp.float32)                     # [H, TQ, D]
    out = jnp.sum(proj, axis=0) + bo_ref[...]

    out_ref[0] = _layernorm(res_ref[0] + out, g_ref[...], beta_ref[...])


def attention_core(q_h, k_h, v_h, residual, prm, nhead, *,
                   bias=None, qa=None, ka=None, radius=None):
    B, H, Nq, dh = q_h.shape
    Nk = k_h.shape[2]
    D = residual.shape[-1]
    TQ = _row_tile(Nq, 256)
    scale = 1.0 / float(dh) ** 0.5
    has_xyz = radius is not None
    has_bias = bias is not None

    kernel = functools.partial(
        _attn_core_kernel, scale=scale,
        radius_sq=float(radius) ** 2 if has_xyz else 0.0,
        has_xyz=has_xyz, has_bias=has_bias)

    in_specs = [
        pl.BlockSpec((1, H, TQ, dh), lambda b, t: (b, 0, t, 0)),
        pl.BlockSpec((1, H, Nk, dh), lambda b, t: (b, 0, 0, 0)),
        pl.BlockSpec((1, H, Nk, dh), lambda b, t: (b, 0, 0, 0)),
        pl.BlockSpec((1, TQ, D), lambda b, t: (b, t, 0)),
    ]
    args = [q_h, k_h, v_h, residual]
    if has_xyz:
        in_specs += [pl.BlockSpec((1, TQ, 5), lambda b, t: (b, t, 0)),
                     pl.BlockSpec((1, Nk, 5), lambda b, t: (b, 0, 0))]
        args += [qa, ka]
    if has_bias:
        if bias.shape[1] == 1:
            in_specs.append(pl.BlockSpec((1, 1, Nk), lambda b, t: (b, 0, 0)))
        else:
            in_specs.append(pl.BlockSpec((1, TQ, Nk), lambda b, t: (b, t, 0)))
        args.append(bias)
    in_specs += [
        pl.BlockSpec((H, dh, D), lambda b, t: (0, 0, 0)),   # out_proj, head-major bf16
        pl.BlockSpec((1, D), lambda b, t: (0, 0)),
        pl.BlockSpec((1, D), lambda b, t: (0, 0)),
        pl.BlockSpec((1, D), lambda b, t: (0, 0)),
    ]
    args += [prm["wo_r"], prm["bo"], prm["norm1_g"], prm["norm1_b"]]

    return pl.pallas_call(
        kernel,
        out_shape=jax.ShapeDtypeStruct((B, Nq, D), jnp.float32),
        grid=(B, Nq // TQ),
        in_specs=in_specs,
        out_specs=pl.BlockSpec((1, TQ, D), lambda b, t: (b, t, 0)),
        compiler_params=pltpu.CompilerParams(
            dimension_semantics=("parallel", "parallel"),
            vmem_limit_bytes=VMEM_LIMIT),
    )(*args)


# ----------------------------------------------------------------------------
# Kernel 3: fused FFN (lin1 + ReLU + lin2) + residual + LayerNorm, row-tiled.
# ----------------------------------------------------------------------------
def _ffn_ln_kernel(x_ref, w1_ref, b1_ref, w2_ref, b2_ref, g_ref, beta_ref, o_ref):
    x = x_ref[...]
    h = jnp.maximum(
        lax.dot_general(x.astype(MATMUL_DTYPE), w1_ref[...],
                        dimension_numbers=(((1,), (1,)), ((), ())),
                        preferred_element_type=jnp.float32) + b1_ref[...], 0.0)
    y = lax.dot_general(h.astype(MATMUL_DTYPE), w2_ref[...],
                        dimension_numbers=(((1,), (1,)), ((), ())),
                        preferred_element_type=jnp.float32) + b2_ref[...]
    o_ref[...] = _layernorm(x + y, g_ref[...], beta_ref[...])


def ffn_ln(x, prm):
    B, N, D = x.shape
    M = B * N
    F = prm["w1"].shape[0]
    TM = _row_tile(M, 512)
    out = pl.pallas_call(
        _ffn_ln_kernel,
        out_shape=jax.ShapeDtypeStruct((M, D), jnp.float32),
        grid=(M // TM,),
        in_specs=[
            pl.BlockSpec((TM, D), lambda i: (i, 0)),
            pl.BlockSpec((F, D), lambda i: (0, 0)),     # resident bf16
            pl.BlockSpec((1, F), lambda i: (0, 0)),
            pl.BlockSpec((D, F), lambda i: (0, 0)),     # resident bf16
            pl.BlockSpec((1, D), lambda i: (0, 0)),
            pl.BlockSpec((1, D), lambda i: (0, 0)),
            pl.BlockSpec((1, D), lambda i: (0, 0)),
        ],
        out_specs=pl.BlockSpec((TM, D), lambda i: (i, 0)),
        compiler_params=pltpu.CompilerParams(
            dimension_semantics=("parallel",),
            vmem_limit_bytes=VMEM_LIMIT),
    )(x.reshape(M, D), prm["w1"], prm["b1"], prm["w2"], prm["b2"],
      prm["norm2_g"], prm["norm2_b"])
    return out.reshape(B, N, D)


# ----------------------------------------------------------------------------
# Kernel 4: standalone LayerNorm (final norm / intermediates).
# ----------------------------------------------------------------------------
def _ln_kernel(x_ref, g_ref, b_ref, o_ref):
    o_ref[...] = _layernorm(x_ref[...], g_ref[...], b_ref[...])


def layernorm(x, gamma, beta):
    B, N, D = x.shape
    M = B * N
    TM = _row_tile(M, 1024)
    out = pl.pallas_call(
        _ln_kernel,
        out_shape=jax.ShapeDtypeStruct((M, D), jnp.float32),
        grid=(M // TM,),
        in_specs=[
            pl.BlockSpec((TM, D), lambda i: (i, 0)),
            pl.BlockSpec((1, D), lambda i: (0, 0)),
            pl.BlockSpec((1, D), lambda i: (0, 0)),
        ],
        out_specs=pl.BlockSpec((TM, D), lambda i: (i, 0)),
        compiler_params=pltpu.CompilerParams(dimension_semantics=("parallel",)),
    )(x.reshape(M, D), gamma.reshape(1, D), beta.reshape(1, D))
    return out.reshape(B, N, D)


# ----------------------------------------------------------------------------
# Parameter preparation (host-side, once): split in_proj, pre-cast to bf16,
# pre-reshape out_proj to head-major [nhead, dh, D].
# ----------------------------------------------------------------------------
def prepare_layer_params(p, nhead):
    D = p["attn"]["out_proj_w"].shape[0]
    F = p["lin1_w"].shape[0]
    assert D % nhead == 0, "d_model must be divisible by nhead"
    dh = D // nhead
    w_in = p["attn"]["in_proj_w"]
    b_in = p["attn"]["in_proj_b"]
    wo_r = jnp.transpose(p["attn"]["out_proj_w"].reshape(D, nhead, dh), (1, 2, 0))
    f32 = jnp.float32
    return dict(
        wq=w_in[:D].astype(MATMUL_DTYPE),
        wk=w_in[D:2 * D].astype(MATMUL_DTYPE),
        wv=w_in[2 * D:].astype(MATMUL_DTYPE),
        bq=b_in[:D].reshape(1, D).astype(f32),
        bk=b_in[D:2 * D].reshape(1, D).astype(f32),
        bv=b_in[2 * D:].reshape(1, D).astype(f32),
        wo_r=wo_r.astype(MATMUL_DTYPE),
        bo=p["attn"]["out_proj_b"].reshape(1, D).astype(f32),
        w1=p["lin1_w"].astype(MATMUL_DTYPE),
        b1=p["lin1_b"].reshape(1, F).astype(f32),
        w2=p["lin2_w"].astype(MATMUL_DTYPE),
        b2=p["lin2_b"].reshape(1, D).astype(f32),
        norm1_g=p["norm1_g"].reshape(1, D).astype(f32),
        norm1_b=p["norm1_b"].reshape(1, D).astype(f32),
        norm2_g=p["norm2_g"].reshape(1, D).astype(f32),
        norm2_b=p["norm2_b"].reshape(1, D).astype(f32),
    )


def attention_ffn_block(q_in, k_in, v_in, x_res, prm, nhead, *,
                        bias=None, qa=None, ka=None, radius=None):
    """One post-norm encoder block: MHA(+mask) + res + LN, FFN + res + LN."""
    q_h = head_proj(q_in, prm["wq"], prm["bq"], nhead)
    k_h = head_proj(k_in, prm["wk"], prm["bk"], nhead)
    v_h = head_proj(v_in, prm["wv"], prm["bv"], nhead)
    y = attention_core(q_h, k_h, v_h, x_res, prm, nhead,
                       bias=bias, qa=qa, ka=ka, radius=radius)
    return ffn_ln(y, prm)


# ----------------------------------------------------------------------------
# Encoder (thin JAX orchestration around the fused kernels)
# ----------------------------------------------------------------------------
class FlexibleTransformerEncoderPallas:
    def __init__(self, self_layer_params, cross_layer_params, layer_list,
                 masking_radius, nhead, norm=None, return_intermediate=False):
        self.layer_list = list(layer_list)
        assert all(c in ("s", "c") for c in self.layer_list), \
            "Please set layer_list only with 's' and 'c'"
        assert len(masking_radius) == self.layer_list.count("s")
        self.nhead = nhead
        self.masking_radius = list(masking_radius)
        self.num_layers = len(self.layer_list)
        self.norm = norm  # (gamma, beta) tuple or None
        self.return_intermediate = return_intermediate
        # _flex_clones deep-copies a single template per type -> identical
        # weights per type, so one prepared dict per type is shared.
        self_prm = prepare_layer_params(self_layer_params, nhead)
        cross_prm = prepare_layer_params(cross_layer_params, nhead)
        self.layers = [self_prm if c == "s" else cross_prm for c in self.layer_list]

    def _final_norm(self, x):
        return layernorm(x, self.norm[0], self.norm[1]) if self.norm is not None else x

    @staticmethod
    def _mask_to_bias(mask, B):
        # TODO(synk): per-head [B*nhead, N, N] external masks are not supported;
        # expects a per-batch [B, N, N] (or shared [N, N]) boolean mask (True = masked).
        bias = jnp.where(mask, NEG_INF, 0.0).astype(jnp.float32)
        if bias.ndim == 2:
            bias = jnp.broadcast_to(bias[None], (B,) + bias.shape)
        return bias

    def forward(self, src, tgt, src_mask=None, tgt_mask=None,
                src_key_padding_mask=None, tgt_key_padding_mask=None,
                src_pos=None, tgt_pos=None, src_xyz=None, tgt_xyz=None):
        B, Ns, _ = src.shape
        Nt = tgt.shape[1]
        merged = (Ns == Nt)   # shared weights -> one fused 2B-batch call per layer

        src_ext = None if src_mask is None else self._mask_to_bias(src_mask, B)
        tgt_ext = None if tgt_mask is None else self._mask_to_bias(tgt_mask, B)
        src_kpm = _kpm_bias(src_key_padding_mask)
        tgt_kpm = _kpm_bias(tgt_key_padding_mask)
        src_qa, src_ka = _augment_xyz(src_xyz)
        tgt_qa, tgt_ka = _augment_xyz(tgt_xyz)

        if merged:
            kpm_self = _cat_bias(src_kpm, tgt_kpm, B, Ns, Ns)
            kpm_cross = _cat_bias(tgt_kpm, src_kpm, B, Ns, Ns)
            ext_self = (None if (src_ext is None and tgt_ext is None)
                        else _cat_bias(src_ext, tgt_ext, B, Ns, Ns))
            qa_cat = (jnp.concatenate([src_qa, tgt_qa], axis=0)
                      if (src_qa is not None and tgt_qa is not None) else None)
            ka_cat = (jnp.concatenate([src_ka, tgt_ka], axis=0)
                      if (src_ka is not None and tgt_ka is not None) else None)

        src_interm, tgt_interm = [], []
        cur_radius = None
        s_count = 0
        for idx, prm in enumerate(self.layers):
            kind = self.layer_list[idx]
            if kind == "s" and self.masking_radius[s_count] > 0:
                # Reference semantics: the radius mask replaces any previous mask
                # and persists until overwritten by a later 's' layer.
                cur_radius = float(self.masking_radius[s_count])
                s_count += 1

            if kind == "s":
                radius = cur_radius
                if radius is not None and (src_qa is None or tgt_qa is None):
                    raise ValueError("masking_radius > 0 requires src_xyz / tgt_xyz")
                if merged:
                    x = jnp.concatenate([src, tgt], axis=0)
                    xq = jnp.concatenate([_with_pos(src, src_pos),
                                          _with_pos(tgt, tgt_pos)], axis=0)
                    if radius is not None:
                        bias, qa, ka = kpm_self, qa_cat, ka_cat
                    else:
                        bias, qa, ka = _add_opt(ext_self, kpm_self), None, None
                    out = attention_ffn_block(xq, xq, x, x, prm, self.nhead,
                                              bias=bias, qa=qa, ka=ka, radius=radius)
                    src, tgt = out[:B], out[B:]
                else:
                    use_r = radius is not None
                    s_bias = _add_opt(None if use_r else src_ext, src_kpm)
                    t_bias = _add_opt(None if use_r else tgt_ext, tgt_kpm)
                    xs = _with_pos(src, src_pos)
                    xt = _with_pos(tgt, tgt_pos)
                    src = attention_ffn_block(
                        xs, xs, src, src, prm, self.nhead, bias=s_bias,
                        qa=src_qa if use_r else None, ka=src_ka if use_r else None,
                        radius=radius)
                    tgt = attention_ffn_block(
                        xt, xt, tgt, tgt, prm, self.nhead, bias=t_bias,
                        qa=tgt_qa if use_r else None, ka=tgt_ka if use_r else None,
                        radius=radius)
            else:
                # TODO(synk): the reference cross-layer module is not provided; assume
                # q = self + pos, k = other + pos, v = other, residual = self; same-stream
                # radius/attn masks (shape-mismatched for cross attention) are ignored and
                # only key-padding masks are applied.
                if merged:
                    x = jnp.concatenate([src, tgt], axis=0)
                    xq = jnp.concatenate([_with_pos(src, src_pos),
                                          _with_pos(tgt, tgt_pos)], axis=0)
                    x_other = jnp.concatenate([tgt, src], axis=0)
                    xk = jnp.concatenate([_with_pos(tgt, tgt_pos),
                                          _with_pos(src, src_pos)], axis=0)
                    out = attention_ffn_block(xq, xk, x_other, x, prm, self.nhead,
                                              bias=kpm_cross)
                    src, tgt = out[:B], out[B:]
                else:
                    xs = _with_pos(src, src_pos)
                    xt = _with_pos(tgt, tgt_pos)
                    src_new = attention_ffn_block(xs, xt, tgt, src, prm, self.nhead,
                                                  bias=tgt_kpm)
                    tgt_new = attention_ffn_block(xt, xs, src, tgt, prm, self.nhead,
                                                  bias=src_kpm)
                    src, tgt = src_new, tgt_new

            if self.return_intermediate:
                src_interm.append(self._final_norm(src) if self.norm is not None else src)
                tgt_interm.append(self._final_norm(tgt) if self.norm is not None else tgt)

        if self.norm is not None:
            src = self._final_norm(src)
            tgt = self._final_norm(tgt)
            if self.return_intermediate:
                if self.num_layers > 0:
                    src_interm.pop()
                    tgt_interm.pop()
                src_interm.append(src)
                tgt_interm.append(tgt)

        if self.return_intermediate:
            return jnp.stack(src_interm), jnp.stack(tgt_interm)
        return src, tgt


# ----------------------------------------------------------------------------
# Deterministic synthetic parameter init (nn.MultiheadAttention / Linear /
# LayerNorm shapes of a standard encoder layer).
# ----------------------------------------------------------------------------
def init_layer_params(key, d_model, dff):
    ks = jax.random.split(key, 5)
    s = 0.05
    return dict(
        attn=dict(
            in_proj_w=s * jax.random.normal(ks[0], (3 * d_model, d_model), jnp.float32),
            in_proj_b=s * jax.random.normal(ks[1], (3 * d_model,), jnp.float32),
            out_proj_w=s * jax.random.normal(ks[2], (d_model, d_model), jnp.float32),
            out_proj_b=jnp.zeros((d_model,), jnp.float32),
        ),
        lin1_w=s * jax.random.normal(ks[3], (dff, d_model), jnp.float32),
        lin1_b=jnp.zeros((dff,), jnp.float32),
        lin2_w=s * jax.random.normal(ks[4], (d_model, dff), jnp.float32),
        lin2_b=jnp.zeros((d_model,), jnp.float32),
        norm1_g=jnp.ones((d_model,), jnp.float32),
        norm1_b=jnp.zeros((d_model,), jnp.float32),
        norm2_g=jnp.ones((d_model,), jnp.float32),
        norm2_b=jnp.zeros((d_model,), jnp.float32),
    )


if __name__ == "__main__":
    B, N, D, H, FF = 2, 8, 32, 4, 64
    key = jax.random.PRNGKey(0)
    k1, k2, k3, k4, k5, k6 = jax.random.split(key, 6)

    src = jax.random.normal(k1, (B, N, D), jnp.float32)
    tgt = jax.random.normal(k2, (B, N, D), jnp.float32)
    src_xyz = jax.random.uniform(k3, (B, N, 3), jnp.float32)
    tgt_xyz = jax.random.uniform(k4, (B, N, 3), jnp.float32)

    self_layer_params = init_layer_params(k5, D, FF)
    cross_layer_params = init_layer_params(k6, D, FF)

    layer_list = ["s", "c", "s"]
    masking_radius = [0.5, 1.0]

    encoder = FlexibleTransformerEncoderPallas(
        self_layer_params, cross_layer_params, layer_list, masking_radius,
        nhead=H, norm=(jnp.ones((D,), jnp.float32), jnp.zeros((D,), jnp.float32)),
        return_intermediate=False)

    fwd = jax.jit(lambda s, t, sx, tx: encoder.forward(s, t, src_xyz=sx, tgt_xyz=tx))
    out_src, out_tgt = fwd(src, tgt, src_xyz, tgt_xyz)
    jax.block_until_ready(out_src)
    jax.block_until_ready(out_tgt)
    assert out_src.shape == (B, N, D) and out_tgt.shape == (B, N, D)
    assert bool(jnp.all(jnp.isfinite(out_src))) and bool(jnp.all(jnp.isfinite(out_tgt)))
    print("KERNEL_OK")
</pallas_src>

<mosaic_0001>
module attributes {stable_mosaic.version = 11 : i64} {
  func.func @_head_proj_kernel(%arg0: i32, %arg1: i32, %arg2: memref<1x8x32xf32, #tpu.memory_space<vmem>>, %arg3: memref<32x32xbf16, #tpu.memory_space<vmem>>, %arg4: memref<1x32xf32, #tpu.memory_space<vmem>>, %arg5: memref<1x4x8x8xbf16, #tpu.memory_space<vmem>>) attributes {dimension_semantics = [#tpu.dimension_semantics<parallel>, #tpu.dimension_semantics<parallel>], iteration_bounds = array<i64: 4, 1>, scalar_prefetch = 0 : i64, scratch_operands = 0 : i64, tpu.core_type = #tpu.core_type<tc>, window_params = [{transform_indices = @transform_0, window_bounds = array<i64: 1, 8, 32>}, {pipeline_mode = #tpu.pipeline_mode<synchronous>, transform_indices = @transform_1, window_bounds = array<i64: 32, 32>}, {pipeline_mode = #tpu.pipeline_mode<synchronous>, transform_indices = @transform_2, window_bounds = array<i64: 1, 32>}, {transform_indices = @transform_3, window_bounds = array<i64: 1, 4, 8, 8>}]} {
    %c0 = arith.constant 0 : index
    %c0_0 = arith.constant 0 : index
    %c0_1 = arith.constant 0 : index
    %0 = vector.load %arg2[%c0, %c0_0, %c0_1] : memref<1x8x32xf32, #tpu.memory_space<vmem>>, vector<1x8x32xf32>
    %1 = vector.shape_cast %0 : vector<1x8x32xf32> to vector<8x32xf32>
    %2 = arith.truncf %1 : vector<8x32xf32> to vector<8x32xbf16>
    %c0_2 = arith.constant 0 : index
    %c0_3 = arith.constant 0 : index
    %3 = vector.load %arg3[%c0_2, %c0_3] : memref<32x32xbf16, #tpu.memory_space<vmem>>, vector<32x32xbf16>
    %cst = arith.constant dense<0.000000e+00> : vector<8x32xf32>
    %4 = tpu.matmul %2, %3, %cst {dimension_numbers = #tpu.dot_dimension_numbers<[1], [1], [0], [0], [0, 0, 1, 0], [], []>} : vector<8x32xbf16>, vector<32x32xbf16>, vector<8x32xf32> -> vector<8x32xf32>
    %c0_4 = arith.constant 0 : index
    %c0_5 = arith.constant 0 : index
    %5 = vector.load %arg4[%c0_4, %c0_5] : memref<1x32xf32, #tpu.memory_space<vmem>>, vector<1x32xf32>
    %6 = vector.broadcast %5 : vector<1x32xf32> to vector<8x32xf32>
    %7 = arith.addf %4, %6 : vector<8x32xf32>
    %8 = vector.extract_strided_slice %7 {offsets = [0, 0], sizes = [8, 8], strides = [1, 1]} : vector<8x32xf32> to vector<8x8xf32>
    %9 = arith.truncf %8 : vector<8x8xf32> to vector<8x8xbf16>
    %c0_6 = arith.constant 0 : index
    %c0_7 = arith.constant 0 : index
    %c0_8 = arith.constant 0 : index
    %c0_9 = arith.constant 0 : index
    %10 = vector.load %arg5[%c0_6, %c0_7, %c0_8, %c0_9] : memref<1x4x8x8xbf16, #tpu.memory_space<vmem>>, vector<1x1x8x8xbf16>
    %11 = vector.shape_cast %10 : vector<1x1x8x8xbf16> to vector<8x8xbf16>
    %12 = vector.shape_cast %9 : vector<8x8xbf16> to vector<1x1x8x8xbf16>
    tpu.vector_store %arg5[%c0_6, %c0_7, %c0_8, %c0_9], %12 {strides = array<i32>} : memref<1x4x8x8xbf16, #tpu.memory_space<vmem>>, vector<1x1x8x8xbf16>,
    %13 = vector.extract_strided_slice %7 {offsets = [0, 8], sizes = [8, 8], strides = [1, 1]} : vector<8x32xf32> to vector<8x8xf32>
    %14 = arith.truncf %13 : vector<8x8xf32> to vector<8x8xbf16>
    %c0_10 = arith.constant 0 : index
    %c1 = arith.constant 1 : index
    %c0_11 = arith.constant 0 : index
    %c0_12 = arith.constant 0 : index
    %15 = vector.load %arg5[%c0_10, %c1, %c0_11, %c0_12] : memref<1x4x8x8xbf16, #tpu.memory_space<vmem>>, vector<1x1x8x8xbf16>
    %16 = vector.shape_cast %15 : vector<1x1x8x8xbf16> to vector<8x8xbf16>
    %17 = vector.shape_cast %14 : vector<8x8xbf16> to vector<1x1x8x8xbf16>
    tpu.vector_store %arg5[%c0_10, %c1, %c0_11, %c0_12], %17 {strides = array<i32>} : memref<1x4x8x8xbf16, #tpu.memory_space<vmem>>, vector<1x1x8x8xbf16>,
    %18 = vector.extract_strided_slice %7 {offsets = [0, 16], sizes = [8, 8], strides = [1, 1]} : vector<8x32xf32> to vector<8x8xf32>
    %19 = arith.truncf %18 : vector<8x8xf32> to vector<8x8xbf16>
    %c0_13 = arith.constant 0 : index
    %c2 = arith.constant 2 : index
    %c0_14 = arith.constant 0 : index
    %c0_15 = arith.constant 0 : index
    %20 = vector.load %arg5[%c0_13, %c2, %c0_14, %c0_15] : memref<1x4x8x8xbf16, #tpu.memory_space<vmem>>, vector<1x1x8x8xbf16>
    %21 = vector.shape_cast %20 : vector<1x1x8x8xbf16> to vector<8x8xbf16>
    %22 = vector.shape_cast %19 : vector<8x8xbf16> to vector<1x1x8x8xbf16>
    tpu.vector_store %arg5[%c0_13, %c2, %c0_14, %c0_15], %22 {strides = array<i32>} : memref<1x4x8x8xbf16, #tpu.memory_space<vmem>>, vector<1x1x8x8xbf16>,
    %23 = vector.extract_strided_slice %7 {offsets = [0, 24], sizes = [8, 8], strides = [1, 1]} : vector<8x32xf32> to vector<8x8xf32>
    %24 = arith.truncf %23 : vector<8x8xf32> to vector<8x8xbf16>
    %c0_16 = arith.constant 0 : index
    %c3 = arith.constant 3 : index
    %c0_17 = arith.constant 0 : index
    %c0_18 = arith.constant 0 : index
    %25 = vector.load %arg5[%c0_16, %c3, %c0_17, %c0_18] : memref<1x4x8x8xbf16, #tpu.memory_space<vmem>>, vector<1x1x8x8xbf16>
    %26 = vector.shape_cast %25 : vector<1x1x8x8xbf16> to vector<8x8xbf16>
    %27 = vector.shape_cast %24 : vector<8x8xbf16> to vector<1x1x8x8xbf16>
    tpu.vector_store %arg5[%c0_16, %c3, %c0_17, %c0_18], %27 {strides = array<i32>} : memref<1x4x8x8xbf16, #tpu.memory_space<vmem>>, vector<1x1x8x8xbf16>,
    return
  }
  func.func @transform_0(%arg0: i32, %arg1: i32) -> (i32, i32, i32) {
    %c0_i32 = arith.constant 0 : i32
    %c0_i32_0 = arith.constant 0 : i32
    return %arg0, %arg1, %c0_i32 : i32, i32, i32
  }
  func.func @transform_1(%arg0: i32, %arg1: i32) -> (i32, i32) {
    %c0_i32 = arith.constant 0 : i32
    %c0_i32_0 = arith.constant 0 : i32
    %c0_i32_1 = arith.constant 0 : i32
    return %c0_i32, %c0_i32_0 : i32, i32
  }
  func.func @transform_2(%arg0: i32, %arg1: i32) -> (i32, i32) {
    %c0_i32 = arith.constant 0 : i32
    %c0_i32_0 = arith.constant 0 : i32
    %c0_i32_1 = arith.constant 0 : i32
    return %c0_i32, %c0_i32_0 : i32, i32
  }
  func.func @transform_3(%arg0: i32, %arg1: i32) -> (i32, i32, i32, i32) {
    %c0_i32 = arith.constant 0 : i32
    %c0_i32_0 = arith.constant 0 : i32
    %c0_i32_1 = arith.constant 0 : i32
    return %arg0, %c0_i32, %arg1, %c0_i32_0 : i32, i32, i32, i32
  }
}

module attributes {stable_mosaic.version = 11 : i64} {
  func.func @_ffn_ln_kernel(%arg0: i32, %arg1: memref<32x32xf32, #tpu.memory_space<vmem>>, %arg2: memref<64x32xbf16, #tpu.memory_space<vmem>>, %arg3: memref<1x64xf32, #tpu.memory_space<vmem>>, %arg4: memref<32x64xbf16, #tpu.memory_space<vmem>>, %arg5: memref<1x32xf32, #tpu.memory_space<vmem>>, %arg6: memref<1x32xf32, #tpu.memory_space<vmem>>, %arg7: memref<1x32xf32, #tpu.memory_space<vmem>>, %arg8: memref<32x32xf32, #tpu.memory_space<vmem>>) attributes {dimension_semantics = [#tpu.dimension_semantics<parallel>], iteration_bounds = array<i64: 1>, scalar_prefetch = 0 : i64, scratch_operands = 0 : i64, tpu.core_type = #tpu.core_type<tc>, window_params = [{transform_indices = @transform_0, window_bounds = array<i64: 32, 32>}, {pipeline_mode = #tpu.pipeline_mode<synchronous>, transform_indices = @transform_1, window_bounds = array<i64: 64, 32>}, {pipeline_mode = #tpu.pipeline_mode<synchronous>, transform_indices = @transform_2, window_bounds = array<i64: 1, 64>}, {pipeline_mode = #tpu.pipeline_mode<synchronous>, transform_indices = @transform_3, window_bounds = array<i64: 32, 64>}, {pipeline_mode = #tpu.pipeline_mode<synchronous>, transform_indices = @transform_4, window_bounds = array<i64: 1, 32>}, {pipeline_mode = #tpu.pipeline_mode<synchronous>, transform_indices = @transform_5, window_bounds = array<i64: 1, 32>}, {pipeline_mode = #tpu.pipeline_mode<synchronous>, transform_indices = @transform_6, window_bounds = array<i64: 1, 32>}, {transform_indices = @transform_7, window_bounds = array<i64: 32, 32>}]} {
    %c0 = arith.constant 0 : index
    %c0_0 = arith.constant 0 : index
    %0 = vector.load %arg1[%c0, %c0_0] : memref<32x32xf32, #tpu.memory_space<vmem>>, vector<32x32xf32>
    %1 = arith.truncf %0 : vector<32x32xf32> to vector<32x32xbf16>
    %c0_1 = arith.constant 0 : index
    %c0_2 = arith.constant 0 : index
    %2 = vector.load %arg2[%c0_1, %c0_2] : memref<64x32xbf16, #tpu.memory_space<vmem>>, vector<64x32xbf16>
    %cst = arith.constant dense<0.000000e+00> : vector<32x64xf32>
    %3 = tpu.matmul %1, %2, %cst {dimension_numbers = #tpu.dot_dimension_numbers<[1], [1], [0], [0], [0, 0, 1, 0], [], []>} : vector<32x32xbf16>, vector<64x32xbf16>, vector<32x64xf32> -> vector<32x64xf32>
    %c0_3 = arith.constant 0 : index
    %c0_4 = arith.constant 0 : index
    %4 = vector.load %arg3[%c0_3, %c0_4] : memref<1x64xf32, #tpu.memory_space<vmem>>, vector<1x64xf32>
    %5 = vector.broadcast %4 : vector<1x64xf32> to vector<32x64xf32>
    %6 = arith.addf %3, %5 : vector<32x64xf32>
    %cst_5 = arith.constant 0.000000e+00 : f32
    %7 = vector.broadcast %cst_5 : f32 to vector<32x64xf32>
    %8 = arith.maximumf %6, %7 : vector<32x64xf32>
    %9 = arith.truncf %8 : vector<32x64xf32> to vector<32x64xbf16>
    %c0_6 = arith.constant 0 : index
    %c0_7 = arith.constant 0 : index
    %10 = vector.load %arg4[%c0_6, %c0_7] : memref<32x64xbf16, #tpu.memory_space<vmem>>, vector<32x64xbf16>
    %cst_8 = arith.constant dense<0.000000e+00> : vector<32x32xf32>
    %11 = tpu.matmul %9, %10, %cst_8 {dimension_numbers = #tpu.dot_dimension_numbers<[1], [1], [0], [0], [0, 0, 1, 0], [], []>} : vector<32x64xbf16>, vector<32x64xbf16>, vector<32x32xf32> -> vector<32x32xf32>
    %c0_9 = arith.constant 0 : index
    %c0_10 = arith.constant 0 : index
    %12 = vector.load %arg5[%c0_9, %c0_10] : memref<1x32xf32, #tpu.memory_space<vmem>>, vector<1x32xf32>
    %13 = vector.broadcast %12 : vector<1x32xf32> to vector<32x32xf32>
    %14 = arith.addf %11, %13 : vector<32x32xf32>
    %15 = arith.addf %0, %14 : vector<32x32xf32>
    %c0_11 = arith.constant 0 : index
    %c0_12 = arith.constant 0 : index
    %16 = vector.load %arg6[%c0_11, %c0_12] : memref<1x32xf32, #tpu.memory_space<vmem>>, vector<1x32xf32>
    %c0_13 = arith.constant 0 : index
    %c0_14 = arith.constant 0 : index
    %17 = vector.load %arg7[%c0_13, %c0_14] : memref<1x32xf32, #tpu.memory_space<vmem>>, vector<1x32xf32>
    %cst_15 = arith.constant dense<0.000000e+00> : vector<32xf32>
    %18 = vector.multi_reduction <add>, %15, %cst_15 [1] : vector<32x32xf32> to vector<32xf32>
    %19 = vector.shape_cast %18 : vector<32xf32> to vector<32x1xf32>
    %cst_16 = arith.constant 3.200000e+01 : f32
    %20 = vector.broadcast %cst_16 : f32 to vector<32x1xf32>
    %21 = arith.divf %19, %20 : vector<32x1xf32>
    %22 = vector.broadcast %21 : vector<32x1xf32> to vector<32x32xf32>
    %23 = arith.subf %15, %22 : vector<32x32xf32>
    %24 = arith.mulf %23, %23 : vector<32x32xf32>
    %cst_17 = arith.constant dense<0.000000e+00> : vector<32xf32>
    %25 = vector.multi_reduction <add>, %24, %cst_17 [1] : vector<32x32xf32> to vector<32xf32>
    %26 = vector.shape_cast %25 : vector<32xf32> to vector<32x1xf32>
    %cst_18 = arith.constant 3.200000e+01 : f32
    %27 = vector.broadcast %cst_18 : f32 to vector<32x1xf32>
    %28 = arith.divf %26, %27 : vector<32x1xf32>
    %29 = vector.broadcast %21 : vector<32x1xf32> to vector<32x32xf32>
    %30 = arith.subf %15, %29 : vector<32x32xf32>
    %cst_19 = arith.constant 9.99999974E-6 : f32
    %31 = vector.broadcast %cst_19 : f32 to vector<32x1xf32>
    %32 = arith.addf %28, %31 : vector<32x1xf32>
    %33 = math.rsqrt %32 : vector<32x1xf32>
    %34 = vector.broadcast %33 : vector<32x1xf32> to vector<32x32xf32>
    %35 = arith.mulf %30, %34 : vector<32x32xf32>
    %36 = vector.broadcast %16 : vector<1x32xf32> to vector<32x32xf32>
    %37 = arith.mulf %35, %36 : vector<32x32xf32>
    %38 = vector.broadcast %17 : vector<1x32xf32> to vector<32x32xf32>
    %39 = arith.addf %37, %38 : vector<32x32xf32>
    %c0_20 = arith.constant 0 : index
    %c0_21 = arith.constant 0 : index
    %40 = vector.load %arg8[%c0_20, %c0_21] : memref<32x32xf32, #tpu.memory_space<vmem>>, vector<32x32xf32>
    tpu.vector_store %arg8[%c0_20, %c0_21], %39 {strides = array<i32>} : memref<32x32xf32, #tpu.memory_space<vmem>>, vector<32x32xf32>,
    return
  }
  func.func @transform_0(%arg0: i32) -> (i32, i32) {
    %c0_i32 = arith.constant 0 : i32
    %c0_i32_0 = arith.constant 0 : i32
    return %arg0, %c0_i32 : i32, i32
  }
  func.func @transform_1(%arg0: i32) -> (i32, i32) {
    %c0_i32 = arith.constant 0 : i32
    %c0_i32_0 = arith.constant 0 : i32
    %c0_i32_1 = arith.constant 0 : i32
    return %c0_i32, %c0_i32_0 : i32, i32
  }
  func.func @transform_2(%arg0: i32) -> (i32, i32) {
    %c0_i32 = arith.constant 0 : i32
    %c0_i32_0 = arith.constant 0 : i32
    %c0_i32_1 = arith.constant 0 : i32
    return %c0_i32, %c0_i32_0 : i32, i32
  }
  func.func @transform_3(%arg0: i32) -> (i32, i32) {
    %c0_i32 = arith.constant 0 : i32
    %c0_i32_0 = arith.constant 0 : i32
    %c0_i32_1 = arith.constant 0 : i32
    return %c0_i32, %c0_i32_0 : i32, i32
  }
  func.func @transform_4(%arg0: i32) -> (i32, i32) {
    %c0_i32 = arith.constant 0 : i32
    %c0_i32_0 = arith.constant 0 : i32
    %c0_i32_1 = arith.constant 0 : i32
    return %c0_i32, %c0_i32_0 : i32, i32
  }
  func.func @transform_5(%arg0: i32) -> (i32, i32) {
    %c0_i32 = arith.constant 0 : i32
    %c0_i32_0 = arith.constant 0 : i32
    %c0_i32_1 = arith.constant 0 : i32
    return %c0_i32, %c0_i32_0 : i32, i32
  }
  func.func @transform_6(%arg0: i32) -> (i32, i32) {
    %c0_i32 = arith.constant 0 : i32
    %c0_i32_0 = arith.constant 0 : i32
    %c0_i32_1 = arith.constant 0 : i32
    return %c0_i32, %c0_i32_0 : i32, i32
  }
  func.func @transform_7(%arg0: i32) -> (i32, i32) {
    %c0_i32 = arith.constant 0 : i32
    %c0_i32_0 = arith.constant 0 : i32
    return %arg0, %c0_i32 : i32, i32
  }
}

module attributes {stable_mosaic.version = 11 : i64} {
  func.func @_attn_core_kernel(%arg0: i32, %arg1: i32, %arg2: memref<1x4x8x8xbf16, #tpu.memory_space<vmem>>, %arg3: memref<1x4x8x8xbf16, #tpu.memory_space<vmem>>, %arg4: memref<1x4x8x8xbf16, #tpu.memory_space<vmem>>, %arg5: memref<1x8x32xf32, #tpu.memory_space<vmem>>, %arg6: memref<1x8x5xf32, #tpu.memory_space<vmem>>, %arg7: memref<1x8x5xf32, #tpu.memory_space<vmem>>, %arg8: memref<4x8x32xbf16, #tpu.memory_space<vmem>>, %arg9: memref<1x32xf32, #tpu.memory_space<vmem>>, %arg10: memref<1x32xf32, #tpu.memory_space<vmem>>, %arg11: memref<1x32xf32, #tpu.memory_space<vmem>>, %arg12: memref<1x8x32xf32, #tpu.memory_space<vmem>>) attributes {dimension_semantics = [#tpu.dimension_semantics<parallel>, #tpu.dimension_semantics<parallel>], iteration_bounds = array<i64: 4, 1>, scalar_prefetch = 0 : i64, scratch_operands = 0 : i64, tpu.core_type = #tpu.core_type<tc>, window_params = [{transform_indices = @transform_0, window_bounds = array<i64: 1, 4, 8, 8>}, {transform_indices = @transform_1, window_bounds = array<i64: 1, 4, 8, 8>}, {transform_indices = @transform_2, window_bounds = array<i64: 1, 4, 8, 8>}, {transform_indices = @transform_3, window_bounds = array<i64: 1, 8, 32>}, {transform_indices = @transform_4, window_bounds = array<i64: 1, 8, 5>}, {transform_indices = @transform_5, window_bounds = array<i64: 1, 8, 5>}, {pipeline_mode = #tpu.pipeline_mode<synchronous>, transform_indices = @transform_6, window_bounds = array<i64: 4, 8, 32>}, {pipeline_mode = #tpu.pipeline_mode<synchronous>, transform_indices = @transform_7, window_bounds = array<i64: 1, 32>}, {pipeline_mode = #tpu.pipeline_mode<synchronous>, transform_indices = @transform_8, window_bounds = array<i64: 1, 32>}, {pipeline_mode = #tpu.pipeline_mode<synchronous>, transform_indices = @transform_9, window_bounds = array<i64: 1, 32>}, {transform_indices = @transform_10, window_bounds = array<i64: 1, 8, 32>}]} {
    %c0 = arith.constant 0 : index
    %c0_0 = arith.constant 0 : index
    %c0_1 = arith.constant 0 : index
    %c0_2 = arith.constant 0 : index
    %0 = vector.load %arg2[%c0, %c0_0, %c0_1, %c0_2] : memref<1x4x8x8xbf16, #tpu.memory_space<vmem>>, vector<1x4x8x8xbf16>
    %1 = vector.shape_cast %0 : vector<1x4x8x8xbf16> to vector<4x8x8xbf16>
    %c0_3 = arith.constant 0 : index
    %c0_4 = arith.constant 0 : index
    %c0_5 = arith.constant 0 : index
    %c0_6 = arith.constant 0 : index
    %2 = vector.load %arg3[%c0_3, %c0_4, %c0_5, %c0_6] : memref<1x4x8x8xbf16, #tpu.memory_space<vmem>>, vector<1x4x8x8xbf16>
    %3 = vector.shape_cast %2 : vector<1x4x8x8xbf16> to vector<4x8x8xbf16>
    %c0_7 = arith.constant 0 : index
    %c0_8 = arith.constant 0 : index
    %c0_9 = arith.constant 0 : index
    %c0_10 = arith.constant 0 : index
    %4 = vector.load %arg4[%c0_7, %c0_8, %c0_9, %c0_10] : memref<1x4x8x8xbf16, #tpu.memory_space<vmem>>, vector<1x4x8x8xbf16>
    %5 = vector.shape_cast %4 : vector<1x4x8x8xbf16> to vector<4x8x8xbf16>
    %cst = arith.constant dense<0.000000e+00> : vector<4x8x8xf32>
    %6 = tpu.matmul %1, %3, %cst {dimension_numbers = #tpu.dot_dimension_numbers<[2], [2], [1], [1], [0, 0, 0, 1, 1, 1], [0], [0]>} : vector<4x8x8xbf16>, vector<4x8x8xbf16>, vector<4x8x8xf32> -> vector<4x8x8xf32>
    %cst_11 = arith.constant 0.353553385 : f32
    %7 = vector.broadcast %cst_11 : f32 to vector<4x8x8xf32>
    %8 = arith.mulf %6, %7 : vector<4x8x8xf32>
    %c0_12 = arith.constant 0 : index
    %c0_13 = arith.constant 0 : index
    %c0_14 = arith.constant 0 : index
    %9 = vector.load %arg6[%c0_12, %c0_13, %c0_14] : memref<1x8x5xf32, #tpu.memory_space<vmem>>, vector<1x8x5xf32>
    %10 = vector.shape_cast %9 : vector<1x8x5xf32> to vector<8x5xf32>
    %c0_15 = arith.constant 0 : index
    %c0_16 = arith.constant 0 : index
    %c0_17 = arith.constant 0 : index
    %11 = vector.load %arg7[%c0_15, %c0_16, %c0_17] : memref<1x8x5xf32, #tpu.memory_space<vmem>>, vector<1x8x5xf32>
    %12 = vector.shape_cast %11 : vector<1x8x5xf32> to vector<8x5xf32>
    %cst_18 = arith.constant dense<0.000000e+00> : vector<8x8xf32>
    %13 = tpu.matmul %10, %12, %cst_18 {dimension_numbers = #tpu.dot_dimension_numbers<[1], [1], [0], [0], [0, 0, 1, 0], [], []>} : vector<8x5xf32>, vector<8x5xf32>, vector<8x8xf32> -> vector<8x8xf32>
    %cst_19 = arith.constant 2.500000e-01 : f32
    %14 = vector.broadcast %cst_19 : f32 to vector<8x8xf32>
    %15 = arith.cmpf oge, %13, %14 : vector<8x8xf32>
    %cst_20 = arith.constant -1.000000e+30 : f32
    %cst_21 = arith.constant 0.000000e+00 : f32
    %16 = vector.broadcast %cst_20 : f32 to vector<8x8xf32>
    %17 = vector.broadcast %cst_21 : f32 to vector<8x8xf32>
    %18 = arith.select %15, %16, %17 : vector<8x8xi1>, vector<8x8xf32>
    %19 = vector.shape_cast %18 : vector<8x8xf32> to vector<1x8x8xf32>
    %20 = vector.broadcast %19 : vector<1x8x8xf32> to vector<4x8x8xf32>
    %21 = arith.addf %8, %20 : vector<4x8x8xf32>
    %cst_22 = arith.constant dense<0xFF800000> : vector<4x8xf32>
    %22 = vector.multi_reduction <maximumf>, %21, %cst_22 [2] : vector<4x8x8xf32> to vector<4x8xf32>
    %23 = vector.shape_cast %22 : vector<4x8xf32> to vector<4x8x1xf32>
    %24 = vector.broadcast %23 : vector<4x8x1xf32> to vector<4x8x8xf32>
    %25 = arith.subf %21, %24 : vector<4x8x8xf32>
    %26 = math.exp %25 : vector<4x8x8xf32>
    %cst_23 = arith.constant dense<0.000000e+00> : vector<4x8xf32>
    %27 = vector.multi_reduction <add>, %26, %cst_23 [2] : vector<4x8x8xf32> to vector<4x8xf32>
    %28 = vector.shape_cast %27 : vector<4x8xf32> to vector<4x8x1xf32>
    %29 = tpu.reciprocal %28 {approx = true} : vector<4x8x1xf32> -> vector<4x8x1xf32>
    %30 = vector.broadcast %29 : vector<4x8x1xf32> to vector<4x8x8xf32>
    %31 = arith.mulf %26, %30 : vector<4x8x8xf32>
    %32 = arith.truncf %31 : vector<4x8x8xf32> to vector<4x8x8xbf16>
    %cst_24 = arith.constant dense<0.000000e+00> : vector<4x8x8xf32>
    %33 = tpu.matmul %32, %5, %cst_24 {dimension_numbers = #tpu.dot_dimension_numbers<[2], [1], [1], [2], [0, 0, 0, 1, 1, 2], [0], [0]>} : vector<4x8x8xbf16>, vector<4x8x8xbf16>, vector<4x8x8xf32> -> vector<4x8x8xf32>
    %34 = arith.truncf %33 : vector<4x8x8xf32> to vector<4x8x8xbf16>
    %c0_25 = arith.constant 0 : index
    %c0_26 = arith.constant 0 : index
    %c0_27 = arith.constant 0 : index
    %35 = vector.load %arg8[%c0_25, %c0_26, %c0_27] : memref<4x8x32xbf16, #tpu.memory_space<vmem>>, vector<4x8x32xbf16>
    %cst_28 = arith.constant dense<0.000000e+00> : vector<4x8x32xf32>
    %36 = tpu.matmul %34, %35, %cst_28 {dimension_numbers = #tpu.dot_dimension_numbers<[2], [1], [1], [2], [0, 0, 0, 1, 1, 2], [0], [0]>} : vector<4x8x8xbf16>, vector<4x8x32xbf16>, vector<4x8x32xf32> -> vector<4x8x32xf32>
    %cst_29 = arith.constant dense<0.000000e+00> : vector<8x32xf32>
    %37 = vector.multi_reduction <add>, %36, %cst_29 [0] : vector<4x8x32xf32> to vector<8x32xf32>
    %c0_30 = arith.constant 0 : index
    %c0_31 = arith.constant 0 : index
    %38 = vector.load %arg9[%c0_30, %c0_31] : memref<1x32xf32, #tpu.memory_space<vmem>>, vector<1x32xf32>
    %39 = vector.broadcast %38 : vector<1x32xf32> to vector<8x32xf32>
    %40 = arith.addf %37, %39 : vector<8x32xf32>
    %c0_32 = arith.constant 0 : index
    %c0_33 = arith.constant 0 : index
    %c0_34 = arith.constant 0 : index
    %41 = vector.load %arg5[%c0_32, %c0_33, %c0_34] : memref<1x8x32xf32, #tpu.memory_space<vmem>>, vector<1x8x32xf32>
    %42 = vector.shape_cast %41 : vector<1x8x32xf32> to vector<8x32xf32>
    %43 = arith.addf %42, %40 : vector<8x32xf32>
    %c0_35 = arith.constant 0 : index
    %c0_36 = arith.constant 0 : index
    %44 = vector.load %arg10[%c0_35, %c0_36] : memref<1x32xf32, #tpu.memory_space<vmem>>, vector<1x32xf32>
    %c0_37 = arith.constant 0 : index
    %c0_38 = arith.constant 0 : index
    %45 = vector.load %arg11[%c0_37, %c0_38] : memref<1x32xf32, #tpu.memory_space<vmem>>, vector<1x32xf32>
    %cst_39 = arith.constant dense<0.000000e+00> : vector<8xf32>
    %46 = vector.multi_reduction <add>, %43, %cst_39 [1] : vector<8x32xf32> to vector<8xf32>
    %47 = vector.shape_cast %46 : vector<8xf32> to vector<8x1xf32>
    %cst_40 = arith.constant 3.200000e+01 : f32
    %48 = vector.broadcast %cst_40 : f32 to vector<8x1xf32>
    %49 = arith.divf %47, %48 : vector<8x1xf32>
    %50 = vector.broadcast %49 : vector<8x1xf32> to vector<8x32xf32>
    %51 = arith.subf %43, %50 : vector<8x32xf32>
    %52 = arith.mulf %51, %51 : vector<8x32xf32>
    %cst_41 = arith.constant dense<0.000000e+00> : vector<8xf32>
    %53 = vector.multi_reduction <add>, %52, %cst_41 [1] : vector<8x32xf32> to vector<8xf32>
    %54 = vector.shape_cast %53 : vector<8xf32> to vector<8x1xf32>
    %cst_42 = arith.constant 3.200000e+01 : f32
    %55 = vector.broadcast %cst_42 : f32 to vector<8x1xf32>
    %56 = arith.divf %54, %55 : vector<8x1xf32>
    %57 = vector.broadcast %49 : vector<8x1xf32> to vector<8x32xf32>
    %58 = arith.subf %43, %57 : vector<8x32xf32>
    %cst_43 = arith.constant 9.99999974E-6 : f32
    %59 = vector.broadcast %cst_43 : f32 to vector<8x1xf32>
    %60 = arith.addf %56, %59 : vector<8x1xf32>
    %61 = math.rsqrt %60 : vector<8x1xf32>
    %62 = vector.broadcast %61 : vector<8x1xf32> to vector<8x32xf32>
    %63 = arith.mulf %58, %62 : vector<8x32xf32>
    %64 = vector.broadcast %44 : vector<1x32xf32> to vector<8x32xf32>
    %65 = arith.mulf %63, %64 : vector<8x32xf32>
    %66 = vector.broadcast %45 : vector<1x32xf32> to vector<8x32xf32>
    %67 = arith.addf %65, %66 : vector<8x32xf32>
    %c0_44 = arith.constant 0 : index
    %c0_45 = arith.constant 0 : index
    %c0_46 = arith.constant 0 : index
    %68 = vector.load %arg12[%c0_44, %c0_45, %c0_46] : memref<1x8x32xf32, #tpu.memory_space<vmem>>, vector<1x8x32xf32>
    %69 = vector.shape_cast %68 : vector<1x8x32xf32> to vector<8x32xf32>
    %70 = vector.shape_cast %67 : vector<8x32xf32> to vector<1x8x32xf32>
    tpu.vector_store %arg12[%c0_44, %c0_45, %c0_46], %70 {strides = array<i32>} : memref<1x8x32xf32, #tpu.memory_space<vmem>>, vector<1x8x32xf32>,
    return
  }
  func.func @transform_0(%arg0: i32, %arg1: i32) -> (i32, i32, i32, i32) {
    %c0_i32 = arith.constant 0 : i32
    %c0_i32_0 = arith.constant 0 : i32
    %c0_i32_1 = arith.constant 0 : i32
    return %arg0, %c0_i32, %arg1, %c0_i32_0 : i32, i32, i32, i32
  }
  func.func @transform_1(%arg0: i32, %arg1: i32) -> (i32, i32, i32, i32) {
    %c0_i32 = arith.constant 0 : i32
    %c0_i32_0 = arith.constant 0 : i32
    %c0_i32_1 = arith.constant 0 : i32
    %c0_i32_2 = arith.constant 0 : i32
    return %arg0, %c0_i32, %c0_i32_0, %c0_i32_1 : i32, i32, i32, i32
  }
  func.func @transform_2(%arg0: i32, %arg1: i32) -> (i32, i32, i32, i32) {
    %c0_i32 = arith.constant 0 : i32
    %c0_i32_0 = arith.constant 0 : i32
    %c0_i32_1 = arith.constant 0 : i32
    %c0_i32_2 = arith.constant 0 : i32
    return %arg0, %c0_i32, %c0_i32_0, %c0_i32_1 : i32, i32, i32, i32
  }
  func.func @transform_3(%arg0: i32, %arg1: i32) -> (i32, i32, i32) {
    %c0_i32 = arith.constant 0 : i32
    %c0_i32_0 = arith.constant 0 : i32
    return %arg0, %arg1, %c0_i32 : i32, i32, i32
  }
  func.func @transform_4(%arg0: i32, %arg1: i32) -> (i32, i32, i32) {
    %c0_i32 = arith.constant 0 : i32
    %c0_i32_0 = arith.constant 0 : i32
    return %arg0, %arg1, %c0_i32 : i32, i32, i32
  }
  func.func @transform_5(%arg0: i32, %arg1: i32) -> (i32, i32, i32) {
    %c0_i32 = arith.constant 0 : i32
    %c0_i32_0 = arith.constant 0 : i32
    %c0_i32_1 = arith.constant 0 : i32
    return %arg0, %c0_i32, %c0_i32_0 : i32, i32, i32
  }
  func.func @transform_6(%arg0: i32, %arg1: i32) -> (i32, i32, i32) {
    %c0_i32 = arith.constant 0 : i32
    %c0_i32_0 = arith.constant 0 : i32
    %c0_i32_1 = arith.constant 0 : i32
    %c0_i32_2 = arith.constant 0 : i32
    return %c0_i32, %c0_i32_0, %c0_i32_1 : i32, i32, i32
  }
  func.func @transform_7(%arg0: i32, %arg1: i32) -> (i32, i32) {
    %c0_i32 = arith.constant 0 : i32
    %c0_i32_0 = arith.constant 0 : i32
    %c0_i32_1 = arith.constant 0 : i32
    return %c0_i32, %c0_i32_0 : i32, i32
  }
  func.func @transform_8(%arg0: i32, %arg1: i32) -> (i32, i32) {
    %c0_i32 = arith.constant 0 : i32
    %c0_i32_0 = arith.constant 0 : i32
    %c0_i32_1 = arith.constant 0 : i32
    return %c0_i32, %c0_i32_0 : i32, i32
  }
  func.func @transform_9(%arg0: i32, %arg1: i32) -> (i32, i32) {
    %c0_i32 = arith.constant 0 : i32
    %c0_i32_0 = arith.constant 0 : i32
    %c0_i32_1 = arith.constant 0 : i32
    return %c0_i32, %c0_i32_0 : i32, i32
  }
  func.func @transform_10(%arg0: i32, %arg1: i32) -> (i32, i32, i32) {
    %c0_i32 = arith.constant 0 : i32
    %c0_i32_0 = arith.constant 0 : i32
    return %arg0, %arg1, %c0_i32 : i32, i32, i32
  }
}

module attributes {stable_mosaic.version = 11 : i64} {
  func.func @_attn_core_kernel(%arg0: i32, %arg1: i32, %arg2: memref<1x4x8x8xbf16, #tpu.memory_space<vmem>>, %arg3: memref<1x4x8x8xbf16, #tpu.memory_space<vmem>>, %arg4: memref<1x4x8x8xbf16, #tpu.memory_space<vmem>>, %arg5: memref<1x8x32xf32, #tpu.memory_space<vmem>>, %arg6: memref<4x8x32xbf16, #tpu.memory_space<vmem>>, %arg7: memref<1x32xf32, #tpu.memory_space<vmem>>, %arg8: memref<1x32xf32, #tpu.memory_space<vmem>>, %arg9: memref<1x32xf32, #tpu.memory_space<vmem>>, %arg10: memref<1x8x32xf32, #tpu.memory_space<vmem>>) attributes {dimension_semantics = [#tpu.dimension_semantics<parallel>, #tpu.dimension_semantics<parallel>], iteration_bounds = array<i64: 4, 1>, scalar_prefetch = 0 : i64, scratch_operands = 0 : i64, tpu.core_type = #tpu.core_type<tc>, window_params = [{transform_indices = @transform_0, window_bounds = array<i64: 1, 4, 8, 8>}, {transform_indices = @transform_1, window_bounds = array<i64: 1, 4, 8, 8>}, {transform_indices = @transform_2, window_bounds = array<i64: 1, 4, 8, 8>}, {transform_indices = @transform_3, window_bounds = array<i64: 1, 8, 32>}, {pipeline_mode = #tpu.pipeline_mode<synchronous>, transform_indices = @transform_4, window_bounds = array<i64: 4, 8, 32>}, {pipeline_mode = #tpu.pipeline_mode<synchronous>, transform_indices = @transform_5, window_bounds = array<i64: 1, 32>}, {pipeline_mode = #tpu.pipeline_mode<synchronous>, transform_indices = @transform_6, window_bounds = array<i64: 1, 32>}, {pipeline_mode = #tpu.pipeline_mode<synchronous>, transform_indices = @transform_7, window_bounds = array<i64: 1, 32>}, {transform_indices = @transform_8, window_bounds = array<i64: 1, 8, 32>}]} {
    %c0 = arith.constant 0 : index
    %c0_0 = arith.constant 0 : index
    %c0_1 = arith.constant 0 : index
    %c0_2 = arith.constant 0 : index
    %0 = vector.load %arg2[%c0, %c0_0, %c0_1, %c0_2] : memref<1x4x8x8xbf16, #tpu.memory_space<vmem>>, vector<1x4x8x8xbf16>
    %1 = vector.shape_cast %0 : vector<1x4x8x8xbf16> to vector<4x8x8xbf16>
    %c0_3 = arith.constant 0 : index
    %c0_4 = arith.constant 0 : index
    %c0_5 = arith.constant 0 : index
    %c0_6 = arith.constant 0 : index
    %2 = vector.load %arg3[%c0_3, %c0_4, %c0_5, %c0_6] : memref<1x4x8x8xbf16, #tpu.memory_space<vmem>>, vector<1x4x8x8xbf16>
    %3 = vector.shape_cast %2 : vector<1x4x8x8xbf16> to vector<4x8x8xbf16>
    %c0_7 = arith.constant 0 : index
    %c0_8 = arith.constant 0 : index
    %c0_9 = arith.constant 0 : index
    %c0_10 = arith.constant 0 : index
    %4 = vector.load %arg4[%c0_7, %c0_8, %c0_9, %c0_10] : memref<1x4x8x8xbf16, #tpu.memory_space<vmem>>, vector<1x4x8x8xbf16>
    %5 = vector.shape_cast %4 : vector<1x4x8x8xbf16> to vector<4x8x8xbf16>
    %cst = arith.constant dense<0.000000e+00> : vector<4x8x8xf32>
    %6 = tpu.matmul %1, %3, %cst {dimension_numbers = #tpu.dot_dimension_numbers<[2], [2], [1], [1], [0, 0, 0, 1, 1, 1], [0], [0]>} : vector<4x8x8xbf16>, vector<4x8x8xbf16>, vector<4x8x8xf32> -> vector<4x8x8xf32>
    %cst_11 = arith.constant 0.353553385 : f32
    %7 = vector.broadcast %cst_11 : f32 to vector<4x8x8xf32>
    %8 = arith.mulf %6, %7 : vector<4x8x8xf32>
    %cst_12 = arith.constant dense<0xFF800000> : vector<4x8xf32>
    %9 = vector.multi_reduction <maximumf>, %8, %cst_12 [2] : vector<4x8x8xf32> to vector<4x8xf32>
    %10 = vector.shape_cast %9 : vector<4x8xf32> to vector<4x8x1xf32>
    %11 = vector.broadcast %10 : vector<4x8x1xf32> to vector<4x8x8xf32>
    %12 = arith.subf %8, %11 : vector<4x8x8xf32>
    %13 = math.exp %12 : vector<4x8x8xf32>
    %cst_13 = arith.constant dense<0.000000e+00> : vector<4x8xf32>
    %14 = vector.multi_reduction <add>, %13, %cst_13 [2] : vector<4x8x8xf32> to vector<4x8xf32>
    %15 = vector.shape_cast %14 : vector<4x8xf32> to vector<4x8x1xf32>
    %16 = tpu.reciprocal %15 {approx = true} : vector<4x8x1xf32> -> vector<4x8x1xf32>
    %17 = vector.broadcast %16 : vector<4x8x1xf32> to vector<4x8x8xf32>
    %18 = arith.mulf %13, %17 : vector<4x8x8xf32>
    %19 = arith.truncf %18 : vector<4x8x8xf32> to vector<4x8x8xbf16>
    %cst_14 = arith.constant dense<0.000000e+00> : vector<4x8x8xf32>
    %20 = tpu.matmul %19, %5, %cst_14 {dimension_numbers = #tpu.dot_dimension_numbers<[2], [1], [1], [2], [0, 0, 0, 1, 1, 2], [0], [0]>} : vector<4x8x8xbf16>, vector<4x8x8xbf16>, vector<4x8x8xf32> -> vector<4x8x8xf32>
    %21 = arith.truncf %20 : vector<4x8x8xf32> to vector<4x8x8xbf16>
    %c0_15 = arith.constant 0 : index
    %c0_16 = arith.constant 0 : index
    %c0_17 = arith.constant 0 : index
    %22 = vector.load %arg6[%c0_15, %c0_16, %c0_17] : memref<4x8x32xbf16, #tpu.memory_space<vmem>>, vector<4x8x32xbf16>
    %cst_18 = arith.constant dense<0.000000e+00> : vector<4x8x32xf32>
    %23 = tpu.matmul %21, %22, %cst_18 {dimension_numbers = #tpu.dot_dimension_numbers<[2], [1], [1], [2], [0, 0, 0, 1, 1, 2], [0], [0]>} : vector<4x8x8xbf16>, vector<4x8x32xbf16>, vector<4x8x32xf32> -> vector<4x8x32xf32>
    %cst_19 = arith.constant dense<0.000000e+00> : vector<8x32xf32>
    %24 = vector.multi_reduction <add>, %23, %cst_19 [0] : vector<4x8x32xf32> to vector<8x32xf32>
    %c0_20 = arith.constant 0 : index
    %c0_21 = arith.constant 0 : index
    %25 = vector.load %arg7[%c0_20, %c0_21] : memref<1x32xf32, #tpu.memory_space<vmem>>, vector<1x32xf32>
    %26 = vector.broadcast %25 : vector<1x32xf32> to vector<8x32xf32>
    %27 = arith.addf %24, %26 : vector<8x32xf32>
    %c0_22 = arith.constant 0 : index
    %c0_23 = arith.constant 0 : index
    %c0_24 = arith.constant 0 : index
    %28 = vector.load %arg5[%c0_22, %c0_23, %c0_24] : memref<1x8x32xf32, #tpu.memory_space<vmem>>, vector<1x8x32xf32>
    %29 = vector.shape_cast %28 : vector<1x8x32xf32> to vector<8x32xf32>
    %30 = arith.addf %29, %27 : vector<8x32xf32>
    %c0_25 = arith.constant 0 : index
    %c0_26 = arith.constant 0 : index
    %31 = vector.load %arg8[%c0_25, %c0_26] : memref<1x32xf32, #tpu.memory_space<vmem>>, vector<1x32xf32>
    %c0_27 = arith.constant 0 : index
    %c0_28 = arith.constant 0 : index
    %32 = vector.load %arg9[%c0_27, %c0_28] : memref<1x32xf32, #tpu.memory_space<vmem>>, vector<1x32xf32>
    %cst_29 = arith.constant dense<0.000000e+00> : vector<8xf32>
    %33 = vector.multi_reduction <add>, %30, %cst_29 [1] : vector<8x32xf32> to vector<8xf32>
    %34 = vector.shape_cast %33 : vector<8xf32> to vector<8x1xf32>
    %cst_30 = arith.constant 3.200000e+01 : f32
    %35 = vector.broadcast %cst_30 : f32 to vector<8x1xf32>
    %36 = arith.divf %34, %35 : vector<8x1xf32>
    %37 = vector.broadcast %36 : vector<8x1xf32> to vector<8x32xf32>
    %38 = arith.subf %30, %37 : vector<8x32xf32>
    %39 = arith.mulf %38, %38 : vector<8x32xf32>
    %cst_31 = arith.constant dense<0.000000e+00> : vector<8xf32>
    %40 = vector.multi_reduction <add>, %39, %cst_31 [1] : vector<8x32xf32> to vector<8xf32>
    %41 = vector.shape_cast %40 : vector<8xf32> to vector<8x1xf32>
    %cst_32 = arith.constant 3.200000e+01 : f32
    %42 = vector.broadcast %cst_32 : f32 to vector<8x1xf32>
    %43 = arith.divf %41, %42 : vector<8x1xf32>
    %44 = vector.broadcast %36 : vector<8x1xf32> to vector<8x32xf32>
    %45 = arith.subf %30, %44 : vector<8x32xf32>
    %cst_33 = arith.constant 9.99999974E-6 : f32
    %46 = vector.broadcast %cst_33 : f32 to vector<8x1xf32>
    %47 = arith.addf %43, %46 : vector<8x1xf32>
    %48 = math.rsqrt %47 : vector<8x1xf32>
    %49 = vector.broadcast %48 : vector<8x1xf32> to vector<8x32xf32>
    %50 = arith.mulf %45, %49 : vector<8x32xf32>
    %51 = vector.broadcast %31 : vector<1x32xf32> to vector<8x32xf32>
    %52 = arith.mulf %50, %51 : vector<8x32xf32>
    %53 = vector.broadcast %32 : vector<1x32xf32> to vector<8x32xf32>
    %54 = arith.addf %52, %53 : vector<8x32xf32>
    %c0_34 = arith.constant 0 : index
    %c0_35 = arith.constant 0 : index
    %c0_36 = arith.constant 0 : index
    %55 = vector.load %arg10[%c0_34, %c0_35, %c0_36] : memref<1x8x32xf32, #tpu.memory_space<vmem>>, vector<1x8x32xf32>
    %56 = vector.shape_cast %55 : vector<1x8x32xf32> to vector<8x32xf32>
    %57 = vector.shape_cast %54 : vector<8x32xf32> to vector<1x8x32xf32>
    tpu.vector_store %arg10[%c0_34, %c0_35, %c0_36], %57 {strides = array<i32>} : memref<1x8x32xf32, #tpu.memory_space<vmem>>, vector<1x8x32xf32>,
    return
  }
  func.func @transform_0(%arg0: i32, %arg1: i32) -> (i32, i32, i32, i32) {
    %c0_i32 = arith.constant 0 : i32
    %c0_i32_0 = arith.constant 0 : i32
    %c0_i32_1 = arith.constant 0 : i32
    return %arg0, %c0_i32, %arg1, %c0_i32_0 : i32, i32, i32, i32
  }
  func.func @transform_1(%arg0: i32, %arg1: i32) -> (i32, i32, i32, i32) {
    %c0_i32 = arith.constant 0 : i32
    %c0_i32_0 = arith.constant 0 : i32
    %c0_i32_1 = arith.constant 0 : i32
    %c0_i32_2 = arith.constant 0 : i32
    return %arg0, %c0_i32, %c0_i32_0, %c0_i32_1 : i32, i32, i32, i32
  }
  func.func @transform_2(%arg0: i32, %arg1: i32) -> (i32, i32, i32, i32) {
    %c0_i32 = arith.constant 0 : i32
    %c0_i32_0 = arith.constant 0 : i32
    %c0_i32_1 = arith.constant 0 : i32
    %c0_i32_2 = arith.constant 0 : i32
    return %arg0, %c0_i32, %c0_i32_0, %c0_i32_1 : i32, i32, i32, i32
  }
  func.func @transform_3(%arg0: i32, %arg1: i32) -> (i32, i32, i32) {
    %c0_i32 = arith.constant 0 : i32
    %c0_i32_0 = arith.constant 0 : i32
    return %arg0, %arg1, %c0_i32 : i32, i32, i32
  }
  func.func @transform_4(%arg0: i32, %arg1: i32) -> (i32, i32, i32) {
    %c0_i32 = arith.constant 0 : i32
    %c0_i32_0 = arith.constant 0 : i32
    %c0_i32_1 = arith.constant 0 : i32
    %c0_i32_2 = arith.constant 0 : i32
    return %c0_i32, %c0_i32_0, %c0_i32_1 : i32, i32, i32
  }
  func.func @transform_5(%arg0: i32, %arg1: i32) -> (i32, i32) {
    %c0_i32 = arith.constant 0 : i32
    %c0_i32_0 = arith.constant 0 : i32
    %c0_i32_1 = arith.constant 0 : i32
    return %c0_i32, %c0_i32_0 : i32, i32
  }
  func.func @transform_6(%arg0: i32, %arg1: i32) -> (i32, i32) {
    %c0_i32 = arith.constant 0 : i32
    %c0_i32_0 = arith.constant 0 : i32
    %c0_i32_1 = arith.constant 0 : i32
    return %c0_i32, %c0_i32_0 : i32, i32
  }
  func.func @transform_7(%arg0: i32, %arg1: i32) -> (i32, i32) {
    %c0_i32 = arith.constant 0 : i32
    %c0_i32_0 = arith.constant 0 : i32
    %c0_i32_1 = arith.constant 0 : i32
    return %c0_i32, %c0_i32_0 : i32, i32
  }
  func.func @transform_8(%arg0: i32, %arg1: i32) -> (i32, i32, i32) {
    %c0_i32 = arith.constant 0 : i32
    %c0_i32_0 = arith.constant 0 : i32
    return %arg0, %arg1, %c0_i32 : i32, i32, i32
  }
}

module attributes {stable_mosaic.version = 11 : i64} {
  func.func @_attn_core_kernel(%arg0: i32, %arg1: i32, %arg2: memref<1x4x8x8xbf16, #tpu.memory_space<vmem>>, %arg3: memref<1x4x8x8xbf16, #tpu.memory_space<vmem>>, %arg4: memref<1x4x8x8xbf16, #tpu.memory_space<vmem>>, %arg5: memref<1x8x32xf32, #tpu.memory_space<vmem>>, %arg6: memref<1x8x5xf32, #tpu.memory_space<vmem>>, %arg7: memref<1x8x5xf32, #tpu.memory_space<vmem>>, %arg8: memref<4x8x32xbf16, #tpu.memory_space<vmem>>, %arg9: memref<1x32xf32, #tpu.memory_space<vmem>>, %arg10: memref<1x32xf32, #tpu.memory_space<vmem>>, %arg11: memref<1x32xf32, #tpu.memory_space<vmem>>, %arg12: memref<1x8x32xf32, #tpu.memory_space<vmem>>) attributes {dimension_semantics = [#tpu.dimension_semantics<parallel>, #tpu.dimension_semantics<parallel>], iteration_bounds = array<i64: 4, 1>, scalar_prefetch = 0 : i64, scratch_operands = 0 : i64, tpu.core_type = #tpu.core_type<tc>, window_params = [{transform_indices = @transform_0, window_bounds = array<i64: 1, 4, 8, 8>}, {transform_indices = @transform_1, window_bounds = array<i64: 1, 4, 8, 8>}, {transform_indices = @transform_2, window_bounds = array<i64: 1, 4, 8, 8>}, {transform_indices = @transform_3, window_bounds = array<i64: 1, 8, 32>}, {transform_indices = @transform_4, window_bounds = array<i64: 1, 8, 5>}, {transform_indices = @transform_5, window_bounds = array<i64: 1, 8, 5>}, {pipeline_mode = #tpu.pipeline_mode<synchronous>, transform_indices = @transform_6, window_bounds = array<i64: 4, 8, 32>}, {pipeline_mode = #tpu.pipeline_mode<synchronous>, transform_indices = @transform_7, window_bounds = array<i64: 1, 32>}, {pipeline_mode = #tpu.pipeline_mode<synchronous>, transform_indices = @transform_8, window_bounds = array<i64: 1, 32>}, {pipeline_mode = #tpu.pipeline_mode<synchronous>, transform_indices = @transform_9, window_bounds = array<i64: 1, 32>}, {transform_indices = @transform_10, window_bounds = array<i64: 1, 8, 32>}]} {
    %c0 = arith.constant 0 : index
    %c0_0 = arith.constant 0 : index
    %c0_1 = arith.constant 0 : index
    %c0_2 = arith.constant 0 : index
    %0 = vector.load %arg2[%c0, %c0_0, %c0_1, %c0_2] : memref<1x4x8x8xbf16, #tpu.memory_space<vmem>>, vector<1x4x8x8xbf16>
    %1 = vector.shape_cast %0 : vector<1x4x8x8xbf16> to vector<4x8x8xbf16>
    %c0_3 = arith.constant 0 : index
    %c0_4 = arith.constant 0 : index
    %c0_5 = arith.constant 0 : index
    %c0_6 = arith.constant 0 : index
    %2 = vector.load %arg3[%c0_3, %c0_4, %c0_5, %c0_6] : memref<1x4x8x8xbf16, #tpu.memory_space<vmem>>, vector<1x4x8x8xbf16>
    %3 = vector.shape_cast %2 : vector<1x4x8x8xbf16> to vector<4x8x8xbf16>
    %c0_7 = arith.constant 0 : index
    %c0_8 = arith.constant 0 : index
    %c0_9 = arith.constant 0 : index
    %c0_10 = arith.constant 0 : index
    %4 = vector.load %arg4[%c0_7, %c0_8, %c0_9, %c0_10] : memref<1x4x8x8xbf16, #tpu.memory_space<vmem>>, vector<1x4x8x8xbf16>
    %5 = vector.shape_cast %4 : vector<1x4x8x8xbf16> to vector<4x8x8xbf16>
    %cst = arith.constant dense<0.000000e+00> : vector<4x8x8xf32>
    %6 = tpu.matmul %1, %3, %cst {dimension_numbers = #tpu.dot_dimension_numbers<[2], [2], [1], [1], [0, 0, 0, 1, 1, 1], [0], [0]>} : vector<4x8x8xbf16>, vector<4x8x8xbf16>, vector<4x8x8xf32> -> vector<4x8x8xf32>
    %cst_11 = arith.constant 0.353553385 : f32
    %7 = vector.broadcast %cst_11 : f32 to vector<4x8x8xf32>
    %8 = arith.mulf %6, %7 : vector<4x8x8xf32>
    %c0_12 = arith.constant 0 : index
    %c0_13 = arith.constant 0 : index
    %c0_14 = arith.constant 0 : index
    %9 = vector.load %arg6[%c0_12, %c0_13, %c0_14] : memref<1x8x5xf32, #tpu.memory_space<vmem>>, vector<1x8x5xf32>
    %10 = vector.shape_cast %9 : vector<1x8x5xf32> to vector<8x5xf32>
    %c0_15 = arith.constant 0 : index
    %c0_16 = arith.constant 0 : index
    %c0_17 = arith.constant 0 : index
    %11 = vector.load %arg7[%c0_15, %c0_16, %c0_17] : memref<1x8x5xf32, #tpu.memory_space<vmem>>, vector<1x8x5xf32>
    %12 = vector.shape_cast %11 : vector<1x8x5xf32> to vector<8x5xf32>
    %cst_18 = arith.constant dense<0.000000e+00> : vector<8x8xf32>
    %13 = tpu.matmul %10, %12, %cst_18 {dimension_numbers = #tpu.dot_dimension_numbers<[1], [1], [0], [0], [0, 0, 1, 0], [], []>} : vector<8x5xf32>, vector<8x5xf32>, vector<8x8xf32> -> vector<8x8xf32>
    %cst_19 = arith.constant 1.000000e+00 : f32
    %14 = vector.broadcast %cst_19 : f32 to vector<8x8xf32>
    %15 = arith.cmpf oge, %13, %14 : vector<8x8xf32>
    %cst_20 = arith.constant -1.000000e+30 : f32
    %cst_21 = arith.constant 0.000000e+00 : f32
    %16 = vector.broadcast %cst_20 : f32 to vector<8x8xf32>
    %17 = vector.broadcast %cst_21 : f32 to vector<8x8xf32>
    %18 = arith.select %15, %16, %17 : vector<8x8xi1>, vector<8x8xf32>
    %19 = vector.shape_cast %18 : vector<8x8xf32> to vector<1x8x8xf32>
    %20 = vector.broadcast %19 : vector<1x8x8xf32> to vector<4x8x8xf32>
    %21 = arith.addf %8, %20 : vector<4x8x8xf32>
    %cst_22 = arith.constant dense<0xFF800000> : vector<4x8xf32>
    %22 = vector.multi_reduction <maximumf>, %21, %cst_22 [2] : vector<4x8x8xf32> to vector<4x8xf32>
    %23 = vector.shape_cast %22 : vector<4x8xf32> to vector<4x8x1xf32>
    %24 = vector.broadcast %23 : vector<4x8x1xf32> to vector<4x8x8xf32>
    %25 = arith.subf %21, %24 : vector<4x8x8xf32>
    %26 = math.exp %25 : vector<4x8x8xf32>
    %cst_23 = arith.constant dense<0.000000e+00> : vector<4x8xf32>
    %27 = vector.multi_reduction <add>, %26, %cst_23 [2] : vector<4x8x8xf32> to vector<4x8xf32>
    %28 = vector.shape_cast %27 : vector<4x8xf32> to vector<4x8x1xf32>
    %29 = tpu.reciprocal %28 {approx = true} : vector<4x8x1xf32> -> vector<4x8x1xf32>
    %30 = vector.broadcast %29 : vector<4x8x1xf32> to vector<4x8x8xf32>
    %31 = arith.mulf %26, %30 : vector<4x8x8xf32>
    %32 = arith.truncf %31 : vector<4x8x8xf32> to vector<4x8x8xbf16>
    %cst_24 = arith.constant dense<0.000000e+00> : vector<4x8x8xf32>
    %33 = tpu.matmul %32, %5, %cst_24 {dimension_numbers = #tpu.dot_dimension_numbers<[2], [1], [1], [2], [0, 0, 0, 1, 1, 2], [0], [0]>} : vector<4x8x8xbf16>, vector<4x8x8xbf16>, vector<4x8x8xf32> -> vector<4x8x8xf32>
    %34 = arith.truncf %33 : vector<4x8x8xf32> to vector<4x8x8xbf16>
    %c0_25 = arith.constant 0 : index
    %c0_26 = arith.constant 0 : index
    %c0_27 = arith.constant 0 : index
    %35 = vector.load %arg8[%c0_25, %c0_26, %c0_27] : memref<4x8x32xbf16, #tpu.memory_space<vmem>>, vector<4x8x32xbf16>
    %cst_28 = arith.constant dense<0.000000e+00> : vector<4x8x32xf32>
    %36 = tpu.matmul %34, %35, %cst_28 {dimension_numbers = #tpu.dot_dimension_numbers<[2], [1], [1], [2], [0, 0, 0, 1, 1, 2], [0], [0]>} : vector<4x8x8xbf16>, vector<4x8x32xbf16>, vector<4x8x32xf32> -> vector<4x8x32xf32>
    %cst_29 = arith.constant dense<0.000000e+00> : vector<8x32xf32>
    %37 = vector.multi_reduction <add>, %36, %cst_29 [0] : vector<4x8x32xf32> to vector<8x32xf32>
    %c0_30 = arith.constant 0 : index
    %c0_31 = arith.constant 0 : index
    %38 = vector.load %arg9[%c0_30, %c0_31] : memref<1x32xf32, #tpu.memory_space<vmem>>, vector<1x32xf32>
    %39 = vector.broadcast %38 : vector<1x32xf32> to vector<8x32xf32>
    %40 = arith.addf %37, %39 : vector<8x32xf32>
    %c0_32 = arith.constant 0 : index
    %c0_33 = arith.constant 0 : index
    %c0_34 = arith.constant 0 : index
    %41 = vector.load %arg5[%c0_32, %c0_33, %c0_34] : memref<1x8x32xf32, #tpu.memory_space<vmem>>, vector<1x8x32xf32>
    %42 = vector.shape_cast %41 : vector<1x8x32xf32> to vector<8x32xf32>
    %43 = arith.addf %42, %40 : vector<8x32xf32>
    %c0_35 = arith.constant 0 : index
    %c0_36 = arith.constant 0 : index
    %44 = vector.load %arg10[%c0_35, %c0_36] : memref<1x32xf32, #tpu.memory_space<vmem>>, vector<1x32xf32>
    %c0_37 = arith.constant 0 : index
    %c0_38 = arith.constant 0 : index
    %45 = vector.load %arg11[%c0_37, %c0_38] : memref<1x32xf32, #tpu.memory_space<vmem>>, vector<1x32xf32>
    %cst_39 = arith.constant dense<0.000000e+00> : vector<8xf32>
    %46 = vector.multi_reduction <add>, %43, %cst_39 [1] : vector<8x32xf32> to vector<8xf32>
    %47 = vector.shape_cast %46 : vector<8xf32> to vector<8x1xf32>
    %cst_40 = arith.constant 3.200000e+01 : f32
    %48 = vector.broadcast %cst_40 : f32 to vector<8x1xf32>
    %49 = arith.divf %47, %48 : vector<8x1xf32>
    %50 = vector.broadcast %49 : vector<8x1xf32> to vector<8x32xf32>
    %51 = arith.subf %43, %50 : vector<8x32xf32>
    %52 = arith.mulf %51, %51 : vector<8x32xf32>
    %cst_41 = arith.constant dense<0.000000e+00> : vector<8xf32>
    %53 = vector.multi_reduction <add>, %52, %cst_41 [1] : vector<8x32xf32> to vector<8xf32>
    %54 = vector.shape_cast %53 : vector<8xf32> to vector<8x1xf32>
    %cst_42 = arith.constant 3.200000e+01 : f32
    %55 = vector.broadcast %cst_42 : f32 to vector<8x1xf32>
    %56 = arith.divf %54, %55 : vector<8x1xf32>
    %57 = vector.broadcast %49 : vector<8x1xf32> to vector<8x32xf32>
    %58 = arith.subf %43, %57 : vector<8x32xf32>
    %cst_43 = arith.constant 9.99999974E-6 : f32
    %59 = vector.broadcast %cst_43 : f32 to vector<8x1xf32>
    %60 = arith.addf %56, %59 : vector<8x1xf32>
    %61 = math.rsqrt %60 : vector<8x1xf32>
    %62 = vector.broadcast %61 : vector<8x1xf32> to vector<8x32xf32>
    %63 = arith.mulf %58, %62 : vector<8x32xf32>
    %64 = vector.broadcast %44 : vector<1x32xf32> to vector<8x32xf32>
    %65 = arith.mulf %63, %64 : vector<8x32xf32>
    %66 = vector.broadcast %45 : vector<1x32xf32> to vector<8x32xf32>
    %67 = arith.addf %65, %66 : vector<8x32xf32>
    %c0_44 = arith.constant 0 : index
    %c0_45 = arith.constant 0 : index
    %c0_46 = arith.constant 0 : index
    %68 = vector.load %arg12[%c0_44, %c0_45, %c0_46] : memref<1x8x32xf32, #tpu.memory_space<vmem>>, vector<1x8x32xf32>
    %69 = vector.shape_cast %68 : vector<1x8x32xf32> to vector<8x32xf32>
    %70 = vector.shape_cast %67 : vector<8x32xf32> to vector<1x8x32xf32>
    tpu.vector_store %arg12[%c0_44, %c0_45, %c0_46], %70 {strides = array<i32>} : memref<1x8x32xf32, #tpu.memory_space<vmem>>, vector<1x8x32xf32>,
    return
  }
  func.func @transform_0(%arg0: i32, %arg1: i32) -> (i32, i32, i32, i32) {
    %c0_i32 = arith.constant 0 : i32
    %c0_i32_0 = arith.constant 0 : i32
    %c0_i32_1 = arith.constant 0 : i32
    return %arg0, %c0_i32, %arg1, %c0_i32_0 : i32, i32, i32, i32
  }
  func.func @transform_1(%arg0: i32, %arg1: i32) -> (i32, i32, i32, i32) {
    %c0_i32 = arith.constant 0 : i32
    %c0_i32_0 = arith.constant 0 : i32
    %c0_i32_1 = arith.constant 0 : i32
    %c0_i32_2 = arith.constant 0 : i32
    return %arg0, %c0_i32, %c0_i32_0, %c0_i32_1 : i32, i32, i32, i32
  }
  func.func @transform_2(%arg0: i32, %arg1: i32) -> (i32, i32, i32, i32) {
    %c0_i32 = arith.constant 0 : i32
    %c0_i32_0 = arith.constant 0 : i32
    %c0_i32_1 = arith.constant 0 : i32
    %c0_i32_2 = arith.constant 0 : i32
    return %arg0, %c0_i32, %c0_i32_0, %c0_i32_1 : i32, i32, i32, i32
  }
  func.func @transform_3(%arg0: i32, %arg1: i32) -> (i32, i32, i32) {
    %c0_i32 = arith.constant 0 : i32
    %c0_i32_0 = arith.constant 0 : i32
    return %arg0, %arg1, %c0_i32 : i32, i32, i32
  }
  func.func @transform_4(%arg0: i32, %arg1: i32) -> (i32, i32, i32) {
    %c0_i32 = arith.constant 0 : i32
    %c0_i32_0 = arith.constant 0 : i32
    return %arg0, %arg1, %c0_i32 : i32, i32, i32
  }
  func.func @transform_5(%arg0: i32, %arg1: i32) -> (i32, i32, i32) {
    %c0_i32 = arith.constant 0 : i32
    %c0_i32_0 = arith.constant 0 : i32
    %c0_i32_1 = arith.constant 0 : i32
    return %arg0, %c0_i32, %c0_i32_0 : i32, i32, i32
  }
  func.func @transform_6(%arg0: i32, %arg1: i32) -> (i32, i32, i32) {
    %c0_i32 = arith.constant 0 : i32
    %c0_i32_0 = arith.constant 0 : i32
    %c0_i32_1 = arith.constant 0 : i32
    %c0_i32_2 = arith.constant 0 : i32
    return %c0_i32, %c0_i32_0, %c0_i32_1 : i32, i32, i32
  }
  func.func @transform_7(%arg0: i32, %arg1: i32) -> (i32, i32) {
    %c0_i32 = arith.constant 0 : i32
    %c0_i32_0 = arith.constant 0 : i32
    %c0_i32_1 = arith.constant 0 : i32
    return %c0_i32, %c0_i32_0 : i32, i32
  }
  func.func @transform_8(%arg0: i32, %arg1: i32) -> (i32, i32) {
    %c0_i32 = arith.constant 0 : i32
    %c0_i32_0 = arith.constant 0 : i32
    %c0_i32_1 = arith.constant 0 : i32
    return %c0_i32, %c0_i32_0 : i32, i32
  }
  func.func @transform_9(%arg0: i32, %arg1: i32) -> (i32, i32) {
    %c0_i32 = arith.constant 0 : i32
    %c0_i32_0 = arith.constant 0 : i32
    %c0_i32_1 = arith.constant 0 : i32
    return %c0_i32, %c0_i32_0 : i32, i32
  }
  func.func @transform_10(%arg0: i32, %arg1: i32) -> (i32, i32, i32) {
    %c0_i32 = arith.constant 0 : i32
    %c0_i32_0 = arith.constant 0 : i32
    return %arg0, %arg1, %c0_i32 : i32, i32, i32
  }
}

module attributes {stable_mosaic.version = 11 : i64} {
  func.func @_ln_kernel(%arg0: i32, %arg1: memref<16x32xf32, #tpu.memory_space<vmem>>, %arg2: memref<1x32xf32, #tpu.memory_space<vmem>>, %arg3: memref<1x32xf32, #tpu.memory_space<vmem>>, %arg4: memref<16x32xf32, #tpu.memory_space<vmem>>) attributes {dimension_semantics = [#tpu.dimension_semantics<parallel>], iteration_bounds = array<i64: 1>, scalar_prefetch = 0 : i64, scratch_operands = 0 : i64, tpu.core_type = #tpu.core_type<tc>, window_params = [{transform_indices = @transform_0, window_bounds = array<i64: 16, 32>}, {pipeline_mode = #tpu.pipeline_mode<synchronous>, transform_indices = @transform_1, window_bounds = array<i64: 1, 32>}, {pipeline_mode = #tpu.pipeline_mode<synchronous>, transform_indices = @transform_2, window_bounds = array<i64: 1, 32>}, {transform_indices = @transform_3, window_bounds = array<i64: 16, 32>}]} {
    %c0 = arith.constant 0 : index
    %c0_0 = arith.constant 0 : index
    %0 = vector.load %arg1[%c0, %c0_0] : memref<16x32xf32, #tpu.memory_space<vmem>>, vector<16x32xf32>
    %c0_1 = arith.constant 0 : index
    %c0_2 = arith.constant 0 : index
    %1 = vector.load %arg2[%c0_1, %c0_2] : memref<1x32xf32, #tpu.memory_space<vmem>>, vector<1x32xf32>
    %c0_3 = arith.constant 0 : index
    %c0_4 = arith.constant 0 : index
    %2 = vector.load %arg3[%c0_3, %c0_4] : memref<1x32xf32, #tpu.memory_space<vmem>>, vector<1x32xf32>
    %cst = arith.constant dense<0.000000e+00> : vector<16xf32>
    %3 = vector.multi_reduction <add>, %0, %cst [1] : vector<16x32xf32> to vector<16xf32>
    %4 = vector.shape_cast %3 : vector<16xf32> to vector<16x1xf32>
    %cst_5 = arith.constant 3.200000e+01 : f32
    %5 = vector.broadcast %cst_5 : f32 to vector<16x1xf32>
    %6 = arith.divf %4, %5 : vector<16x1xf32>
    %7 = vector.broadcast %6 : vector<16x1xf32> to vector<16x32xf32>
    %8 = arith.subf %0, %7 : vector<16x32xf32>
    %9 = arith.mulf %8, %8 : vector<16x32xf32>
    %cst_6 = arith.constant dense<0.000000e+00> : vector<16xf32>
    %10 = vector.multi_reduction <add>, %9, %cst_6 [1] : vector<16x32xf32> to vector<16xf32>
    %11 = vector.shape_cast %10 : vector<16xf32> to vector<16x1xf32>
    %cst_7 = arith.constant 3.200000e+01 : f32
    %12 = vector.broadcast %cst_7 : f32 to vector<16x1xf32>
    %13 = arith.divf %11, %12 : vector<16x1xf32>
    %14 = vector.broadcast %6 : vector<16x1xf32> to vector<16x32xf32>
    %15 = arith.subf %0, %14 : vector<16x32xf32>
    %cst_8 = arith.constant 9.99999974E-6 : f32
    %16 = vector.broadcast %cst_8 : f32 to vector<16x1xf32>
    %17 = arith.addf %13, %16 : vector<16x1xf32>
    %18 = math.rsqrt %17 : vector<16x1xf32>
    %19 = vector.broadcast %18 : vector<16x1xf32> to vector<16x32xf32>
    %20 = arith.mulf %15, %19 : vector<16x32xf32>
    %21 = vector.broadcast %1 : vector<1x32xf32> to vector<16x32xf32>
    %22 = arith.mulf %20, %21 : vector<16x32xf32>
    %23 = vector.broadcast %2 : vector<1x32xf32> to vector<16x32xf32>
    %24 = arith.addf %22, %23 : vector<16x32xf32>
    %c0_9 = arith.constant 0 : index
    %c0_10 = arith.constant 0 : index
    %25 = vector.load %arg4[%c0_9, %c0_10] : memref<16x32xf32, #tpu.memory_space<vmem>>, vector<16x32xf32>
    tpu.vector_store %arg4[%c0_9, %c0_10], %24 {strides = array<i32>} : memref<16x32xf32, #tpu.memory_space<vmem>>, vector<16x32xf32>,
    return
  }
  func.func @transform_0(%arg0: i32) -> (i32, i32) {
    %c0_i32 = arith.constant 0 : i32
    %c0_i32_0 = arith.constant 0 : i32
    return %arg0, %c0_i32 : i32, i32
  }
  func.func @transform_1(%arg0: i32) -> (i32, i32) {
    %c0_i32 = arith.constant 0 : i32
    %c0_i32_0 = arith.constant 0 : i32
    %c0_i32_1 = arith.constant 0 : i32
    return %c0_i32, %c0_i32_0 : i32, i32
  }
  func.func @transform_2(%arg0: i32) -> (i32, i32) {
    %c0_i32 = arith.constant 0 : i32
    %c0_i32_0 = arith.constant 0 : i32
    %c0_i32_1 = arith.constant 0 : i32
    return %c0_i32, %c0_i32_0 : i32, i32
  }
  func.func @transform_3(%arg0: i32) -> (i32, i32) {
    %c0_i32 = arith.constant 0 : i32
    %c0_i32_0 = arith.constant 0 : i32
    return %arg0, %c0_i32 : i32, i32
  }
}

</mosaic_0001>

<llo_original>
// kernel: _lambda_.19
$region0: #{_lambda_.19}
  #allocation0 [shape = 'u32[]', space=smem, size = 0x4, offset = 0x4, fixed_abs, tag = 'smem constant byte address 0x4 - core index']
  #allocation1 [shape = 'u32[144,128]{1,0:T(1,128)}', space=vmem, size = 0x12000, scoped, tag = 'internal scratch']
  %s0 = inlined_call_operand.vmem [shape: f32[4,8,32], index: 0, kind: input, shape index: {}]
  %s1 = inlined_call_operand.vmem [shape: bf16[32,32], index: 1, kind: input, shape index: {}]
  %s2 = inlined_call_operand.vmem [shape: f32[1,32], index: 2, kind: input, shape index: {}]
  %s3 = inlined_call_operand.vmem [shape: bf16[4,4,8,8], index: 3, kind: output, shape index: {}]
  %s4 = sld [smem:[#allocation0]]
  $region45: #{_lambda_.19} parent=0
    _
  %s6 = ssub.s32 1, %s4
  %s7 = scalar_select 0, %s6, %s4
  loop: start=0, step=1, limit=6
  $region2: #{_lambda_.19} parent=0 // loop_pre_header
    _
  $region3: #{_lambda_.19} parent=0 // loop_header
    %s9 = sphi 0, %s13
    %p10 = scmp.ge.s32.totalorder %s9, 6
    %s16 = sphi 0, %s28
    %s17 = sphi 0, %s24
    %s18 = sphi 0, %s16
    %s19 = sphi 0, %s17
    %s20 = sphi 0, %s18
    %s21 = sphi 0, %s19
    %s33 = sphi 0, %s35
    %s36 = sphi 0, %s33
    %s37 = sphi 0, %s36
    %s53 = sphi 0, %s37
    %s57 = sphi 0, %s57
    %s59 = sphi 0, %s57
    %s60 = sphi 0, %s59
    %s74 = sphi 0, %s60
    %s78 = sphi 0, %s78
    %s80 = sphi 0, %s78
    %s81 = sphi 0, %s80
    %s95 = sphi 0, %s81
    %s103 = sphi 0, %s105
    %s106 = sphi 0, %s103
    %s107 = sphi 0, %s106
    %s123 = sphi 0, %s107
  $region4: #{_lambda_.19} parent=0 // loop_header_branch
    %12 = sbr.rel (%p10) target = $region8
  $region5: #{_lambda_.19} parent=0 // loop_body
    %s14 = ssub.s32 %s9, 1
    %s15 = ssub.s32 %s9, 2
    %s22 = sadd.s32 1, %s17
    %p23 = scmp.ge.s32.totalorder %s22, 1
    %s24 = scalar_select %p23, 0, %s22
    %s25 = sadd.s32 1, %s16
    %s26 = scalar_select %p23, %s25, %s16
    %p27 = scmp.ge.s32.totalorder %s26, 4
    %s28 = scalar_select %p27, 0, %s26
    %s29 = ssub.s32 %s16, %s28
    %s30 = ssub.s32 %s17, %s24
    %s31 = sor.u32 %s29, %s30
    %p32 = scmp.eq.s32.totalorder %s31, 0
    %s34 = sadd.s32 %s33, 1
    %s35 = scalar_select %p32, %s33, %s34
    %p38 = pneg %p32
    %p39 = scmp.eq.s32.totalorder %s9, 3
    %p40 = por %p38, %p39
    %p41 = scmp.ne.s32.totalorder %s33, %s36
    %p42 = scmp.eq.s32.totalorder %s9, 0
    %p43 = por %p41, %p42
    %p44 = scmp.ne.s32.totalorder %s33, %s36
    %p45 = scmp.eq.s32.totalorder %s14, 3
    %p46 = por %p44, %p45
    %p47 = scmp.ne.s32.totalorder %s36, %s37
    %p48 = scmp.eq.s32.totalorder %s14, 0
    %p49 = por %p47, %p48
    %p50 = scmp.ne.s32.totalorder %s36, %s37
    %p51 = scmp.eq.s32.totalorder %s15, 3
    %p52 = por %p50, %p51
    %p54 = scmp.ne.s32.totalorder %s37, %s53
    %p55 = scmp.eq.s32.totalorder %s15, 0
    %p56 = por %p54, %p55
    %s58 = sadd.s32 %s57, 1
    %p61 = scmp.eq.s32.totalorder %s9, 3
    %p62 = scmp.ne.s32.totalorder %s57, %s59
    %p63 = scmp.eq.s32.totalorder %s9, 0
    %p64 = por %p62, %p63
    %p65 = scmp.ne.s32.totalorder %s57, %s59
    %p66 = scmp.eq.s32.totalorder %s14, 3
    %p67 = por %p65, %p66
    %p68 = scmp.ne.s32.totalorder %s59, %s60
    %p69 = scmp.eq.s32.totalorder %s14, 0
    %p70 = por %p68, %p69
    %p71 = scmp.ne.s32.totalorder %s59, %s60
    %p72 = scmp.eq.s32.totalorder %s15, 3
    %p73 = por %p71, %p72
    %p75 = scmp.ne.s32.totalorder %s60, %s74
    %p76 = scmp.eq.s32.totalorder %s15, 0
    %p77 = por %p75, %p76
    %s79 = sadd.s32 %s78, 1
    %p82 = scmp.eq.s32.totalorder %s9, 3
    %p83 = scmp.ne.s32.totalorder %s78, %s80
    %p84 = scmp.eq.s32.totalorder %s9, 0
    %p85 = por %p83, %p84
    %p86 = scmp.ne.s32.totalorder %s78, %s80
    %p87 = scmp.eq.s32.totalorder %s14, 3
    %p88 = por %p86, %p87
    %p89 = scmp.ne.s32.totalorder %s80, %s81
    %p90 = scmp.eq.s32.totalorder %s14, 0
    %p91 = por %p89, %p90
    %p92 = scmp.ne.s32.totalorder %s80, %s81
    %p93 = scmp.eq.s32.totalorder %s15, 3
    %p94 = por %p92, %p93
    %p96 = scmp.ne.s32.totalorder %s81, %s95
    %p97 = scmp.eq.s32.totalorder %s15, 0
    %p98 = por %p96, %p97
    %s99 = ssub.s32 %s16, %s28
    %s100 = ssub.s32 %s17, %s24
    %s101 = sor.u32 %s99, %s100
    %p102 = scmp.eq.s32.totalorder %s101, 0
    %s104 = sadd.s32 %s103, 1
    %s105 = scalar_select %p102, %s103, %s104
    %p108 = pneg %p102
    %p109 = scmp.eq.s32.totalorder %s9, 3
    %p110 = por %p108, %p109
    %p111 = scmp.ne.s32.totalorder %s103, %s106
    %p112 = scmp.eq.s32.totalorder %s9, 0
    %p113 = por %p111, %p112
    %p114 = scmp.ne.s32.totalorder %s103, %s106
    %p115 = scmp.eq.s32.totalorder %s14, 3
    %p116 = por %p114, %p115
    %p117 = scmp.ne.s32.totalorder %s106, %s107
    %p118 = scmp.eq.s32.totalorder %s14, 0
    %p119 = por %p117, %p118
    %p120 = scmp.ne.s32.totalorder %s106, %s107
    %p121 = scmp.eq.s32.totalorder %s15, 3
    %p122 = por %p120, %p121
    %p124 = scmp.ne.s32.totalorder %s107, %s123
    %p125 = scmp.eq.s32.totalorder %s15, 0
    %p126 = por %p124, %p125
    %p127 = scmp.le.s32.totalorder 1, %s9
    %p128 = scmp.lt.s32.totalorder %s9, 5
    %p129 = pnand %p127, %p128
    %p130 = pneg %p129
    // Predicated region
    $region9: #{_lambda_.19} parent=5 // pred_check
      _
    $region10: #{_lambda_.19} parent=5 // pred_check_branch
      %132 = sbr.rel (%p129) target = $region12
    $region11: #{_lambda_.19} parent=5 // pred_region
      %s133 = ssub.s32 %s9, 1
      // Predicated region
      $region13: #{_lambda_.19} parent=11 // pred_check
        %p134 = pneg %p70
      $region14: #{_lambda_.19} parent=11 // pred_check_branch
        %136 = sbr.rel (%p134) target = $region16
      $region15: #{_lambda_.19} parent=11 // pred_region
        _
      $region16: #{_lambda_.19} parent=11 // pred_fallthru
        _
      // Predicated region
      $region17: #{_lambda_.19} parent=11 // pred_check
        %p137 = pneg %p91
      $region18: #{_lambda_.19} parent=11 // pred_check_branch
        %139 = sbr.rel (%p137) target = $region20
      $region19: #{_lambda_.19} parent=11 // pred_region
        _
      $region20: #{_lambda_.19} parent=11 // pred_fallthru
        _
    $region12: #{_lambda_.19} parent=5 // pred_fallthru
      _
    %p140 = scmp.lt.s32.totalorder %s9, 4
    // Predicated region
    $region21: #{_lambda_.19} parent=5 // pred_check
      %p141 = pneg %p140
    $region22: #{_lambda_.19} parent=5 // pred_check_branch
      %143 = sbr.rel (%p141) target = $region24
    $region23: #{_lambda_.19} parent=5 // pred_region
      // Predicated region
      $region25: #{_lambda_.19} parent=23 // pred_check
        %p144 = pneg %p43
      $region26: #{_lambda_.19} parent=23 // pred_check_branch
        %146 = sbr.rel (%p144) target = $region28
      $region27: #{_lambda_.19} parent=23 // pred_region
        %p147 = scmp.lt.s32.totalorder %s16, 3
        %s148 = scalar_select %p147, %s16, 3
        %p149 = scmp.lt.s32.totalorder %s17, 0
        %s150 = scalar_select %p149, %s17, 0
        %s151 = sadd.s32 %s150, %s148
        %s152 = smul.addr %s151, 8
        %s153 = scalar_lea.vmem %s0, %s152
      $region28: #{_lambda_.19} parent=23 // pred_fallthru
        _
    $region24: #{_lambda_.19} parent=5 // pred_fallthru
      _
    %p154 = scmp.le.s32.totalorder 1, %s9
    %p155 = scmp.lt.s32.totalorder %s9, 5
    %p156 = pnand %p154, %p155
    %p157 = pneg %p156
    // Predicated region
    $region29: #{_lambda_.19} parent=5 // pred_check
      _
    $region30: #{_lambda_.19} parent=5 // pred_check_branch
      %159 = sbr.rel (%p156) target = $region32
    $region31: #{_lambda_.19} parent=5 // pred_region
      %s160 = ssub.s32 %s9, 1
      %p161 = scmp.lt.s32.totalorder %s18, 3
      %s162 = scalar_select %p161, %s18, 3
      %p163 = scmp.lt.s32.totalorder %s19, 0
      %s164 = scalar_select %p163, %s19, 0
      %s165 = sadd.s32 %s164, %s162
      %s166 = smul.addr %s165, 8
      %s167 = scalar_lea.vmem %s0, %s166
      %p168 = pneg %p49
      %p169 = pneg %p46
      %p170 = pneg %p70
      %p171 = pneg %p67
      %p172 = pneg %p91
      %p173 = pneg %p88
      %p174 = pneg %p119
      %p175 = pneg %p116
      %p176 = scmp.lt.s32.totalorder %s18, 3
      %s177 = scalar_select %p176, %s18, 3
      %p178 = scmp.lt.s32.totalorder %s19, 0
      %s179 = scalar_select %p178, %s19, 0
      %s180 = smul.addr %s177, 4
      %s181 = sadd.s32 %s179, %s180
      %s182 = smul.addr %s181, 4
      %s183 = scalar_lea.vmem %s3, %s182
      %p184 = scmp.lt.s32.totalorder %s18, 3
      %s185 = scalar_select %p184, %s18, 3
      %p186 = scmp.lt.s32.totalorder %s19, 0
      %s187 = scalar_select %p186, %s19, 0
      %s188 = sadd.s32 %s187, %s185
      %s189 = smul.addr %s188, 8
      %s190 = scalar_lea.vmem %s0, %s189
      %p191 = scmp.lt.s32.totalorder %s18, 3
      %s192 = scalar_select %p191, %s18, 3
      %p193 = scmp.lt.s32.totalorder %s19, 0
      %s194 = scalar_select %p193, %s19, 0
      %s195 = smul.addr %s192, 4
      %s196 = sadd.s32 %s194, %s195
      %s197 = smul.addr %s196, 4
      %s198 = scalar_lea.vmem %s3, %s197
      %v200 = vld [vmem:[%s190] sm:$0xff]
      %v201 = vpack.c.bf16 %v200, %v200
      %v202 = vld [vmem:[%s1] sm:$0xf]
      %v203 = vld [vmem:[%s1 + $0x4] sm:$0xf]
      %v204 = vld [vmem:[%s1 + $0x8] sm:$0xf]
      %v205 = vld [vmem:[%s1 + $0xc] sm:$0xf]
      %v206 = vld [vmem:[%s2] sm:$0x1]
      %v208 = vlaneseq
      %v209 = vshrl.u32 %v208, 7
      %v210 = vsub.s32 0, %v209
      %v211 = vrot.slane %v206, %v210
      %v217 = vunpack.c.l.b16 %v202
      %v218 = vunpack.c.l.b16 %v203
      %v219 = vunpack.c.l.b16 %v204
      %v220 = vunpack.c.l.b16 %v205
      %v221 = vpack.c.b16 %v218, %v217
      %v222 = vpack.c.b16 %v220, %v219
      %vm223 = vcmask 261120
      %v225 = vsel %vm223, %v201, 0
      %v228 = vsel %vm223, %v221, 0
      %v231 = vsel %vm223, %v222, 0
      %233 = vmatprep.subr.bf16.mxu0 0
      %234 = vmatpush1.bf16.xpose.msra.mxu0 %v228
      %235 = vmatprep.subr.bf16.mxu0 0
      %236 = vmatpush1.bf16.xpose.msra.mxu0 %v231
      %237 = vmatprep.subr.bf16.mxu0 0
      %238 = vmatpush1.bf16.xpose.msra.mxu0 0
      %239 = vmatprep.subr.bf16.mxu0 0
      %240 = vmatpush1.bf16.xpose.msra.mxu0 0
      %241 = vmatprep.subr.bf16.mxu0 0
      %242 = vmatpush1.bf16.xpose.msra.mxu0 0
      %243 = vmatprep.subr.bf16.mxu0 0
      %244 = vmatpush1.bf16.xpose.msra.mxu0 0
      %245 = vmatprep.subr.bf16.mxu0 0
      %246 = vmatpush1.bf16.xpose.msra.mxu0 0
      %247 = vmatprep.subr.bf16.mxu0 0
      %248 = vmatpush1.bf16.xpose.msra.mxu0 0
      %249 = vmatprep.subr.bf16.mxu0 0
      %250 = vmatpush1.bf16.xpose.msra.mxu0 0
      %251 = vmatprep.subr.bf16.mxu0 0
      %252 = vmatpush1.bf16.xpose.msra.mxu0 0
      %253 = vmatprep.subr.bf16.mxu0 0
      %254 = vmatpush1.bf16.xpose.msra.mxu0 0
      %255 = vmatprep.subr.bf16.mxu0 0
      %256 = vmatpush1.bf16.xpose.msra.mxu0 0
      %257 = vmatprep.subr.bf16.mxu0 0
      %258 = vmatpush1.bf16.xpose.msra.mxu0 0
      %259 = vmatprep.subr.bf16.mxu0 0
      %260 = vmatpush1.bf16.xpose.msra.mxu0 0
      %261 = vmatprep.subr.bf16.mxu0 0
      %262 = vmatpush1.bf16.xpose.msra.mxu0 0
      %263 = vmatprep.subr.bf16.mxu0 0
      %264 = vmatpush1.bf16.xpose.msra.mxu0 0
      %265 = vmatprep.mubr.bf16.mxu0 0
      %266 = vmatmul.mubr.bf16.gmra.mrb[0].mxu0 %v225
      %v267 = vpop.f32.mrb[0].mxu0
      %v268 = vadd.f32 %v211, %v267
      %v269 = vpop.f32.mrb[0].mxu0
      %v270 = vpop.f32.mrb[0].mxu0
      %v271 = vpop.f32.mrb[0].mxu0
      %272 = vdwg.mxu0
      %v273 = vpack.c.bf16 %v268, %v268
      %vm274 = vcmask 60416
      %275 = vst.msk [vmem:[%s198] sm:$0xf] %vm274, %v273
      %v277 = vunpack.c.l.b16 %v273
      %v278 = vpack.c.b16 %v277, %v277
      %279 = vrot.lane.b32.xlu0 %v278, 120
      %v280 = vpop.permute.xlu0 %279
      %s282 = scalar_lea.vmem %s198, 4
      %283 = vst.msk [vmem:[%s282] sm:$0xf] %vm274, %v280
      %284 = vrot.lane.b32.xlu0 %v278, 112
      %v285 = vpop.permute.xlu0 %284
      %s287 = scalar_lea.vmem %s198, 8
      %288 = vst.msk [vmem:[%s287] sm:$0xf] %vm274, %v285
      %289 = vrot.lane.b32.xlu0 %v278, 104
      %v290 = vpop.permute.xlu0 %289
      %s292 = scalar_lea.vmem %s198, 12
      %293 = vst.msk [vmem:[%s292] sm:$0xf] %vm274, %v290
      %p294 = scmp.lt.s32.totalorder %s18, 3
      %s295 = scalar_select %p294, %s18, 3
      %p296 = scmp.lt.s32.totalorder %s19, 0
      %s297 = scalar_select %p296, %s19, 0
      %s298 = smul.addr %s295, 4
      %s299 = sadd.s32 %s297, %s298
      %s300 = smul.addr %s299, 4
      %s301 = scalar_lea.vmem %s3, %s300
      // Predicated region
      $region33: #{_lambda_.19} parent=31 // pred_check
        %p302 = pneg %p116
      $region34: #{_lambda_.19} parent=31 // pred_check_branch
        %304 = sbr.rel (%p302) target = $region36
      $region35: #{_lambda_.19} parent=31 // pred_region
        _
      $region36: #{_lambda_.19} parent=31 // pred_fallthru
        _
    $region32: #{_lambda_.19} parent=5 // pred_fallthru
      _
    %p305 = scmp.le.s32.totalorder 2, %s9
    // Predicated region
    $region37: #{_lambda_.19} parent=5 // pred_check
      %p306 = pneg %p305
    $region38: #{_lambda_.19} parent=5 // pred_check_branch
      %308 = sbr.rel (%p306) target = $region40
    $region39: #{_lambda_.19} parent=5 // pred_region
      %s309 = ssub.s32 %s9, 2
      // Predicated region
      $region41: #{_lambda_.19} parent=39 // pred_check
        %p310 = pneg %p122
      $region42: #{_lambda_.19} parent=39 // pred_check_branch
        %312 = sbr.rel (%p310) target = $region44
      $region43: #{_lambda_.19} parent=39 // pred_region
        %p313 = scmp.lt.s32.totalorder %s20, 3
        %s314 = scalar_select %p313, %s20, 3
        %p315 = scmp.lt.s32.totalorder %s21, 0
        %s316 = scalar_select %p315, %s21, 0
        %s317 = smul.addr %s314, 4
        %s318 = sadd.s32 %s316, %s317
        %s319 = smul.addr %s318, 4
        %s320 = scalar_lea.vmem %s3, %s319
      $region44: #{_lambda_.19} parent=39 // pred_fallthru
        _
    $region40: #{_lambda_.19} parent=5 // pred_fallthru
      _
  $region6: #{_lambda_.19} parent=0 // loop_footer
    %s13 = sadd.s32 1, %s9
  $region7: #{_lambda_.19} parent=0 // loop_footer_branch
    %8 = sbr.rel target = $region3
  $region8: #{_lambda_.19} parent=0 // loop_exit
    _

// kernel: _lambda_.21
$region0: #{_lambda_.21}
  #allocation0 [shape = 'u32[]', space=smem, size = 0x4, offset = 0x4, fixed_abs, tag = 'smem constant byte address 0x4 - core index']
  #allocation1 [shape = 'u32[144,128]{1,0:T(1,128)}', space=vmem, size = 0x12000, scoped, tag = 'internal scratch']
  %s0 = inlined_call_operand.vmem [shape: f32[32,32], index: 0, kind: input, shape index: {}]
  %s1 = inlined_call_operand.vmem [shape: bf16[64,32], index: 1, kind: input, shape index: {}]
  %s2 = inlined_call_operand.vmem [shape: f32[1,64], index: 2, kind: input, shape index: {}]
  %s3 = inlined_call_operand.vmem [shape: bf16[32,64], index: 3, kind: input, shape index: {}]
  %s4 = inlined_call_operand.vmem [shape: f32[1,32], index: 4, kind: input, shape index: {}, may-alias: {4,6}]
  %s5 = inlined_call_operand.vmem [shape: f32[1,32], index: 5, kind: input, shape index: {}]
  %s6 = inlined_call_operand.vmem [shape: f32[1,32], index: 6, kind: input, shape index: {}, may-alias: {4,6}]
  %s7 = inlined_call_operand.vmem [shape: f32[32,32], index: 7, kind: output, shape index: {}]
  %s8 = sld [smem:[#allocation0]]
  $region38: #{_lambda_.21} parent=0
    _
  %s10 = ssub.s32 1, %s8
  %s11 = scalar_select 0, %s10, %s8
  // Predicated region
  $region2: #{_lambda_.21} parent=0 // pred_check
    _
  $region3: #{_lambda_.21} parent=0 // pred_check_branch
    %13 = sbr.rel (0) target = $region5
  $region4: #{_lambda_.21} parent=0 // pred_region
    _
  $region5: #{_lambda_.21} parent=0 // pred_fallthru
    _
  // Predicated region
  $region6: #{_lambda_.21} parent=0 // pred_check
    _
  $region7: #{_lambda_.21} parent=0 // pred_check_branch
    %15 = sbr.rel (0) target = $region9
  $region8: #{_lambda_.21} parent=0 // pred_region
    _
  $region9: #{_lambda_.21} parent=0 // pred_fallthru
    _
  // Predicated region
  $region10: #{_lambda_.21} parent=0 // pred_check
    _
  $region11: #{_lambda_.21} parent=0 // pred_check_branch
    %17 = sbr.rel (0) target = $region13
  $region12: #{_lambda_.21} parent=0 // pred_region
    _
  $region13: #{_lambda_.21} parent=0 // pred_fallthru
    _
  // Predicated region
  $region14: #{_lambda_.21} parent=0 // pred_check
    _
  $region15: #{_lambda_.21} parent=0 // pred_check_branch
    %19 = sbr.rel (0) target = $region17
  $region16: #{_lambda_.21} parent=0 // pred_region
    _
  $region17: #{_lambda_.21} parent=0 // pred_fallthru
    _
  // Predicated region
  $region18: #{_lambda_.21} parent=0 // pred_check
    _
  $region19: #{_lambda_.21} parent=0 // pred_check_branch
    %21 = sbr.rel (0) target = $region21
  $region20: #{_lambda_.21} parent=0 // pred_region
    _
  $region21: #{_lambda_.21} parent=0 // pred_fallthru
    _
  // Predicated region
  $region22: #{_lambda_.21} parent=0 // pred_check
    _
  $region23: #{_lambda_.21} parent=0 // pred_check_branch
    %23 = sbr.rel (0) target = $region25
  $region24: #{_lambda_.21} parent=0 // pred_region
    _
  $region25: #{_lambda_.21} parent=0 // pred_fallthru
    _
  // Predicated region
  $region26: #{_lambda_.21} parent=0 // pred_check
    _
  $region27: #{_lambda_.21} parent=0 // pred_check_branch
    %25 = sbr.rel (0) target = $region29
  $region28: #{_lambda_.21} parent=0 // pred_region
    _
  $region29: #{_lambda_.21} parent=0 // pred_fallthru
    _
  %v27 = vld [vmem:[%s0] sm:$0xff]
  %v28 = vld [vmem:[%s0 + $0x8] sm:$0xff]
  %v29 = vld [vmem:[%s0 + $0x10] sm:$0xff]
  %v30 = vld [vmem:[%s0 + $0x18] sm:$0xff]
  %v31 = vpack.c.bf16 %v28, %v27
  %v32 = vpack.c.bf16 %v30, %v29
  %v33 = vld [vmem:[%s1] sm:$0xf]
  %v34 = vld [vmem:[%s1 + $0x4] sm:$0xf]
  %v35 = vld [vmem:[%s1 + $0x8] sm:$0xf]
  %v36 = vld [vmem:[%s1 + $0xc] sm:$0xf]
  %v37 = vld [vmem:[%s1 + $0x10] sm:$0xf]
  %v38 = vld [vmem:[%s1 + $0x14] sm:$0xf]
  %v39 = vld [vmem:[%s1 + $0x18] sm:$0xf]
  %v40 = vld [vmem:[%s1 + $0x1c] sm:$0xf]
  %v41 = vld [vmem:[%s2] sm:$0x1]
  %v43 = vlaneseq
  %v44 = vshrl.u32 %v43, 7
  %v45 = vsub.s32 0, %v44
  %v46 = vrot.slane %v41, %v45
  %v56 = vunpack.c.l.b16 %v33
  %v57 = vunpack.c.l.b16 %v34
  %v58 = vunpack.c.l.b16 %v35
  %v59 = vunpack.c.l.b16 %v36
  %v60 = vunpack.c.l.b16 %v37
  %v61 = vunpack.c.l.b16 %v38
  %v62 = vunpack.c.l.b16 %v39
  %v63 = vunpack.c.l.b16 %v40
  %v64 = vpack.c.b16 %v57, %v56
  %v65 = vpack.c.b16 %v59, %v58
  %v66 = vpack.c.b16 %v61, %v60
  %v67 = vpack.c.b16 %v63, %v62
  %vm68 = vcmask 261120
  %v70 = vsel %vm68, %v31, 0
  %v73 = vsel %vm68, %v32, 0
  %v76 = vsel %vm68, %v64, 0
  %v79 = vsel %vm68, %v65, 0
  %v82 = vsel %vm68, %v66, 0
  %v85 = vsel %vm68, %v67, 0
  %87 = vmatprep.subr.bf16.mxu0 0
  %88 = vmatpush1.bf16.xpose.msra.mxu0 %v76
  %89 = vmatprep.subr.bf16.mxu0 0
  %90 = vmatpush1.bf16.xpose.msra.mxu0 %v79
  %91 = vmatprep.subr.bf16.mxu0 0
  %92 = vmatpush1.bf16.xpose.msra.mxu0 %v82
  %93 = vmatprep.subr.bf16.mxu0 0
  %94 = vmatpush1.bf16.xpose.msra.mxu0 %v85
  %95 = vmatprep.subr.bf16.mxu0 0
  %96 = vmatpush1.bf16.xpose.msra.mxu0 0
  %97 = vmatprep.subr.bf16.mxu0 0
  %98 = vmatpush1.bf16.xpose.msra.mxu0 0
  %99 = vmatprep.subr.bf16.mxu0 0
  %100 = vmatpush1.bf16.xpose.msra.mxu0 0
  %101 = vmatprep.subr.bf16.mxu0 0
  %102 = vmatpush1.bf16.xpose.msra.mxu0 0
  %103 = vmatprep.subr.bf16.mxu0 0
  %104 = vmatpush1.bf16.xpose.msra.mxu0 0
  %105 = vmatprep.subr.bf16.mxu0 0
  %106 = vmatpush1.bf16.xpose.msra.mxu0 0
  %107 = vmatprep.subr.bf16.mxu0 0
  %108 = vmatpush1.bf16.xpose.msra.mxu0 0
  %109 = vmatprep.subr.bf16.mxu0 0
  %110 = vmatpush1.bf16.xpose.msra.mxu0 0
  %111 = vmatprep.subr.bf16.mxu0 0
  %112 = vmatpush1.bf16.xpose.msra.mxu0 0
  %113 = vmatprep.subr.bf16.mxu0 0
  %114 = vmatpush1.bf16.xpose.msra.mxu0 0
  %115 = vmatprep.subr.bf16.mxu0 0
  %116 = vmatpush1.bf16.xpose.msra.mxu0 0
  %117 = vmatprep.subr.bf16.mxu0 0
  %118 = vmatpush1.bf16.xpose.msra.mxu0 0
  %119 = vmatprep.mubr.bf16.mxu0 0
  %120 = vmatmul.mubr.bf16.gmra.mrb[0].mxu0 %v70
  %v121 = vpop.f32.mrb[0].mxu0
  %v122 = vadd.f32 %v46, %v121
  %v123 = vpop.f32.mrb[0].mxu0
  %v124 = vpop.f32.mrb[0].mxu0
  %v125 = vadd.f32 %v46, %v124
  %v126 = vpop.f32.mrb[0].mxu0
  %127 = vmatprep.mubr.bf16.mxu0 0
  %128 = vmatmul.mubr.bf16.gmra.mrb[0].mxu0 %v73
  %v129 = vpop.f32.mrb[0].mxu0
  %v130 = vadd.f32 %v46, %v129
  %v131 = vpop.f32.mrb[0].mxu0
  %v132 = vpop.f32.mrb[0].mxu0
  %v133 = vadd.f32 %v46, %v132
  %v134 = vpop.f32.mrb[0].mxu0
  %135 = vdwg.mxu0
  %v136 = vmax.f32 %v122, 0.0
  %v137 = vmax.f32 %v125, 0.0
  %v138 = vmax.f32 %v130, 0.0
  %v139 = vmax.f32 %v133, 0.0
  %v140 = vpack.c.bf16 %v137, %v136
  %v141 = vpack.c.bf16 %v139, %v138
  %v142 = vld [vmem:[%s3] sm:$0xf]
  %v143 = vld [vmem:[%s3 + $0x4] sm:$0xf]
  %v144 = vld [vmem:[%s3 + $0x8] sm:$0xf]
  %v145 = vld [vmem:[%s3 + $0xc] sm:$0xf]
  %v146 = vld [vmem:[%s4] sm:$0x1]
  %v148 = vlaneseq
  %v149 = vshrl.u32 %v148, 7
  %v150 = vsub.s32 0, %v149
  %v151 = vrot.slane %v146, %v150
  %v157 = vunpack.c.l.b16 %v142
  %v158 = vunpack.c.l.b16 %v143
  %v159 = vunpack.c.l.b16 %v144
  %v160 = vunpack.c.l.b16 %v145
  %v161 = vpack.c.b16 %v158, %v157
  %v162 = vpack.c.b16 %v160, %v159
  %vm163 = vcmask 523264
  %v165 = vsel %vm163, %v140, 0
  %v168 = vsel %vm163, %v141, 0
  %v171 = vsel %vm163, %v161, 0
  %v174 = vsel %vm163, %v162, 0
  %176 = vmatprep.subr.bf16.mxu0 0
  %177 = vmatpush1.bf16.xpose.msra.mxu0 %v171
  %178 = vmatprep.subr.bf16.mxu0 0
  %179 = vmatpush1.bf16.xpose.msra.mxu0 %v174
  %180 = vmatprep.subr.bf16.mxu0 0
  %181 = vmatpush1.bf16.xpose.msra.mxu0 0
  %182 = vmatprep.subr.bf16.mxu0 0
  %183 = vmatpush1.bf16.xpose.msra.mxu0 0
  %184 = vmatprep.subr.bf16.mxu0 0
  %185 = vmatpush1.bf16.xpose.msra.mxu0 0
  %186 = vmatprep.subr.bf16.mxu0 0
  %187 = vmatpush1.bf16.xpose.msra.mxu0 0
  %188 = vmatprep.subr.bf16.mxu0 0
  %189 = vmatpush1.bf16.xpose.msra.mxu0 0
  %190 = vmatprep.subr.bf16.mxu0 0
  %191 = vmatpush1.bf16.xpose.msra.mxu0 0
  %192 = vmatprep.subr.bf16.mxu0 0
  %193 = vmatpush1.bf16.xpose.msra.mxu0 0
  %194 = vmatprep.subr.bf16.mxu0 0
  %195 = vmatpush1.bf16.xpose.msra.mxu0 0
  %196 = vmatprep.subr.bf16.mxu0 0
  %197 = vmatpush1.bf16.xpose.msra.mxu0 0
  %198 = vmatprep.subr.bf16.mxu0 0
  %199 = vmatpush1.bf16.xpose.msra.mxu0 0
  %200 = vmatprep.subr.bf16.mxu0 0
  %201 = vmatpush1.bf16.xpose.msra.mxu0 0
  %202 = vmatprep.subr.bf16.mxu0 0
  %203 = vmatpush1.bf16.xpose.msra.mxu0 0
  %204 = vmatprep.subr.bf16.mxu0 0
  %205 = vmatpush1.bf16.xpose.msra.mxu0 0
  %206 = vmatprep.subr.bf16.mxu0 0
  %207 = vmatpush1.bf16.xpose.msra.mxu0 0
  %208 = vmatprep.mubr.bf16.mxu0 0
  %209 = vmatmul.mubr.bf16.gmra.mrb[0].mxu0 %v165
  %v210 = vpop.f32.mrb[0].mxu0
  %v211 = vadd.f32 %v151, %v210
  %v212 = vpop.f32.mrb[0].mxu0
  %v213 = vpop.f32.mrb[0].mxu0
  %v214 = vadd.f32 %v151, %v213
  %v215 = vpop.f32.mrb[0].mxu0
  %216 = vmatprep.mubr.bf16.mxu0 0
  %217 = vmatmul.mubr.bf16.gmra.mrb[0].mxu0 %v168
  %v218 = vpop.f32.mrb[0].mxu0
  %v219 = vadd.f32 %v151, %v218
  %v220 = vpop.f32.mrb[0].mxu0
  %v221 = vpop.f32.mrb[0].mxu0
  %v222 = vadd.f32 %v151, %v221
  %v223 = vpop.f32.mrb[0].mxu0
  %224 = vdwg.mxu0
  %v225 = vadd.f32 %v27, %v211
  %v226 = vadd.f32 %v28, %v214
  %v227 = vadd.f32 %v29, %v219
  %v228 = vadd.f32 %v30, %v222
  %v229 = vld [vmem:[%s5] sm:$0x1]
  %v230 = vld [vmem:[%s6] sm:$0x1]
  %v231 = vsel %vm68, %v225, 0.0
  %232 = vadd.xlane.f32.xlu0 %v231
  %v233 = vpop.xlane.xlu0 %232
  %v234 = vsel %vm68, %v226, 0.0
  %235 = vadd.xlane.f32.xlu0 %v234
  %v236 = vpop.xlane.xlu0 %235
  %v237 = vsel %vm68, %v227, 0.0
  %238 = vadd.xlane.f32.xlu0 %v237
  %v239 = vpop.xlane.xlu0 %238
  %v240 = vsel %vm68, %v228, 0.0
  %241 = vadd.xlane.f32.xlu0 %v240
  %v242 = vpop.xlane.xlu0 %241
  %v243 = vrcp.pop 32.0
  %v244 = vmul.f32 %v233, %v243
  %v245 = vmul.f32 %v236, %v243
  %v246 = vmul.f32 %v239, %v243
  %v247 = vmul.f32 %v242, %v243
  %v248 = vsub.f32 %v225, %v244
  %v249 = vsub.f32 %v226, %v245
  %v250 = vsub.f32 %v227, %v246
  %v251 = vsub.f32 %v228, %v247
  %v252 = vmul.f32 %v248, %v248
  %v253 = vmul.f32 %v249, %v249
  %v254 = vmul.f32 %v250, %v250
  %v255 = vmul.f32 %v251, %v251
  %v256 = vsel %vm68, %v252, 0.0
  %257 = vadd.xlane.f32.xlu0 %v256
  %v258 = vpop.xlane.xlu0 %257
  %v259 = vsel %vm68, %v253, 0.0
  %260 = vadd.xlane.f32.xlu0 %v259
  %v261 = vpop.xlane.xlu0 %260
  %v262 = vsel %vm68, %v254, 0.0
  %263 = vadd.xlane.f32.xlu0 %v262
  %v264 = vpop.xlane.xlu0 %263
  %v265 = vsel %vm68, %v255, 0.0
  %266 = vadd.xlane.f32.xlu0 %v265
  %v267 = vpop.xlane.xlu0 %266
  %v268 = vmul.f32 %v258, %v243
  %v269 = vmul.f32 %v261, %v243
  %v270 = vmul.f32 %v264, %v243
  %v271 = vmul.f32 %v267, %v243
  %v272 = vadd.f32 %v268, 1e-05
  %v273 = vadd.f32 %v269, 1e-05
  %v274 = vadd.f32 %v270, 1e-05
  %v275 = vadd.f32 %v271, 1e-05
  %v276 = vrsqrt.pop %v272
  %v277 = vrsqrt.pop %v273
  %v278 = vrsqrt.pop %v274
  %v279 = vrsqrt.pop %v275
  %v280 = vmul.f32 %v248, %v276
  %v281 = vmul.f32 %v249, %v277
  %v282 = vmul.f32 %v250, %v278
  %v283 = vmul.f32 %v251, %v279
  %v285 = vlaneseq
  %v286 = vshrl.u32 %v285, 7
  %v287 = vsub.s32 0, %v286
  %v288 = vrot.slane %v229, %v287
  %v290 = vmul.f32 %v280, %v288
  %v291 = vmul.f32 %v281, %v288
  %v292 = vmul.f32 %v282, %v288
  %v293 = vmul.f32 %v283, %v288
  %v295 = vlaneseq
  %v296 = vshrl.u32 %v295, 7
  %v297 = vsub.s32 0, %v296
  %v298 = vrot.slane %v230, %v297
  %v300 = vadd.f32 %v290, %v298
  %v301 = vadd.f32 %v291, %v298
  %v302 = vadd.f32 %v292, %v298
  %v303 = vadd.f32 %v293, %v298
  %304 = vst.msk [vmem:[%s7] sm:$0xff] %vm68, %v300
  %305 = vst.msk [vmem:[%s7 + $0x8] sm:$0xff] %vm68, %v301
  %306 = vst.msk [vmem:[%s7 + $0x10] sm:$0xff] %vm68, %v302
  %307 = vst.msk [vmem:[%s7 + $0x18] sm:$0xff] %vm68, %v303
  // Predicated region
  $region30: #{_lambda_.21} parent=0 // pred_check
    _
  $region31: #{_lambda_.21} parent=0 // pred_check_branch
    %309 = sbr.rel (0) target = $region33
  $region32: #{_lambda_.21} parent=0 // pred_region
    _
  $region33: #{_lambda_.21} parent=0 // pred_fallthru
    _
  // Predicated region
  $region34: #{_lambda_.21} parent=0 // pred_check
    _
  $region35: #{_lambda_.21} parent=0 // pred_check_branch
    %311 = sbr.rel (0) target = $region37
  $region36: #{_lambda_.21} parent=0 // pred_region
    _
  $region37: #{_lambda_.21} parent=0 // pred_fallthru
    _

// kernel: _lambda_.25
$region0: #{_lambda_.25}
  #allocation0 [shape = 'u32[]', space=smem, size = 0x4, offset = 0x4, fixed_abs, tag = 'smem constant byte address 0x4 - core index']
  #allocation1 [shape = 'u32[144,128]{1,0:T(1,128)}', space=vmem, size = 0x12000, scoped, tag = 'internal scratch']
  %s0 = inlined_call_operand.vmem [shape: bf16[4,4,8,8], index: 0, kind: input, shape index: {}]
  %s1 = inlined_call_operand.vmem [shape: bf16[4,4,8,8], index: 1, kind: input, shape index: {}]
  %s2 = inlined_call_operand.vmem [shape: bf16[4,4,8,8], index: 2, kind: input, shape index: {}]
  %s3 = inlined_call_operand.vmem [shape: f32[4,8,32], index: 3, kind: input, shape index: {}]
  %s4 = inlined_call_operand.vmem [shape: bf16[4,8,32], index: 4, kind: input, shape index: {}]
  %s5 = inlined_call_operand.vmem [shape: f32[1,32], index: 5, kind: input, shape index: {}, may-alias: {5,7}]
  %s6 = inlined_call_operand.vmem [shape: f32[1,32], index: 6, kind: input, shape index: {}]
  %s7 = inlined_call_operand.vmem [shape: f32[1,32], index: 7, kind: input, shape index: {}, may-alias: {5,7}]
  %s8 = inlined_call_operand.vmem [shape: f32[4,8,32], index: 8, kind: output, shape index: {}]
  %s9 = sld [smem:[#allocation0]]
  $region65: #{_lambda_.25} parent=0
    _
  %s11 = ssub.s32 1, %s9
  %s12 = scalar_select 0, %s11, %s9
  loop: start=0, step=1, limit=6
  $region2: #{_lambda_.25} parent=0 // loop_pre_header
    _
  $region3: #{_lambda_.25} parent=0 // loop_header
    %s14 = sphi 0, %s18
    %p15 = scmp.ge.s32.totalorder %s14, 6
    %s21 = sphi 0, %s33
    %s22 = sphi 0, %s29
    %s23 = sphi 0, %s21
    %s24 = sphi 0, %s22
    %s25 = sphi 0, %s23
    %s26 = sphi 0, %s24
    %s38 = sphi 0, %s40
    %s41 = sphi 0, %s38
    %s42 = sphi 0, %s41
    %s58 = sphi 0, %s42
    %s64 = sphi 0, %s66
    %s67 = sphi 0, %s64
    %s68 = sphi 0, %s67
    %s84 = sphi 0, %s68
    %s90 = sphi 0, %s92
    %s93 = sphi 0, %s90
    %s94 = sphi 0, %s93
    %s110 = sphi 0, %s94
    %s118 = sphi 0, %s120
    %s121 = sphi 0, %s118
    %s122 = sphi 0, %s121
    %s138 = sphi 0, %s122
    %s142 = sphi 0, %s142
    %s144 = sphi 0, %s142
    %s145 = sphi 0, %s144
    %s159 = sphi 0, %s145
    %s163 = sphi 0, %s163
    %s165 = sphi 0, %s163
    %s166 = sphi 0, %s165
    %s180 = sphi 0, %s166
    %s184 = sphi 0, %s184
    %s186 = sphi 0, %s184
    %s187 = sphi 0, %s186
    %s201 = sphi 0, %s187
    %s205 = sphi 0, %s205
    %s207 = sphi 0, %s205
    %s208 = sphi 0, %s207
    %s222 = sphi 0, %s208
    %s230 = sphi 0, %s232
    %s233 = sphi 0, %s230
    %s234 = sphi 0, %s233
    %s250 = sphi 0, %s234
  $region4: #{_lambda_.25} parent=0 // loop_header_branch
    %17 = sbr.rel (%p15) target = $region8
  $region5: #{_lambda_.25} parent=0 // loop_body
    %s19 = ssub.s32 %s14, 1
    %s20 = ssub.s32 %s14, 2
    %s27 = sadd.s32 1, %s22
    %p28 = scmp.ge.s32.totalorder %s27, 1
    %s29 = scalar_select %p28, 0, %s27
    %s30 = sadd.s32 1, %s21
    %s31 = scalar_select %p28, %s30, %s21
    %p32 = scmp.ge.s32.totalorder %s31, 4
    %s33 = scalar_select %p32, 0, %s31
    %s34 = ssub.s32 %s21, %s33
    %s35 = ssub.s32 %s22, %s29
    %s36 = sor.u32 %s34, %s35
    %p37 = scmp.eq.s32.totalorder %s36, 0
    %s39 = sadd.s32 %s38, 1
    %s40 = scalar_select %p37, %s38, %s39
    %p43 = pneg %p37
    %p44 = scmp.eq.s32.totalorder %s14, 3
    %p45 = por %p43, %p44
    %p46 = scmp.ne.s32.totalorder %s38, %s41
    %p47 = scmp.eq.s32.totalorder %s14, 0
    %p48 = por %p46, %p47
    %p49 = scmp.ne.s32.totalorder %s38, %s41
    %p50 = scmp.eq.s32.totalorder %s19, 3
    %p51 = por %p49, %p50
    %p52 = scmp.ne.s32.totalorder %s41, %s42
    %p53 = scmp.eq.s32.totalorder %s19, 0
    %p54 = por %p52, %p53
    %p55 = scmp.ne.s32.totalorder %s41, %s42
    %p56 = scmp.eq.s32.totalorder %s20, 3
    %p57 = por %p55, %p56
    %p59 = scmp.ne.s32.totalorder %s42, %s58
    %p60 = scmp.eq.s32.totalorder %s20, 0
    %p61 = por %p59, %p60
    %s62 = ssub.s32 %s21, %s33
    %p63 = scmp.eq.s32.totalorder %s62, 0
    %s65 = sadd.s32 %s64, 1
    %s66 = scalar_select %p63, %s64, %s65
    %p69 = pneg %p63
    %p70 = scmp.eq.s32.totalorder %s14, 3
    %p71 = por %p69, %p70
    %p72 = scmp.ne.s32.totalorder %s64, %s67
    %p73 = scmp.eq.s32.totalorder %s14, 0
    %p74 = por %p72, %p73
    %p75 = scmp.ne.s32.totalorder %s64, %s67
    %p76 = scmp.eq.s32.totalorder %s19, 3
    %p77 = por %p75, %p76
    %p78 = scmp.ne.s32.totalorder %s67, %s68
    %p79 = scmp.eq.s32.totalorder %s19, 0
    %p80 = por %p78, %p79
    %p81 = scmp.ne.s32.totalorder %s67, %s68
    %p82 = scmp.eq.s32.totalorder %s20, 3
    %p83 = por %p81, %p82
    %p85 = scmp.ne.s32.totalorder %s68, %s84
    %p86 = scmp.eq.s32.totalorder %s20, 0
    %p87 = por %p85, %p86
    %s88 = ssub.s32 %s21, %s33
    %p89 = scmp.eq.s32.totalorder %s88, 0
    %s91 = sadd.s32 %s90, 1
    %s92 = scalar_select %p89, %s90, %s91
    %p95 = pneg %p89
    %p96 = scmp.eq.s32.totalorder %s14, 3
    %p97 = por %p95, %p96
    %p98 = scmp.ne.s32.totalorder %s90, %s93
    %p99 = scmp.eq.s32.totalorder %s14, 0
    %p100 = por %p98, %p99
    %p101 = scmp.ne.s32.totalorder %s90, %s93
    %p102 = scmp.eq.s32.totalorder %s19, 3
    %p103 = por %p101, %p102
    %p104 = scmp.ne.s32.totalorder %s93, %s94
    %p105 = scmp.eq.s32.totalorder %s19, 0
    %p106 = por %p104, %p105
    %p107 = scmp.ne.s32.totalorder %s93, %s94
    %p108 = scmp.eq.s32.totalorder %s20, 3
    %p109 = por %p107, %p108
    %p111 = scmp.ne.s32.totalorder %s94, %s110
    %p112 = scmp.eq.s32.totalorder %s20, 0
    %p113 = por %p111, %p112
    %s114 = ssub.s32 %s21, %s33
    %s115 = ssub.s32 %s22, %s29
    %s116 = sor.u32 %s114, %s115
    %p117 = scmp.eq.s32.totalorder %s116, 0
    %s119 = sadd.s32 %s118, 1
    %s120 = scalar_select %p117, %s118, %s119
    %p123 = pneg %p117
    %p124 = scmp.eq.s32.totalorder %s14, 3
    %p125 = por %p123, %p124
    %p126 = scmp.ne.s32.totalorder %s118, %s121
    %p127 = scmp.eq.s32.totalorder %s14, 0
    %p128 = por %p126, %p127
    %p129 = scmp.ne.s32.totalorder %s118, %s121
    %p130 = scmp.eq.s32.totalorder %s19, 3
    %p131 = por %p129, %p130
    %p132 = scmp.ne.s32.totalorder %s121, %s122
    %p133 = scmp.eq.s32.totalorder %s19, 0
    %p134 = por %p132, %p133
    %p135 = scmp.ne.s32.totalorder %s121, %s122
    %p136 = scmp.eq.s32.totalorder %s20, 3
    %p137 = por %p135, %p136
    %p139 = scmp.ne.s32.totalorder %s122, %s138
    %p140 = scmp.eq.s32.totalorder %s20, 0
    %p141 = por %p139, %p140
    %s143 = sadd.s32 %s142, 1
    %p146 = scmp.eq.s32.totalorder %s14, 3
    %p147 = scmp.ne.s32.totalorder %s142, %s144
    %p148 = scmp.eq.s32.totalorder %s14, 0
    %p149 = por %p147, %p148
    %p150 = scmp.ne.s32.totalorder %s142, %s144
    %p151 = scmp.eq.s32.totalorder %s19, 3
    %p152 = por %p150, %p151
    %p153 = scmp.ne.s32.totalorder %s144, %s145
    %p154 = scmp.eq.s32.totalorder %s19, 0
    %p155 = por %p153, %p154
    %p156 = scmp.ne.s32.totalorder %s144, %s145
    %p157 = scmp.eq.s32.totalorder %s20, 3
    %p158 = por %p156, %p157
    %p160 = scmp.ne.s32.totalorder %s145, %s159
    %p161 = scmp.eq.s32.totalorder %s20, 0
    %p162 = por %p160, %p161
    %s164 = sadd.s32 %s163, 1
    %p167 = scmp.eq.s32.totalorder %s14, 3
    %p168 = scmp.ne.s32.totalorder %s163, %s165
    %p169 = scmp.eq.s32.totalorder %s14, 0
    %p170 = por %p168, %p169
    %p171 = scmp.ne.s32.totalorder %s163, %s165
    %p172 = scmp.eq.s32.totalorder %s19, 3
    %p173 = por %p171, %p172
    %p174 = scmp.ne.s32.totalorder %s165, %s166
    %p175 = scmp.eq.s32.totalorder %s19, 0
    %p176 = por %p174, %p175
    %p177 = scmp.ne.s32.totalorder %s165, %s166
    %p178 = scmp.eq.s32.totalorder %s20, 3
    %p179 = por %p177, %p178
    %p181 = scmp.ne.s32.totalorder %s166, %s180
    %p182 = scmp.eq.s32.totalorder %s20, 0
    %p183 = por %p181, %p182
    %s185 = sadd.s32 %s184, 1
    %p188 = scmp.eq.s32.totalorder %s14, 3
    %p189 = scmp.ne.s32.totalorder %s184, %s186
    %p190 = scmp.eq.s32.totalorder %s14, 0
    %p191 = por %p189, %p190
    %p192 = scmp.ne.s32.totalorder %s184, %s186
    %p193 = scmp.eq.s32.totalorder %s19, 3
    %p194 = por %p192, %p193
    %p195 = scmp.ne.s32.totalorder %s186, %s187
    %p196 = scmp.eq.s32.totalorder %s19, 0
    %p197 = por %p195, %p196
    %p198 = scmp.ne.s32.totalorder %s186, %s187
    %p199 = scmp.eq.s32.totalorder %s20, 3
    %p200 = por %p198, %p199
    %p202 = scmp.ne.s32.totalorder %s187, %s201
    %p203 = scmp.eq.s32.totalorder %s20, 0
    %p204 = por %p202, %p203
    %s206 = sadd.s32 %s205, 1
    %p209 = scmp.eq.s32.totalorder %s14, 3
    %p210 = scmp.ne.s32.totalorder %s205, %s207
    %p211 = scmp.eq.s32.totalorder %s14, 0
    %p212 = por %p210, %p211
    %p213 = scmp.ne.s32.totalorder %s205, %s207
    %p214 = scmp.eq.s32.totalorder %s19, 3
    %p215 = por %p213, %p214
    %p216 = scmp.ne.s32.totalorder %s207, %s208
    %p217 = scmp.eq.s32.totalorder %s19, 0
    %p218 = por %p216, %p217
    %p219 = scmp.ne.s32.totalorder %s207, %s208
    %p220 = scmp.eq.s32.totalorder %s20, 3
    %p221 = por %p219, %p220
    %p223 = scmp.ne.s32.totalorder %s208, %s222
    %p224 = scmp.eq.s32.totalorder %s20, 0
    %p225 = por %p223, %p224
    %s226 = ssub.s32 %s21, %s33
    %s227 = ssub.s32 %s22, %s29
    %s228 = sor.u32 %s226, %s227
    %p229 = scmp.eq.s32.totalorder %s228, 0
    %s231 = sadd.s32 %s230, 1
    %s232 = scalar_select %p229, %s230, %s231
    %p235 = pneg %p229
    %p236 = scmp.eq.s32.totalorder %s14, 3
    %p237 = por %p235, %p236
    %p238 = scmp.ne.s32.totalorder %s230, %s233
    %p239 = scmp.eq.s32.totalorder %s14, 0
    %p240 = por %p238, %p239
    %p241 = scmp.ne.s32.totalorder %s230, %s233
    %p242 = scmp.eq.s32.totalorder %s19, 3
    %p243 = por %p241, %p242
    %p244 = scmp.ne.s32.totalorder %s233, %s234
    %p245 = scmp.eq.s32.totalorder %s19, 0
    %p246 = por %p244, %p245
    %p247 = scmp.ne.s32.totalorder %s233, %s234
    %p248 = scmp.eq.s32.totalorder %s20, 3
    %p249 = por %p247, %p248
    %p251 = scmp.ne.s32.totalorder %s234, %s250
    %p252 = scmp.eq.s32.totalorder %s20, 0
    %p253 = por %p251, %p252
    %p254 = scmp.le.s32.totalorder 1, %s14
    %p255 = scmp.lt.s32.totalorder %s14, 5
    %p256 = pnand %p254, %p255
    %p257 = pneg %p256
    // Predicated region
    $region9: #{_lambda_.25} parent=5 // pred_check
      _
    $region10: #{_lambda_.25} parent=5 // pred_check_branch
      %259 = sbr.rel (%p256) target = $region12
    $region11: #{_lambda_.25} parent=5 // pred_region
      %s260 = ssub.s32 %s14, 1
      // Predicated region
      $region13: #{_lambda_.25} parent=11 // pred_check
        %p261 = pneg %p155
      $region14: #{_lambda_.25} parent=11 // pred_check_branch
        %263 = sbr.rel (%p261) target = $region16
      $region15: #{_lambda_.25} parent=11 // pred_region
        _
      $region16: #{_lambda_.25} parent=11 // pred_fallthru
        _
      // Predicated region
      $region17: #{_lambda_.25} parent=11 // pred_check
        %p264 = pneg %p176
      $region18: #{_lambda_.25} parent=11 // pred_check_branch
        %266 = sbr.rel (%p264) target = $region20
      $region19: #{_lambda_.25} parent=11 // pred_region
        _
      $region20: #{_lambda_.25} parent=11 // pred_fallthru
        _
      // Predicated region
      $region21: #{_lambda_.25} parent=11 // pred_check
        %p267 = pneg %p197
      $region22: #{_lambda_.25} parent=11 // pred_check_branch
        %269 = sbr.rel (%p267) target = $region24
      $region23: #{_lambda_.25} parent=11 // pred_region
        _
      $region24: #{_lambda_.25} parent=11 // pred_fallthru
        _
      // Predicated region
      $region25: #{_lambda_.25} parent=11 // pred_check
        %p270 = pneg %p218
      $region26: #{_lambda_.25} parent=11 // pred_check_branch
        %272 = sbr.rel (%p270) target = $region28
      $region27: #{_lambda_.25} parent=11 // pred_region
        _
      $region28: #{_lambda_.25} parent=11 // pred_fallthru
        _
    $region12: #{_lambda_.25} parent=5 // pred_fallthru
      _
    %p273 = scmp.lt.s32.totalorder %s14, 4
    // Predicated region
    $region29: #{_lambda_.25} parent=5 // pred_check
      %p274 = pneg %p273
    $region30: #{_lambda_.25} parent=5 // pred_check_branch
      %276 = sbr.rel (%p274) target = $region32
    $region31: #{_lambda_.25} parent=5 // pred_region
      // Predicated region
      $region33: #{_lambda_.25} parent=31 // pred_check
        %p277 = pneg %p48
      $region34: #{_lambda_.25} parent=31 // pred_check_branch
        %279 = sbr.rel (%p277) target = $region36
      $region35: #{_lambda_.25} parent=31 // pred_region
        %p280 = scmp.lt.s32.totalorder %s21, 3
        %s281 = scalar_select %p280, %s21, 3
        %p282 = scmp.lt.s32.totalorder %s22, 0
        %s283 = scalar_select %p282, %s22, 0
        %s284 = smul.addr %s281, 4
        %s285 = sadd.s32 %s283, %s284
        %s286 = smul.addr %s285, 4
        %s287 = scalar_lea.vmem %s0, %s286
      $region36: #{_lambda_.25} parent=31 // pred_fallthru
        _
      // Predicated region
      $region37: #{_lambda_.25} parent=31 // pred_check
        %p288 = pneg %p74
      $region38: #{_lambda_.25} parent=31 // pred_check_branch
        %290 = sbr.rel (%p288) target = $region40
      $region39: #{_lambda_.25} parent=31 // pred_region
        %p291 = scmp.lt.s32.totalorder %s21, 3
        %s292 = scalar_select %p291, %s21, 3
        %s293 = smul.addr %s292, 4
        %s294 = smul.addr %s293, 4
        %s295 = scalar_lea.vmem %s1, %s294
      $region40: #{_lambda_.25} parent=31 // pred_fallthru
        _
      // Predicated region
      $region41: #{_lambda_.25} parent=31 // pred_check
        %p296 = pneg %p100
      $region42: #{_lambda_.25} parent=31 // pred_check_branch
        %298 = sbr.rel (%p296) target = $region44
      $region43: #{_lambda_.25} parent=31 // pred_region
        %p299 = scmp.lt.s32.totalorder %s21, 3
        %s300 = scalar_select %p299, %s21, 3
        %s301 = smul.addr %s300, 4
        %s302 = smul.addr %s301, 4
        %s303 = scalar_lea.vmem %s2, %s302
      $region44: #{_lambda_.25} parent=31 // pred_fallthru
        _
      // Predicated region
      $region45: #{_lambda_.25} parent=31 // pred_check
        %p304 = pneg %p128
      $region46: #{_lambda_.25} parent=31 // pred_check_branch
        %306 = sbr.rel (%p304) target = $region48
      $region47: #{_lambda_.25} parent=31 // pred_region
        %p307 = scmp.lt.s32.totalorder %s21, 3
        %s308 = scalar_select %p307, %s21, 3
        %p309 = scmp.lt.s32.totalorder %s22, 0
        %s310 = scalar_select %p309, %s22, 0
        %s311 = sadd.s32 %s310, %s308
        %s312 = smul.addr %s311, 8
        %s313 = scalar_lea.vmem %s3, %s312
      $region48: #{_lambda_.25} parent=31 // pred_fallthru
        _
    $region32: #{_lambda_.25} parent=5 // pred_fallthru
      _
    %p314 = scmp.le.s32.totalorder 1, %s14
    %p315 = scmp.lt.s32.totalorder %s14, 5
    %p316 = pnand %p314, %p315
    %p317 = pneg %p316
    // Predicated region
    $region49: #{_lambda_.25} parent=5 // pred_check
      _
    $region50: #{_lambda_.25} parent=5 // pred_check_branch
      %319 = sbr.rel (%p316) target = $region52
    $region51: #{_lambda_.25} parent=5 // pred_region
      %s320 = ssub.s32 %s14, 1
      %p321 = scmp.lt.s32.totalorder %s23, 3
      %s322 = scalar_select %p321, %s23, 3
      %p323 = scmp.lt.s32.totalorder %s24, 0
      %s324 = scalar_select %p323, %s24, 0
      %s325 = smul.addr %s322, 4
      %s326 = sadd.s32 %s324, %s325
      %s327 = smul.addr %s326, 4
      %s328 = scalar_lea.vmem %s0, %s327
      %p329 = pneg %p54
      %p330 = pneg %p51
      %p331 = scmp.lt.s32.totalorder %s23, 3
      %s332 = scalar_select %p331, %s23, 3
      %s333 = smul.addr %s332, 4
      %s334 = smul.addr %s333, 4
      %s335 = scalar_lea.vmem %s1, %s334
      %p336 = pneg %p80
      %p337 = pneg %p77
      %p338 = scmp.lt.s32.totalorder %s23, 3
      %s339 = scalar_select %p338, %s23, 3
      %s340 = smul.addr %s339, 4
      %s341 = smul.addr %s340, 4
      %s342 = scalar_lea.vmem %s2, %s341
      %p343 = pneg %p106
      %p344 = pneg %p103
      %p345 = scmp.lt.s32.totalorder %s23, 3
      %s346 = scalar_select %p345, %s23, 3
      %p347 = scmp.lt.s32.totalorder %s24, 0
      %s348 = scalar_select %p347, %s24, 0
      %s349 = sadd.s32 %s348, %s346
      %s350 = smul.addr %s349, 8
      %s351 = scalar_lea.vmem %s3, %s350
      %p352 = pneg %p134
      %p353 = pneg %p131
      %p354 = pneg %p155
      %p355 = pneg %p152
      %p356 = pneg %p176
      %p357 = pneg %p173
      %p358 = pneg %p197
      %p359 = pneg %p194
      %p360 = pneg %p218
      %p361 = pneg %p215
      %p362 = pneg %p246
      %p363 = pneg %p243
      %p364 = scmp.lt.s32.totalorder %s23, 3
      %s365 = scalar_select %p364, %s23, 3
      %p366 = scmp.lt.s32.totalorder %s24, 0
      %s367 = scalar_select %p366, %s24, 0
      %s368 = sadd.s32 %s367, %s365
      %s369 = smul.addr %s368, 8
      %s370 = scalar_lea.vmem %s8, %s369
      %p371 = scmp.lt.s32.totalorder %s23, 3
      %s372 = scalar_select %p371, %s23, 3
      %p373 = scmp.lt.s32.totalorder %s24, 0
      %s374 = scalar_select %p373, %s24, 0
      %s375 = smul.addr %s372, 4
      %s376 = sadd.s32 %s374, %s375
      %s377 = smul.addr %s376, 4
      %s378 = scalar_lea.vmem %s0, %s377
      %p379 = scmp.lt.s32.totalorder %s23, 3
      %s380 = scalar_select %p379, %s23, 3
      %s381 = smul.addr %s380, 4
      %s382 = smul.addr %s381, 4
      %s383 = scalar_lea.vmem %s1, %s382
      %p384 = scmp.lt.s32.totalorder %s23, 3
      %s385 = scalar_select %p384, %s23, 3
      %s386 = smul.addr %s385, 4
      %s387 = smul.addr %s386, 4
      %s388 = scalar_lea.vmem %s2, %s387
      %p389 = scmp.lt.s32.totalorder %s23, 3
      %s390 = scalar_select %p389, %s23, 3
      %p391 = scmp.lt.s32.totalorder %s24, 0
      %s392 = scalar_select %p391, %s24, 0
      %s393 = sadd.s32 %s392, %s390
      %s394 = smul.addr %s393, 8
      %s395 = scalar_lea.vmem %s3, %s394
      %p396 = scmp.lt.s32.totalorder %s23, 3
      %s397 = scalar_select %p396, %s23, 3
      %p398 = scmp.lt.s32.totalorder %s24, 0
      %s399 = scalar_select %p398, %s24, 0
      %s400 = sadd.s32 %s399, %s397
      %s401 = smul.addr %s400, 8
      %s402 = scalar_lea.vmem %s8, %s401
      %v404 = vld [vmem:[%s378] sm:$0xf]
      %v405 = vld [vmem:[%s378 + $0x4] sm:$0xf]
      %v406 = vld [vmem:[%s378 + $0x8] sm:$0xf]
      %v407 = vld [vmem:[%s378 + $0xc] sm:$0xf]
      %v408 = vld [vmem:[%s383] sm:$0xf]
      %v409 = vld [vmem:[%s383 + $0x4] sm:$0xf]
      %v410 = vld [vmem:[%s383 + $0x8] sm:$0xf]
      %v411 = vld [vmem:[%s383 + $0xc] sm:$0xf]
      %v412 = vld [vmem:[%s388] sm:$0xf]
      %v413 = vld [vmem:[%s388 + $0x4] sm:$0xf]
      %v414 = vld [vmem:[%s388 + $0x8] sm:$0xf]
      %v415 = vld [vmem:[%s388 + $0xc] sm:$0xf]
      %vm416 = vcmask 64512
      %v418 = vsel %vm416, %v404, 0
      %v421 = vsel %vm416, %v408, 0
      %423 = vmatprep.subr.bf16.mxu0 0
      %424 = vmatpush1.bf16.xpose.msra.mxu0 %v421
      %425 = vmatprep.subr.bf16.mxu0 0
      %426 = vmatpush1.bf16.xpose.msra.mxu0 0
      %427 = vmatprep.subr.bf16.mxu0 0
      %428 = vmatpush1.bf16.xpose.msra.mxu0 0
      %429 = vmatprep.subr.bf16.mxu0 0
      %430 = vmatpush1.bf16.xpose.msra.mxu0 0
      %431 = vmatprep.subr.bf16.mxu0 0
      %432 = vmatpush1.bf16.xpose.msra.mxu0 0
      %433 = vmatprep.subr.bf16.mxu0 0
      %434 = vmatpush1.bf16.xpose.msra.mxu0 0
      %435 = vmatprep.subr.bf16.mxu0 0
      %436 = vmatpush1.bf16.xpose.msra.mxu0 0
      %437 = vmatprep.subr.bf16.mxu0 0
      %438 = vmatpush1.bf16.xpose.msra.mxu0 0
      %439 = vmatprep.subr.bf16.mxu0 0
      %440 = vmatpush1.bf16.xpose.msra.mxu0 0
      %441 = vmatprep.subr.bf16.mxu0 0
      %442 = vmatpush1.bf16.xpose.msra.mxu0 0
      %443 = vmatprep.subr.bf16.mxu0 0
      %444 = vmatpush1.bf16.xpose.msra.mxu0 0
      %445 = vmatprep.subr.bf16.mxu0 0
      %446 = vmatpush1.bf16.xpose.msra.mxu0 0
      %447 = vmatprep.subr.bf16.mxu0 0
      %448 = vmatpush1.bf16.xpose.msra.mxu0 0
      %449 = vmatprep.subr.bf16.mxu0 0
      %450 = vmatpush1.bf16.xpose.msra.mxu0 0
      %451 = vmatprep.subr.bf16.mxu0 0
      %452 = vmatpush1.bf16.xpose.msra.mxu0 0
      %453 = vmatprep.subr.bf16.mxu0 0
      %454 = vmatpush1.bf16.xpose.msra.mxu0 0
      %455 = vmatprep.mubr.bf16.mxu0 0
      %456 = vmatmul.mubr.bf16.gmra.mrb[0].mxu0 %v418
      %v457 = vpop.f32.mrb[0].mxu0
      %v458 = vadd.f32 0.0, %v457
      %v459 = vpop.f32.mrb[0].mxu0
      %v460 = vpop.f32.mrb[0].mxu0
      %v461 = vpop.f32.mrb[0].mxu0
      %462 = vdwg.mxu0
      %v464 = vsel %vm416, %v405, 0
      %v467 = vsel %vm416, %v409, 0
      %469 = vmatprep.subr.bf16.mxu0 0
      %470 = vmatpush1.bf16.xpose.msra.mxu0 %v467
      %471 = vmatprep.subr.bf16.mxu0 0
      %472 = vmatpush1.bf16.xpose.msra.mxu0 0
      %473 = vmatprep.subr.bf16.mxu0 0
      %474 = vmatpush1.bf16.xpose.msra.mxu0 0
      %475 = vmatprep.subr.bf16.mxu0 0
      %476 = vmatpush1.bf16.xpose.msra.mxu0 0
      %477 = vmatprep.subr.bf16.mxu0 0
      %478 = vmatpush1.bf16.xpose.msra.mxu0 0
      %479 = vmatprep.subr.bf16.mxu0 0
      %480 = vmatpush1.bf16.xpose.msra.mxu0 0
      %481 = vmatprep.subr.bf16.mxu0 0
      %482 = vmatpush1.bf16.xpose.msra.mxu0 0
      %483 = vmatprep.subr.bf16.mxu0 0
      %484 = vmatpush1.bf16.xpose.msra.mxu0 0
      %485 = vmatprep.subr.bf16.mxu0 0
      %486 = vmatpush1.bf16.xpose.msra.mxu0 0
      %487 = vmatprep.subr.bf16.mxu0 0
      %488 = vmatpush1.bf16.xpose.msra.mxu0 0
      %489 = vmatprep.subr.bf16.mxu0 0
      %490 = vmatpush1.bf16.xpose.msra.mxu0 0
      %491 = vmatprep.subr.bf16.mxu0 0
      %492 = vmatpush1.bf16.xpose.msra.mxu0 0
      %493 = vmatprep.subr.bf16.mxu0 0
      %494 = vmatpush1.bf16.xpose.msra.mxu0 0
      %495 = vmatprep.subr.bf16.mxu0 0
      %496 = vmatpush1.bf16.xpose.msra.mxu0 0
      %497 = vmatprep.subr.bf16.mxu0 0
      %498 = vmatpush1.bf16.xpose.msra.mxu0 0
      %499 = vmatprep.subr.bf16.mxu0 0
      %500 = vmatpush1.bf16.xpose.msra.mxu0 0
      %501 = vmatprep.mubr.bf16.mxu0 0
      %502 = vmatmul.mubr.bf16.gmra.mrb[0].mxu0 %v464
      %v503 = vpop.f32.mrb[0].mxu0
      %v504 = vadd.f32 0.0, %v503
      %v505 = vpop.f32.mrb[0].mxu0
      %v506 = vpop.f32.mrb[0].mxu0
      %v507 = vpop.f32.mrb[0].mxu0
      %508 = vdwg.mxu0
      %v510 = vsel %vm416, %v406, 0
      %v513 = vsel %vm416, %v410, 0
      %515 = vmatprep.subr.bf16.mxu0 0
      %516 = vmatpush1.bf16.xpose.msra.mxu0 %v513
      %517 = vmatprep.subr.bf16.mxu0 0
      %518 = vmatpush1.bf16.xpose.msra.mxu0 0
      %519 = vmatprep.subr.bf16.mxu0 0
      %520 = vmatpush1.bf16.xpose.msra.mxu0 0
      %521 = vmatprep.subr.bf16.mxu0 0
      %522 = vmatpush1.bf16.xpose.msra.mxu0 0
      %523 = vmatprep.subr.bf16.mxu0 0
      %524 = vmatpush1.bf16.xpose.msra.mxu0 0
      %525 = vmatprep.subr.bf16.mxu0 0
      %526 = vmatpush1.bf16.xpose.msra.mxu0 0
      %527 = vmatprep.subr.bf16.mxu0 0
      %528 = vmatpush1.bf16.xpose.msra.mxu0 0
      %529 = vmatprep.subr.bf16.mxu0 0
      %530 = vmatpush1.bf16.xpose.msra.mxu0 0
      %531 = vmatprep.subr.bf16.mxu0 0
      %532 = vmatpush1.bf16.xpose.msra.mxu0 0
      %533 = vmatprep.subr.bf16.mxu0 0
      %534 = vmatpush1.bf16.xpose.msra.mxu0 0
      %535 = vmatprep.subr.bf16.mxu0 0
      %536 = vmatpush1.bf16.xpose.msra.mxu0 0
      %537 = vmatprep.subr.bf16.mxu0 0
      %538 = vmatpush1.bf16.xpose.msra.mxu0 0
      %539 = vmatprep.subr.bf16.mxu0 0
      %540 = vmatpush1.bf16.xpose.msra.mxu0 0
      %541 = vmatprep.subr.bf16.mxu0 0
      %542 = vmatpush1.bf16.xpose.msra.mxu0 0
      %543 = vmatprep.subr.bf16.mxu0 0
      %544 = vmatpush1.bf16.xpose.msra.mxu0 0
      %545 = vmatprep.subr.bf16.mxu0 0
      %546 = vmatpush1.bf16.xpose.msra.mxu0 0
      %547 = vmatprep.mubr.bf16.mxu0 0
      %548 = vmatmul.mubr.bf16.gmra.mrb[0].mxu0 %v510
      %v549 = vpop.f32.mrb[0].mxu0
      %v550 = vadd.f32 0.0, %v549
      %v551 = vpop.f32.mrb[0].mxu0
      %v552 = vpop.f32.mrb[0].mxu0
      %v553 = vpop.f32.mrb[0].mxu0
      %554 = vdwg.mxu0
      %v556 = vsel %vm416, %v407, 0
      %v559 = vsel %vm416, %v411, 0
      %561 = vmatprep.subr.bf16.mxu0 0
      %562 = vmatpush1.bf16.xpose.msra.mxu0 %v559
      %563 = vmatprep.subr.bf16.mxu0 0
      %564 = vmatpush1.bf16.xpose.msra.mxu0 0
      %565 = vmatprep.subr.bf16.mxu0 0
      %566 = vmatpush1.bf16.xpose.msra.mxu0 0
      %567 = vmatprep.subr.bf16.mxu0 0
      %568 = vmatpush1.bf16.xpose.msra.mxu0 0
      %569 = vmatprep.subr.bf16.mxu0 0
      %570 = vmatpush1.bf16.xpose.msra.mxu0 0
      %571 = vmatprep.subr.bf16.mxu0 0
      %572 = vmatpush1.bf16.xpose.msra.mxu0 0
      %573 = vmatprep.subr.bf16.mxu0 0
      %574 = vmatpush1.bf16.xpose.msra.mxu0 0
      %575 = vmatprep.subr.bf16.mxu0 0
      %576 = vmatpush1.bf16.xpose.msra.mxu0 0
      %577 = vmatprep.subr.bf16.mxu0 0
      %578 = vmatpush1.bf16.xpose.msra.mxu0 0
      %579 = vmatprep.subr.bf16.mxu0 0
      %580 = vmatpush1.bf16.xpose.msra.mxu0 0
      %581 = vmatprep.subr.bf16.mxu0 0
      %582 = vmatpush1.bf16.xpose.msra.mxu0 0
      %583 = vmatprep.subr.bf16.mxu0 0
      %584 = vmatpush1.bf16.xpose.msra.mxu0 0
      %585 = vmatprep.subr.bf16.mxu0 0
      %586 = vmatpush1.bf16.xpose.msra.mxu0 0
      %587 = vmatprep.subr.bf16.mxu0 0
      %588 = vmatpush1.bf16.xpose.msra.mxu0 0
      %589 = vmatprep.subr.bf16.mxu0 0
      %590 = vmatpush1.bf16.xpose.msra.mxu0 0
      %591 = vmatprep.subr.bf16.mxu0 0
      %592 = vmatpush1.bf16.xpose.msra.mxu0 0
      %593 = vmatprep.mubr.bf16.mxu0 0
      %594 = vmatmul.mubr.bf16.gmra.mrb[0].mxu0 %v556
      %v595 = vpop.f32.mrb[0].mxu0
      %v596 = vadd.f32 0.0, %v595
      %v597 = vpop.f32.mrb[0].mxu0
      %v598 = vpop.f32.mrb[0].mxu0
      %v599 = vpop.f32.mrb[0].mxu0
      %600 = vdwg.mxu0
      %v601 = vmul.f32 %v458, 0.35355338
      %v602 = vmul.f32 %v504, 0.35355338
      %v603 = vmul.f32 %v550, 0.35355338
      %v604 = vmul.f32 %v596, 0.35355338
      %v605 = vsel %vm416, %v601, -inf
      %606 = vmax.xlane.f32.xlu0 %v605
      %v607 = vpop.xlane.xlu0 %606
      %v608 = vsel %vm416, %v602, -inf
      %609 = vmax.xlane.f32.xlu0 %v608
      %v610 = vpop.xlane.xlu0 %609
      %v611 = vsel %vm416, %v603, -inf
      %612 = vmax.xlane.f32.xlu0 %v611
      %v613 = vpop.xlane.xlu0 %612
      %v614 = vsel %vm416, %v604, -inf
      %615 = vmax.xlane.f32.xlu0 %v614
      %v616 = vpop.xlane.xlu0 %615
      %v617 = vsub.f32 %v601, %v607
      %v618 = vsub.f32 %v602, %v610
      %v619 = vsub.f32 %v603, %v613
      %v620 = vsub.f32 %v604, %v616
      %v621 = vmul.f32 %v617, 1.442695
      %v622 = vpow.pop %v621
      %v623 = vmul.f32 %v618, 1.442695
      %v624 = vpow.pop %v623
      %v625 = vmul.f32 %v619, 1.442695
      %v626 = vpow.pop %v625
      %v627 = vmul.f32 %v620, 1.442695
      %v628 = vpow.pop %v627
      %v629 = vsel %vm416, %v622, 0.0
      %630 = vadd.xlane.f32.xlu0 %v629
      %v631 = vpop.xlane.xlu0 %630
      %v632 = vsel %vm416, %v624, 0.0
      %633 = vadd.xlane.f32.xlu0 %v632
      %v634 = vpop.xlane.xlu0 %633
      %v635 = vsel %vm416, %v626, 0.0
      %636 = vadd.xlane.f32.xlu0 %v635
      %v637 = vpop.xlane.xlu0 %636
      %v638 = vsel %vm416, %v628, 0.0
      %639 = vadd.xlane.f32.xlu0 %v638
      %v640 = vpop.xlane.xlu0 %639
      %v641 = vrcp.pop %v631
      %v642 = vrcp.pop %v634
      %v643 = vrcp.pop %v637
      %v644 = vrcp.pop %v640
      %v645 = vmul.f32 %v622, %v641
      %v646 = vmul.f32 %v624, %v642
      %v647 = vmul.f32 %v626, %v643
      %v648 = vmul.f32 %v628, %v644
      %v649 = vpack.c.bf16 %v645, %v645
      %v650 = vpack.c.bf16 %v646, %v646
      %v651 = vpack.c.bf16 %v647, %v647
      %v652 = vpack.c.bf16 %v648, %v648
      %v654 = vsel %vm416, %v649, 0
      %vm656 = vcmask 1043456
      %v658 = vsel %vm656, %v412, 0
      %660 = vmatprep.subr.bf16.mxu0 0
      %661 = vmatpush1.bf16.msra.mxu0 %v658
      %662 = vmatprep.subr.bf16.mxu0 0
      %663 = vmatpush1.bf16.msra.mxu0 0
      %664 = vmatprep.subr.bf16.mxu0 0
      %665 = vmatpush1.bf16.msra.mxu0 0
      %666 = vmatprep.subr.bf16.mxu0 0
      %667 = vmatpush1.bf16.msra.mxu0 0
      %668 = vmatprep.subr.bf16.mxu0 0
      %669 = vmatpush1.bf16.msra.mxu0 0
      %670 = vmatprep.subr.bf16.mxu0 0
      %671 = vmatpush1.bf16.msra.mxu0 0
      %672 = vmatprep.subr.bf16.mxu0 0
      %673 = vmatpush1.bf16.msra.mxu0 0
      %674 = vmatprep.subr.bf16.mxu0 0
      %675 = vmatpush1.bf16.msra.mxu0 0
      %676 = vmatprep.subr.bf16.mxu0 0
      %677 = vmatpush1.bf16.msra.mxu0 0
      %678 = vmatprep.subr.bf16.mxu0 0
      %679 = vmatpush1.bf16.msra.mxu0 0
      %680 = vmatprep.subr.bf16.mxu0 0
      %681 = vmatpush1.bf16.msra.mxu0 0
      %682 = vmatprep.subr.bf16.mxu0 0
      %683 = vmatpush1.bf16.msra.mxu0 0
      %684 = vmatprep.subr.bf16.mxu0 0
      %685 = vmatpush1.bf16.msra.mxu0 0
      %686 = vmatprep.subr.bf16.mxu0 0
      %687 = vmatpush1.bf16.msra.mxu0 0
      %688 = vmatprep.subr.bf16.mxu0 0
      %689 = vmatpush1.bf16.msra.mxu0 0
      %690 = vmatprep.subr.bf16.mxu0 0
      %691 = vmatpush1.bf16.msra.mxu0 0
      %692 = vmatprep.mubr.bf16.mxu0 0
      %693 = vmatmul.mubr.bf16.gmra.mrb[0].mxu0 %v654
      %v694 = vpop.f32.mrb[0].mxu0
      %v695 = vadd.f32 0.0, %v694
      %v696 = vpop.f32.mrb[0].mxu0
      %v697 = vpop.f32.mrb[0].mxu0
      %v698 = vpop.f32.mrb[0].mxu0
      %699 = vdwg.mxu0
      %v701 = vsel %vm416, %v650, 0
      %v704 = vsel %vm656, %v413, 0
      %706 = vmatprep.subr.bf16.mxu0 0
      %707 = vmatpush1.bf16.msra.mxu0 %v704
      %708 = vmatprep.subr.bf16.mxu0 0
      %709 = vmatpush1.bf16.msra.mxu0 0
      %710 = vmatprep.subr.bf16.mxu0 0
      %711 = vmatpush1.bf16.msra.mxu0 0
      %712 = vmatprep.subr.bf16.mxu0 0
      %713 = vmatpush1.bf16.msra.mxu0 0
      %714 = vmatprep.subr.bf16.mxu0 0
      %715 = vmatpush1.bf16.msra.mxu0 0
      %716 = vmatprep.subr.bf16.mxu0 0
      %717 = vmatpush1.bf16.msra.mxu0 0
      %718 = vmatprep.subr.bf16.mxu0 0
      %719 = vmatpush1.bf16.msra.mxu0 0
      %720 = vmatprep.subr.bf16.mxu0 0
      %721 = vmatpush1.bf16.msra.mxu0 0
      %722 = vmatprep.subr.bf16.mxu0 0
      %723 = vmatpush1.bf16.msra.mxu0 0
      %724 = vmatprep.subr.bf16.mxu0 0
      %725 = vmatpush1.bf16.msra.mxu0 0
      %726 = vmatprep.subr.bf16.mxu0 0
      %727 = vmatpush1.bf16.msra.mxu0 0
      %728 = vmatprep.subr.bf16.mxu0 0
      %729 = vmatpush1.bf16.msra.mxu0 0
      %730 = vmatprep.subr.bf16.mxu0 0
      %731 = vmatpush1.bf16.msra.mxu0 0
      %732 = vmatprep.subr.bf16.mxu0 0
      %733 = vmatpush1.bf16.msra.mxu0 0
      %734 = vmatprep.subr.bf16.mxu0 0
      %735 = vmatpush1.bf16.msra.mxu0 0
      %736 = vmatprep.subr.bf16.mxu0 0
      %737 = vmatpush1.bf16.msra.mxu0 0
      %738 = vmatprep.mubr.bf16.mxu0 0
      %739 = vmatmul.mubr.bf16.gmra.mrb[0].mxu0 %v701
      %v740 = vpop.f32.mrb[0].mxu0
      %v741 = vadd.f32 0.0, %v740
      %v742 = vpop.f32.mrb[0].mxu0
      %v743 = vpop.f32.mrb[0].mxu0
      %v744 = vpop.f32.mrb[0].mxu0
      %745 = vdwg.mxu0
      %v747 = vsel %vm416, %v651, 0
      %v750 = vsel %vm656, %v414, 0
      %752 = vmatprep.subr.bf16.mxu0 0
      %753 = vmatpush1.bf16.msra.mxu0 %v750
      %754 = vmatprep.subr.bf16.mxu0 0
      %755 = vmatpush1.bf16.msra.mxu0 0
      %756 = vmatprep.subr.bf16.mxu0 0
      %757 = vmatpush1.bf16.msra.mxu0 0
      %758 = vmatprep.subr.bf16.mxu0 0
      %759 = vmatpush1.bf16.msra.mxu0 0
      %760 = vmatprep.subr.bf16.mxu0 0
      %761 = vmatpush1.bf16.msra.mxu0 0
      %762 = vmatprep.subr.bf16.mxu0 0
      %763 = vmatpush1.bf16.msra.mxu0 0
      %764 = vmatprep.subr.bf16.mxu0 0
      %765 = vmatpush1.bf16.msra.mxu0 0
      %766 = vmatprep.subr.bf16.mxu0 0
      %767 = vmatpush1.bf16.msra.mxu0 0
      %768 = vmatprep.subr.bf16.mxu0 0
      %769 = vmatpush1.bf16.msra.mxu0 0
      %770 = vmatprep.subr.bf16.mxu0 0
      %771 = vmatpush1.bf16.msra.mxu0 0
      %772 = vmatprep.subr.bf16.mxu0 0
      %773 = vmatpush1.bf16.msra.mxu0 0
      %774 = vmatprep.subr.bf16.mxu0 0
      %775 = vmatpush1.bf16.msra.mxu0 0
      %776 = vmatprep.subr.bf16.mxu0 0
      %777 = vmatpush1.bf16.msra.mxu0 0
      %778 = vmatprep.subr.bf16.mxu0 0
      %779 = vmatpush1.bf16.msra.mxu0 0
      %780 = vmatprep.subr.bf16.mxu0 0
      %781 = vmatpush1.bf16.msra.mxu0 0
      %782 = vmatprep.subr.bf16.mxu0 0
      %783 = vmatpush1.bf16.msra.mxu0 0
      %784 = vmatprep.mubr.bf16.mxu0 0
      %785 = vmatmul.mubr.bf16.gmra.mrb[0].mxu0 %v747
      %v786 = vpop.f32.mrb[0].mxu0
      %v787 = vadd.f32 0.0, %v786
      %v788 = vpop.f32.mrb[0].mxu0
      %v789 = vpop.f32.mrb[0].mxu0
      %v790 = vpop.f32.mrb[0].mxu0
      %791 = vdwg.mxu0
      %v793 = vsel %vm416, %v652, 0
      %v796 = vsel %vm656, %v415, 0
      %798 = vmatprep.subr.bf16.mxu0 0
      %799 = vmatpush1.bf16.msra.mxu0 %v796
      %800 = vmatprep.subr.bf16.mxu0 0
      %801 = vmatpush1.bf16.msra.mxu0 0
      %802 = vmatprep.subr.bf16.mxu0 0
      %803 = vmatpush1.bf16.msra.mxu0 0
      %804 = vmatprep.subr.bf16.mxu0 0
      %805 = vmatpush1.bf16.msra.mxu0 0
      %806 = vmatprep.subr.bf16.mxu0 0
      %807 = vmatpush1.bf16.msra.mxu0 0
      %808 = vmatprep.subr.bf16.mxu0 0
      %809 = vmatpush1.bf16.msra.mxu0 0
      %810 = vmatprep.subr.bf16.mxu0 0
      %811 = vmatpush1.bf16.msra.mxu0 0
      %812 = vmatprep.subr.bf16.mxu0 0
      %813 = vmatpush1.bf16.msra.mxu0 0
      %814 = vmatprep.subr.bf16.mxu0 0
      %815 = vmatpush1.bf16.msra.mxu0 0
      %816 = vmatprep.subr.bf16.mxu0 0
      %817 = vmatpush1.bf16.msra.mxu0 0
      %818 = vmatprep.subr.bf16.mxu0 0
      %819 = vmatpush1.bf16.msra.mxu0 0
      %820 = vmatprep.subr.bf16.mxu0 0
      %821 = vmatpush1.bf16.msra.mxu0 0
      %822 = vmatprep.subr.bf16.mxu0 0
      %823 = vmatpush1.bf16.msra.mxu0 0
      %824 = vmatprep.subr.bf16.mxu0 0
      %825 = vmatpush1.bf16.msra.mxu0 0
      %826 = vmatprep.subr.bf16.mxu0 0
      %827 = vmatpush1.bf16.msra.mxu0 0
      %828 = vmatprep.subr.bf16.mxu0 0
      %829 = vmatpush1.bf16.msra.mxu0 0
      %830 = vmatprep.mubr.bf16.mxu0 0
      %831 = vmatmul.mubr.bf16.gmra.mrb[0].mxu0 %v793
      %v832 = vpop.f32.mrb[0].mxu0
      %v833 = vadd.f32 0.0, %v832
      %v834 = vpop.f32.mrb[0].mxu0
      %v835 = vpop.f32.mrb[0].mxu0
      %v836 = vpop.f32.mrb[0].mxu0
      %837 = vdwg.mxu0
      %v838 = vpack.c.bf16 %v695, %v695
      %v839 = vpack.c.bf16 %v741, %v741
      %v840 = vpack.c.bf16 %v787, %v787
      %v841 = vpack.c.bf16 %v833, %v833
      %v842 = vld [vmem:[%s4] sm:$0xf]
      %v843 = vld [vmem:[%s4 + $0x4] sm:$0xf]
      %v844 = vld [vmem:[%s4 + $0x8] sm:$0xf]
      %v845 = vld [vmem:[%s4 + $0xc] sm:$0xf]
      %v847 = vsel %vm416, %v838, 0
      %v850 = vsel %vm656, %v842, 0
      %852 = vmatprep.subr.bf16.mxu0 0
      %853 = vmatpush1.bf16.msra.mxu0 %v850
      %854 = vmatprep.subr.bf16.mxu0 0
      %855 = vmatpush1.bf16.msra.mxu0 0
      %856 = vmatprep.subr.bf16.mxu0 0
      %857 = vmatpush1.bf16.msra.mxu0 0
      %858 = vmatprep.subr.bf16.mxu0 0
      %859 = vmatpush1.bf16.msra.mxu0 0
      %860 = vmatprep.subr.bf16.mxu0 0
      %861 = vmatpush1.bf16.msra.mxu0 0
      %862 = vmatprep.subr.bf16.mxu0 0
      %863 = vmatpush1.bf16.msra.mxu0 0
      %864 = vmatprep.subr.bf16.mxu0 0
      %865 = vmatpush1.bf16.msra.mxu0 0
      %866 = vmatprep.subr.bf16.mxu0 0
      %867 = vmatpush1.bf16.msra.mxu0 0
      %868 = vmatprep.subr.bf16.mxu0 0
      %869 = vmatpush1.bf16.msra.mxu0 0
      %870 = vmatprep.subr.bf16.mxu0 0
      %871 = vmatpush1.bf16.msra.mxu0 0
      %872 = vmatprep.subr.bf16.mxu0 0
      %873 = vmatpush1.bf16.msra.mxu0 0
      %874 = vmatprep.subr.bf16.mxu0 0
      %875 = vmatpush1.bf16.msra.mxu0 0
      %876 = vmatprep.subr.bf16.mxu0 0
      %877 = vmatpush1.bf16.msra.mxu0 0
      %878 = vmatprep.subr.bf16.mxu0 0
      %879 = vmatpush1.bf16.msra.mxu0 0
      %880 = vmatprep.subr.bf16.mxu0 0
      %881 = vmatpush1.bf16.msra.mxu0 0
      %882 = vmatprep.subr.bf16.mxu0 0
      %883 = vmatpush1.bf16.msra.mxu0 0
      %884 = vmatprep.mubr.bf16.mxu0 0
      %885 = vmatmul.mubr.bf16.gmra.mrb[0].mxu0 %v847
      %v886 = vpop.f32.mrb[0].mxu0
      %v887 = vadd.f32 0.0, %v886
      %v888 = vpop.f32.mrb[0].mxu0
      %v889 = vpop.f32.mrb[0].mxu0
      %v890 = vpop.f32.mrb[0].mxu0
      %891 = vdwg.mxu0
      %v893 = vsel %vm416, %v839, 0
      %v896 = vsel %vm656, %v843, 0
      %898 = vmatprep.subr.bf16.mxu0 0
      %899 = vmatpush1.bf16.msra.mxu0 %v896
      %900 = vmatprep.subr.bf16.mxu0 0
      %901 = vmatpush1.bf16.msra.mxu0 0
      %902 = vmatprep.subr.bf16.mxu0 0
      %903 = vmatpush1.bf16.msra.mxu0 0
      %904 = vmatprep.subr.bf16.mxu0 0
      %905 = vmatpush1.bf16.msra.mxu0 0
      %906 = vmatprep.subr.bf16.mxu0 0
      %907 = vmatpush1.bf16.msra.mxu0 0
      %908 = vmatprep.subr.bf16.mxu0 0
      %909 = vmatpush1.bf16.msra.mxu0 0
      %910 = vmatprep.subr.bf16.mxu0 0
      %911 = vmatpush1.bf16.msra.mxu0 0
      %912 = vmatprep.subr.bf16.mxu0 0
      %913 = vmatpush1.bf16.msra.mxu0 0
      %914 = vmatprep.subr.bf16.mxu0 0
      %915 = vmatpush1.bf16.msra.mxu0 0
      %916 = vmatprep.subr.bf16.mxu0 0
      %917 = vmatpush1.bf16.msra.mxu0 0
      %918 = vmatprep.subr.bf16.mxu0 0
      %919 = vmatpush1.bf16.msra.mxu0 0
      %920 = vmatprep.subr.bf16.mxu0 0
      %921 = vmatpush1.bf16.msra.mxu0 0
      %922 = vmatprep.subr.bf16.mxu0 0
      %923 = vmatpush1.bf16.msra.mxu0 0
      %924 = vmatprep.subr.bf16.mxu0 0
      %925 = vmatpush1.bf16.msra.mxu0 0
      %926 = vmatprep.subr.bf16.mxu0 0
      %927 = vmatpush1.bf16.msra.mxu0 0
      %928 = vmatprep.subr.bf16.mxu0 0
      %929 = vmatpush1.bf16.msra.mxu0 0
      %930 = vmatprep.mubr.bf16.mxu0 0
      %931 = vmatmul.mubr.bf16.gmra.mrb[0].mxu0 %v893
      %v932 = vpop.f32.mrb[0].mxu0
      %v933 = vadd.f32 0.0, %v932
      %v934 = vpop.f32.mrb[0].mxu0
      %v935 = vpop.f32.mrb[0].mxu0
      %v936 = vpop.f32.mrb[0].mxu0
      %937 = vdwg.mxu0
      %v939 = vsel %vm416, %v840, 0
      %v942 = vsel %vm656, %v844, 0
      %944 = vmatprep.subr.bf16.mxu0 0
      %945 = vmatpush1.bf16.msra.mxu0 %v942
      %946 = vmatprep.subr.bf16.mxu0 0
      %947 = vmatpush1.bf16.msra.mxu0 0
      %948 = vmatprep.subr.bf16.mxu0 0
      %949 = vmatpush1.bf16.msra.mxu0 0
      %950 = vmatprep.subr.bf16.mxu0 0
      %951 = vmatpush1.bf16.msra.mxu0 0
      %952 = vmatprep.subr.bf16.mxu0 0
      %953 = vmatpush1.bf16.msra.mxu0 0
      %954 = vmatprep.subr.bf16.mxu0 0
      %955 = vmatpush1.bf16.msra.mxu0 0
      %956 = vmatprep.subr.bf16.mxu0 0
      %957 = vmatpush1.bf16.msra.mxu0 0
      %958 = vmatprep.subr.bf16.mxu0 0
      %959 = vmatpush1.bf16.msra.mxu0 0
      %960 = vmatprep.subr.bf16.mxu0 0
      %961 = vmatpush1.bf16.msra.mxu0 0
      %962 = vmatprep.subr.bf16.mxu0 0
      %963 = vmatpush1.bf16.msra.mxu0 0
      %964 = vmatprep.subr.bf16.mxu0 0
      %965 = vmatpush1.bf16.msra.mxu0 0
      %966 = vmatprep.subr.bf16.mxu0 0
      %967 = vmatpush1.bf16.msra.mxu0 0
      %968 = vmatprep.subr.bf16.mxu0 0
      %969 = vmatpush1.bf16.msra.mxu0 0
      %970 = vmatprep.subr.bf16.mxu0 0
      %971 = vmatpush1.bf16.msra.mxu0 0
      %972 = vmatprep.subr.bf16.mxu0 0
      %973 = vmatpush1.bf16.msra.mxu0 0
      %974 = vmatprep.subr.bf16.mxu0 0
      %975 = vmatpush1.bf16.msra.mxu0 0
      %976 = vmatprep.mubr.bf16.mxu0 0
      %977 = vmatmul.mubr.bf16.gmra.mrb[0].mxu0 %v939
      %v978 = vpop.f32.mrb[0].mxu0
      %v979 = vadd.f32 0.0, %v978
      %v980 = vpop.f32.mrb[0].mxu0
      %v981 = vpop.f32.mrb[0].mxu0
      %v982 = vpop.f32.mrb[0].mxu0
      %983 = vdwg.mxu0
      %v985 = vsel %vm416, %v841, 0
      %v988 = vsel %vm656, %v845, 0
      %990 = vmatprep.subr.bf16.mxu0 0
      %991 = vmatpush1.bf16.msra.mxu0 %v988
      %992 = vmatprep.subr.bf16.mxu0 0
      %993 = vmatpush1.bf16.msra.mxu0 0
      %994 = vmatprep.subr.bf16.mxu0 0
      %995 = vmatpush1.bf16.msra.mxu0 0
      %996 = vmatprep.subr.bf16.mxu0 0
      %997 = vmatpush1.bf16.msra.mxu0 0
      %998 = vmatprep.subr.bf16.mxu0 0
      %999 = vmatpush1.bf16.msra.mxu0 0
      %1000 = vmatprep.subr.bf16.mxu0 0
      %1001 = vmatpush1.bf16.msra.mxu0 0
      %1002 = vmatprep.subr.bf16.mxu0 0
      %1003 = vmatpush1.bf16.msra.mxu0 0
      %1004 = vmatprep.subr.bf16.mxu0 0
      %1005 = vmatpush1.bf16.msra.mxu0 0
      %1006 = vmatprep.subr.bf16.mxu0 0
      %1007 = vmatpush1.bf16.msra.mxu0 0
      %1008 = vmatprep.subr.bf16.mxu0 0
      %1009 = vmatpush1.bf16.msra.mxu0 0
      %1010 = vmatprep.subr.bf16.mxu0 0
      %1011 = vmatpush1.bf16.msra.mxu0 0
      %1012 = vmatprep.subr.bf16.mxu0 0
      %1013 = vmatpush1.bf16.msra.mxu0 0
      %1014 = vmatprep.subr.bf16.mxu0 0
      %1015 = vmatpush1.bf16.msra.mxu0 0
      %1016 = vmatprep.subr.bf16.mxu0 0
      %1017 = vmatpush1.bf16.msra.mxu0 0
      %1018 = vmatprep.subr.bf16.mxu0 0
      %1019 = vmatpush1.bf16.msra.mxu0 0
      %1020 = vmatprep.subr.bf16.mxu0 0
      %1021 = vmatpush1.bf16.msra.mxu0 0
      %1022 = vmatprep.mubr.bf16.mxu0 0
      %1023 = vmatmul.mubr.bf16.gmra.mrb[0].mxu0 %v985
      %v1024 = vpop.f32.mrb[0].mxu0
      %v1025 = vadd.f32 0.0, %v1024
      %v1026 = vpop.f32.mrb[0].mxu0
      %v1027 = vpop.f32.mrb[0].mxu0
      %v1028 = vpop.f32.mrb[0].mxu0
      %1029 = vdwg.mxu0
      %vm1030 = vcmask 261120
      %v1031 = vsel %vm1030, %v887, 0.0
      %v1032 = vsel %vm1030, %v933, 0.0
      %v1033 = vadd.f32 %v1031, %v1032
      %v1034 = vsel %vm1030, %v979, 0.0
      %v1035 = vadd.f32 %v1033, %v1034
      %v1036 = vsel %vm1030, %v1025, 0.0
      %v1037 = vadd.f32 %v1035, %v1036
      %v1038 = vld [vmem:[%s5] sm:$0x1]
      %v1040 = vlaneseq
      %v1041 = vshrl.u32 %v1040, 7
      %v1042 = vsub.s32 0, %v1041
      %v1043 = vrot.slane %v1038, %v1042
      %v1045 = vadd.f32 %v1037, %v1043
      %v1046 = vld [vmem:[%s395] sm:$0xff]
      %v1047 = vadd.f32 %v1046, %v1045
      %v1048 = vld [vmem:[%s6] sm:$0x1]
      %v1049 = vld [vmem:[%s7] sm:$0x1]
      %v1050 = vsel %vm1030, %v1047, 0.0
      %1051 = vadd.xlane.f32.xlu0 %v1050
      %v1052 = vpop.xlane.xlu0 %1051
      %v1053 = vrcp.pop 32.0
      %v1054 = vmul.f32 %v1052, %v1053
      %v1055 = vsub.f32 %v1047, %v1054
      %v1056 = vmul.f32 %v1055, %v1055
      %v1057 = vsel %vm1030, %v1056, 0.0
      %1058 = vadd.xlane.f32.xlu0 %v1057
      %v1059 = vpop.xlane.xlu0 %1058
      %v1060 = vmul.f32 %v1059, %v1053
      %v1061 = vadd.f32 %v1060, 1e-05
      %v1062 = vrsqrt.pop %v1061
      %v1063 = vmul.f32 %v1055, %v1062
      %v1065 = vlaneseq
      %v1066 = vshrl.u32 %v1065, 7
      %v1067 = vsub.s32 0, %v1066
      %v1068 = vrot.slane %v1048, %v1067
      %v1070 = vmul.f32 %v1063, %v1068
      %v1072 = vlaneseq
      %v1073 = vshrl.u32 %v1072, 7
      %v1074 = vsub.s32 0, %v1073
      %v1075 = vrot.slane %v1049, %v1074
      %v1077 = vadd.f32 %v1070, %v1075
      %1078 = vst.msk [vmem:[%s402] sm:$0xff] %vm1030, %v1077
      %p1079 = scmp.lt.s32.totalorder %s23, 3
      %s1080 = scalar_select %p1079, %s23, 3
      %p1081 = scmp.lt.s32.totalorder %s24, 0
      %s1082 = scalar_select %p1081, %s24, 0
      %s1083 = sadd.s32 %s1082, %s1080
      %s1084 = smul.addr %s1083, 8
      %s1085 = scalar_lea.vmem %s8, %s1084
      // Predicated region
      $region53: #{_lambda_.25} parent=51 // pred_check
        %p1086 = pneg %p243
      $region54: #{_lambda_.25} parent=51 // pred_check_branch
        %1088 = sbr.rel (%p1086) target = $region56
      $region55: #{_lambda_.25} parent=51 // pred_region
        _
      $region56: #{_lambda_.25} parent=51 // pred_fallthru
        _
    $region52: #{_lambda_.25} parent=5 // pred_fallthru
      _
    %p1089 = scmp.le.s32.totalorder 2, %s14
    // Predicated region
    $region57: #{_lambda_.25} parent=5 // pred_check
      %p1090 = pneg %p1089
    $region58: #{_lambda_.25} parent=5 // pred_check_branch
      %1092 = sbr.rel (%p1090) target = $region60
    $region59: #{_lambda_.25} parent=5 // pred_region
      %s1093 = ssub.s32 %s14, 2
      // Predicated region
      $region61: #{_lambda_.25} parent=59 // pred_check
        %p1094 = pneg %p249
      $region62: #{_lambda_.25} parent=59 // pred_check_branch
        %1096 = sbr.rel (%p1094) target = $region64
      $region63: #{_lambda_.25} parent=59 // pred_region
        %p1097 = scmp.lt.s32.totalorder %s25, 3
        %s1098 = scalar_select %p1097, %s25, 3
        %p1099 = scmp.lt.s32.totalorder %s26, 0
        %s1100 = scalar_select %p1099, %s26, 0
        %s1101 = sadd.s32 %s1100, %s1098
        %s1102 = smul.addr %s1101, 8
        %s1103 = scalar_lea.vmem %s8, %s1102
      $region64: #{_lambda_.25} parent=59 // pred_fallthru
        _
    $region60: #{_lambda_.25} parent=5 // pred_fallthru
      _
  $region6: #{_lambda_.25} parent=0 // loop_footer
    %s18 = sadd.s32 1, %s14
  $region7: #{_lambda_.25} parent=0 // loop_footer_branch
    %13 = sbr.rel target = $region3
  $region8: #{_lambda_.25} parent=0 // loop_exit
    _

// kernel: _lambda_.20
$region0: #{_lambda_.20}
  #allocation0 [shape = 'u32[]', space=smem, size = 0x4, offset = 0x4, fixed_abs, tag = 'smem constant byte address 0x4 - core index']
  #allocation1 [shape = 'u32[144,128]{1,0:T(1,128)}', space=vmem, size = 0x12000, scoped, tag = 'internal scratch']
  %s0 = inlined_call_operand.vmem [shape: bf16[4,4,8,8], index: 0, kind: input, shape index: {}]
  %s1 = inlined_call_operand.vmem [shape: bf16[4,4,8,8], index: 1, kind: input, shape index: {}]
  %s2 = inlined_call_operand.vmem [shape: bf16[4,4,8,8], index: 2, kind: input, shape index: {}]
  %s3 = inlined_call_operand.vmem [shape: f32[4,8,32], index: 3, kind: input, shape index: {}]
  %s4 = inlined_call_operand.vmem [shape: f32[4,8,5], index: 4, kind: input, shape index: {}]
  %s5 = inlined_call_operand.vmem [shape: f32[4,8,5], index: 5, kind: input, shape index: {}]
  %s6 = inlined_call_operand.vmem [shape: bf16[4,8,32], index: 6, kind: input, shape index: {}]
  %s7 = inlined_call_operand.vmem [shape: f32[1,32], index: 7, kind: input, shape index: {}, may-alias: {7,9}]
  %s8 = inlined_call_operand.vmem [shape: f32[1,32], index: 8, kind: input, shape index: {}]
  %s9 = inlined_call_operand.vmem [shape: f32[1,32], index: 9, kind: input, shape index: {}, may-alias: {7,9}]
  %s10 = inlined_call_operand.vmem [shape: f32[4,8,32], index: 10, kind: output, shape index: {}]
  %s11 = sld [smem:[#allocation0]]
  $region73: #{_lambda_.20} parent=0
    _
  %s13 = ssub.s32 1, %s11
  %s14 = scalar_select 0, %s13, %s11
  loop: start=0, step=1, limit=6
  $region2: #{_lambda_.20} parent=0 // loop_pre_header
    _
  $region3: #{_lambda_.20} parent=0 // loop_header
    %s16 = sphi 0, %s20
    %p17 = scmp.ge.s32.totalorder %s16, 6
    %s23 = sphi 0, %s35
    %s24 = sphi 0, %s31
    %s25 = sphi 0, %s23
    %s26 = sphi 0, %s24
    %s27 = sphi 0, %s25
    %s28 = sphi 0, %s26
    %s40 = sphi 0, %s42
    %s43 = sphi 0, %s40
    %s44 = sphi 0, %s43
    %s60 = sphi 0, %s44
    %s66 = sphi 0, %s68
    %s69 = sphi 0, %s66
    %s70 = sphi 0, %s69
    %s86 = sphi 0, %s70
    %s92 = sphi 0, %s94
    %s95 = sphi 0, %s92
    %s96 = sphi 0, %s95
    %s112 = sphi 0, %s96
    %s120 = sphi 0, %s122
    %s123 = sphi 0, %s120
    %s124 = sphi 0, %s123
    %s140 = sphi 0, %s124
    %s148 = sphi 0, %s150
    %s151 = sphi 0, %s148
    %s152 = sphi 0, %s151
    %s168 = sphi 0, %s152
    %s174 = sphi 0, %s176
    %s177 = sphi 0, %s174
    %s178 = sphi 0, %s177
    %s194 = sphi 0, %s178
    %s198 = sphi 0, %s198
    %s200 = sphi 0, %s198
    %s201 = sphi 0, %s200
    %s215 = sphi 0, %s201
    %s219 = sphi 0, %s219
    %s221 = sphi 0, %s219
    %s222 = sphi 0, %s221
    %s236 = sphi 0, %s222
    %s240 = sphi 0, %s240
    %s242 = sphi 0, %s240
    %s243 = sphi 0, %s242
    %s257 = sphi 0, %s243
    %s261 = sphi 0, %s261
    %s263 = sphi 0, %s261
    %s264 = sphi 0, %s263
    %s278 = sphi 0, %s264
    %s286 = sphi 0, %s288
    %s289 = sphi 0, %s286
    %s290 = sphi 0, %s289
    %s306 = sphi 0, %s290
  $region4: #{_lambda_.20} parent=0 // loop_header_branch
    %19 = sbr.rel (%p17) target = $region8
  $region5: #{_lambda_.20} parent=0 // loop_body
    %s21 = ssub.s32 %s16, 1
    %s22 = ssub.s32 %s16, 2
    %s29 = sadd.s32 1, %s24
    %p30 = scmp.ge.s32.totalorder %s29, 1
    %s31 = scalar_select %p30, 0, %s29
    %s32 = sadd.s32 1, %s23
    %s33 = scalar_select %p30, %s32, %s23
    %p34 = scmp.ge.s32.totalorder %s33, 4
    %s35 = scalar_select %p34, 0, %s33
    %s36 = ssub.s32 %s23, %s35
    %s37 = ssub.s32 %s24, %s31
    %s38 = sor.u32 %s36, %s37
    %p39 = scmp.eq.s32.totalorder %s38, 0
    %s41 = sadd.s32 %s40, 1
    %s42 = scalar_select %p39, %s40, %s41
    %p45 = pneg %p39
    %p46 = scmp.eq.s32.totalorder %s16, 3
    %p47 = por %p45, %p46
    %p48 = scmp.ne.s32.totalorder %s40, %s43
    %p49 = scmp.eq.s32.totalorder %s16, 0
    %p50 = por %p48, %p49
    %p51 = scmp.ne.s32.totalorder %s40, %s43
    %p52 = scmp.eq.s32.totalorder %s21, 3
    %p53 = por %p51, %p52
    %p54 = scmp.ne.s32.totalorder %s43, %s44
    %p55 = scmp.eq.s32.totalorder %s21, 0
    %p56 = por %p54, %p55
    %p57 = scmp.ne.s32.totalorder %s43, %s44
    %p58 = scmp.eq.s32.totalorder %s22, 3
    %p59 = por %p57, %p58
    %p61 = scmp.ne.s32.totalorder %s44, %s60
    %p62 = scmp.eq.s32.totalorder %s22, 0
    %p63 = por %p61, %p62
    %s64 = ssub.s32 %s23, %s35
    %p65 = scmp.eq.s32.totalorder %s64, 0
    %s67 = sadd.s32 %s66, 1
    %s68 = scalar_select %p65, %s66, %s67
    %p71 = pneg %p65
    %p72 = scmp.eq.s32.totalorder %s16, 3
    %p73 = por %p71, %p72
    %p74 = scmp.ne.s32.totalorder %s66, %s69
    %p75 = scmp.eq.s32.totalorder %s16, 0
    %p76 = por %p74, %p75
    %p77 = scmp.ne.s32.totalorder %s66, %s69
    %p78 = scmp.eq.s32.totalorder %s21, 3
    %p79 = por %p77, %p78
    %p80 = scmp.ne.s32.totalorder %s69, %s70
    %p81 = scmp.eq.s32.totalorder %s21, 0
    %p82 = por %p80, %p81
    %p83 = scmp.ne.s32.totalorder %s69, %s70
    %p84 = scmp.eq.s32.totalorder %s22, 3
    %p85 = por %p83, %p84
    %p87 = scmp.ne.s32.totalorder %s70, %s86
    %p88 = scmp.eq.s32.totalorder %s22, 0
    %p89 = por %p87, %p88
    %s90 = ssub.s32 %s23, %s35
    %p91 = scmp.eq.s32.totalorder %s90, 0
    %s93 = sadd.s32 %s92, 1
    %s94 = scalar_select %p91, %s92, %s93
    %p97 = pneg %p91
    %p98 = scmp.eq.s32.totalorder %s16, 3
    %p99 = por %p97, %p98
    %p100 = scmp.ne.s32.totalorder %s92, %s95
    %p101 = scmp.eq.s32.totalorder %s16, 0
    %p102 = por %p100, %p101
    %p103 = scmp.ne.s32.totalorder %s92, %s95
    %p104 = scmp.eq.s32.totalorder %s21, 3
    %p105 = por %p103, %p104
    %p106 = scmp.ne.s32.totalorder %s95, %s96
    %p107 = scmp.eq.s32.totalorder %s21, 0
    %p108 = por %p106, %p107
    %p109 = scmp.ne.s32.totalorder %s95, %s96
    %p110 = scmp.eq.s32.totalorder %s22, 3
    %p111 = por %p109, %p110
    %p113 = scmp.ne.s32.totalorder %s96, %s112
    %p114 = scmp.eq.s32.totalorder %s22, 0
    %p115 = por %p113, %p114
    %s116 = ssub.s32 %s23, %s35
    %s117 = ssub.s32 %s24, %s31
    %s118 = sor.u32 %s116, %s117
    %p119 = scmp.eq.s32.totalorder %s118, 0
    %s121 = sadd.s32 %s120, 1
    %s122 = scalar_select %p119, %s120, %s121
    %p125 = pneg %p119
    %p126 = scmp.eq.s32.totalorder %s16, 3
    %p127 = por %p125, %p126
    %p128 = scmp.ne.s32.totalorder %s120, %s123
    %p129 = scmp.eq.s32.totalorder %s16, 0
    %p130 = por %p128, %p129
    %p131 = scmp.ne.s32.totalorder %s120, %s123
    %p132 = scmp.eq.s32.totalorder %s21, 3
    %p133 = por %p131, %p132
    %p134 = scmp.ne.s32.totalorder %s123, %s124
    %p135 = scmp.eq.s32.totalorder %s21, 0
    %p136 = por %p134, %p135
    %p137 = scmp.ne.s32.totalorder %s123, %s124
    %p138 = scmp.eq.s32.totalorder %s22, 3
    %p139 = por %p137, %p138
    %p141 = scmp.ne.s32.totalorder %s124, %s140
    %p142 = scmp.eq.s32.totalorder %s22, 0
    %p143 = por %p141, %p142
    %s144 = ssub.s32 %s23, %s35
    %s145 = ssub.s32 %s24, %s31
    %s146 = sor.u32 %s144, %s145
    %p147 = scmp.eq.s32.totalorder %s146, 0
    %s149 = sadd.s32 %s148, 1
    %s150 = scalar_select %p147, %s148, %s149
    %p153 = pneg %p147
    %p154 = scmp.eq.s32.totalorder %s16, 3
    %p155 = por %p153, %p154
    %p156 = scmp.ne.s32.totalorder %s148, %s151
    %p157 = scmp.eq.s32.totalorder %s16, 0
    %p158 = por %p156, %p157
    %p159 = scmp.ne.s32.totalorder %s148, %s151
    %p160 = scmp.eq.s32.totalorder %s21, 3
    %p161 = por %p159, %p160
    %p162 = scmp.ne.s32.totalorder %s151, %s152
    %p163 = scmp.eq.s32.totalorder %s21, 0
    %p164 = por %p162, %p163
    %p165 = scmp.ne.s32.totalorder %s151, %s152
    %p166 = scmp.eq.s32.totalorder %s22, 3
    %p167 = por %p165, %p166
    %p169 = scmp.ne.s32.totalorder %s152, %s168
    %p170 = scmp.eq.s32.totalorder %s22, 0
    %p171 = por %p169, %p170
    %s172 = ssub.s32 %s23, %s35
    %p173 = scmp.eq.s32.totalorder %s172, 0
    %s175 = sadd.s32 %s174, 1
    %s176 = scalar_select %p173, %s174, %s175
    %p179 = pneg %p173
    %p180 = scmp.eq.s32.totalorder %s16, 3
    %p181 = por %p179, %p180
    %p182 = scmp.ne.s32.totalorder %s174, %s177
    %p183 = scmp.eq.s32.totalorder %s16, 0
    %p184 = por %p182, %p183
    %p185 = scmp.ne.s32.totalorder %s174, %s177
    %p186 = scmp.eq.s32.totalorder %s21, 3
    %p187 = por %p185, %p186
    %p188 = scmp.ne.s32.totalorder %s177, %s178
    %p189 = scmp.eq.s32.totalorder %s21, 0
    %p190 = por %p188, %p189
    %p191 = scmp.ne.s32.totalorder %s177, %s178
    %p192 = scmp.eq.s32.totalorder %s22, 3
    %p193 = por %p191, %p192
    %p195 = scmp.ne.s32.totalorder %s178, %s194
    %p196 = scmp.eq.s32.totalorder %s22, 0
    %p197 = por %p195, %p196
    %s199 = sadd.s32 %s198, 1
    %p202 = scmp.eq.s32.totalorder %s16, 3
    %p203 = scmp.ne.s32.totalorder %s198, %s200
    %p204 = scmp.eq.s32.totalorder %s16, 0
    %p205 = por %p203, %p204
    %p206 = scmp.ne.s32.totalorder %s198, %s200
    %p207 = scmp.eq.s32.totalorder %s21, 3
    %p208 = por %p206, %p207
    %p209 = scmp.ne.s32.totalorder %s200, %s201
    %p210 = scmp.eq.s32.totalorder %s21, 0
    %p211 = por %p209, %p210
    %p212 = scmp.ne.s32.totalorder %s200, %s201
    %p213 = scmp.eq.s32.totalorder %s22, 3
    %p214 = por %p212, %p213
    %p216 = scmp.ne.s32.totalorder %s201, %s215
    %p217 = scmp.eq.s32.totalorder %s22, 0
    %p218 = por %p216, %p217
    %s220 = sadd.s32 %s219, 1
    %p223 = scmp.eq.s32.totalorder %s16, 3
    %p224 = scmp.ne.s32.totalorder %s219, %s221
    %p225 = scmp.eq.s32.totalorder %s16, 0
    %p226 = por %p224, %p225
    %p227 = scmp.ne.s32.totalorder %s219, %s221
    %p228 = scmp.eq.s32.totalorder %s21, 3
    %p229 = por %p227, %p228
    %p230 = scmp.ne.s32.totalorder %s221, %s222
    %p231 = scmp.eq.s32.totalorder %s21, 0
    %p232 = por %p230, %p231
    %p233 = scmp.ne.s32.totalorder %s221, %s222
    %p234 = scmp.eq.s32.totalorder %s22, 3
    %p235 = por %p233, %p234
    %p237 = scmp.ne.s32.totalorder %s222, %s236
    %p238 = scmp.eq.s32.totalorder %s22, 0
    %p239 = por %p237, %p238
    %s241 = sadd.s32 %s240, 1
    %p244 = scmp.eq.s32.totalorder %s16, 3
    %p245 = scmp.ne.s32.totalorder %s240, %s242
    %p246 = scmp.eq.s32.totalorder %s16, 0
    %p247 = por %p245, %p246
    %p248 = scmp.ne.s32.totalorder %s240, %s242
    %p249 = scmp.eq.s32.totalorder %s21, 3
    %p250 = por %p248, %p249
    %p251 = scmp.ne.s32.totalorder %s242, %s243
    %p252 = scmp.eq.s32.totalorder %s21, 0
    %p253 = por %p251, %p252
    %p254 = scmp.ne.s32.totalorder %s242, %s243
    %p255 = scmp.eq.s32.totalorder %s22, 3
    %p256 = por %p254, %p255
    %p258 = scmp.ne.s32.totalorder %s243, %s257
    %p259 = scmp.eq.s32.totalorder %s22, 0
    %p260 = por %p258, %p259
    %s262 = sadd.s32 %s261, 1
    %p265 = scmp.eq.s32.totalorder %s16, 3
    %p266 = scmp.ne.s32.totalorder %s261, %s263
    %p267 = scmp.eq.s32.totalorder %s16, 0
    %p268 = por %p266, %p267
    %p269 = scmp.ne.s32.totalorder %s261, %s263
    %p270 = scmp.eq.s32.totalorder %s21, 3
    %p271 = por %p269, %p270
    %p272 = scmp.ne.s32.totalorder %s263, %s264
    %p273 = scmp.eq.s32.totalorder %s21, 0
    %p274 = por %p272, %p273
    %p275 = scmp.ne.s32.totalorder %s263, %s264
    %p276 = scmp.eq.s32.totalorder %s22, 3
    %p277 = por %p275, %p276
    %p279 = scmp.ne.s32.totalorder %s264, %s278
    %p280 = scmp.eq.s32.totalorder %s22, 0
    %p281 = por %p279, %p280
    %s282 = ssub.s32 %s23, %s35
    %s283 = ssub.s32 %s24, %s31
    %s284 = sor.u32 %s282, %s283
    %p285 = scmp.eq.s32.totalorder %s284, 0
    %s287 = sadd.s32 %s286, 1
    %s288 = scalar_select %p285, %s286, %s287
    %p291 = pneg %p285
    %p292 = scmp.eq.s32.totalorder %s16, 3
    %p293 = por %p291, %p292
    %p294 = scmp.ne.s32.totalorder %s286, %s289
    %p295 = scmp.eq.s32.totalorder %s16, 0
    %p296 = por %p294, %p295
    %p297 = scmp.ne.s32.totalorder %s286, %s289
    %p298 = scmp.eq.s32.totalorder %s21, 3
    %p299 = por %p297, %p298
    %p300 = scmp.ne.s32.totalorder %s289, %s290
    %p301 = scmp.eq.s32.totalorder %s21, 0
    %p302 = por %p300, %p301
    %p303 = scmp.ne.s32.totalorder %s289, %s290
    %p304 = scmp.eq.s32.totalorder %s22, 3
    %p305 = por %p303, %p304
    %p307 = scmp.ne.s32.totalorder %s290, %s306
    %p308 = scmp.eq.s32.totalorder %s22, 0
    %p309 = por %p307, %p308
    %p310 = scmp.le.s32.totalorder 1, %s16
    %p311 = scmp.lt.s32.totalorder %s16, 5
    %p312 = pnand %p310, %p311
    %p313 = pneg %p312
    // Predicated region
    $region9: #{_lambda_.20} parent=5 // pred_check
      _
    $region10: #{_lambda_.20} parent=5 // pred_check_branch
      %315 = sbr.rel (%p312) target = $region12
    $region11: #{_lambda_.20} parent=5 // pred_region
      %s316 = ssub.s32 %s16, 1
      // Predicated region
      $region13: #{_lambda_.20} parent=11 // pred_check
        %p317 = pneg %p211
      $region14: #{_lambda_.20} parent=11 // pred_check_branch
        %319 = sbr.rel (%p317) target = $region16
      $region15: #{_lambda_.20} parent=11 // pred_region
        _
      $region16: #{_lambda_.20} parent=11 // pred_fallthru
        _
      // Predicated region
      $region17: #{_lambda_.20} parent=11 // pred_check
        %p320 = pneg %p232
      $region18: #{_lambda_.20} parent=11 // pred_check_branch
        %322 = sbr.rel (%p320) target = $region20
      $region19: #{_lambda_.20} parent=11 // pred_region
        _
      $region20: #{_lambda_.20} parent=11 // pred_fallthru
        _
      // Predicated region
      $region21: #{_lambda_.20} parent=11 // pred_check
        %p323 = pneg %p253
      $region22: #{_lambda_.20} parent=11 // pred_check_branch
        %325 = sbr.rel (%p323) target = $region24
      $region23: #{_lambda_.20} parent=11 // pred_region
        _
      $region24: #{_lambda_.20} parent=11 // pred_fallthru
        _
      // Predicated region
      $region25: #{_lambda_.20} parent=11 // pred_check
        %p326 = pneg %p274
      $region26: #{_lambda_.20} parent=11 // pred_check_branch
        %328 = sbr.rel (%p326) target = $region28
      $region27: #{_lambda_.20} parent=11 // pred_region
        _
      $region28: #{_lambda_.20} parent=11 // pred_fallthru
        _
    $region12: #{_lambda_.20} parent=5 // pred_fallthru
      _
    %p329 = scmp.lt.s32.totalorder %s16, 4
    // Predicated region
    $region29: #{_lambda_.20} parent=5 // pred_check
      %p330 = pneg %p329
    $region30: #{_lambda_.20} parent=5 // pred_check_branch
      %332 = sbr.rel (%p330) target = $region32
    $region31: #{_lambda_.20} parent=5 // pred_region
      // Predicated region
      $region33: #{_lambda_.20} parent=31 // pred_check
        %p333 = pneg %p50
      $region34: #{_lambda_.20} parent=31 // pred_check_branch
        %335 = sbr.rel (%p333) target = $region36
      $region35: #{_lambda_.20} parent=31 // pred_region
        %p336 = scmp.lt.s32.totalorder %s23, 3
        %s337 = scalar_select %p336, %s23, 3
        %p338 = scmp.lt.s32.totalorder %s24, 0
        %s339 = scalar_select %p338, %s24, 0
        %s340 = smul.addr %s337, 4
        %s341 = sadd.s32 %s339, %s340
        %s342 = smul.addr %s341, 4
        %s343 = scalar_lea.vmem %s0, %s342
      $region36: #{_lambda_.20} parent=31 // pred_fallthru
        _
      // Predicated region
      $region37: #{_lambda_.20} parent=31 // pred_check
        %p344 = pneg %p76
      $region38: #{_lambda_.20} parent=31 // pred_check_branch
        %346 = sbr.rel (%p344) target = $region40
      $region39: #{_lambda_.20} parent=31 // pred_region
        %p347 = scmp.lt.s32.totalorder %s23, 3
        %s348 = scalar_select %p347, %s23, 3
        %s349 = smul.addr %s348, 4
        %s350 = smul.addr %s349, 4
        %s351 = scalar_lea.vmem %s1, %s350
      $region40: #{_lambda_.20} parent=31 // pred_fallthru
        _
      // Predicated region
      $region41: #{_lambda_.20} parent=31 // pred_check
        %p352 = pneg %p102
      $region42: #{_lambda_.20} parent=31 // pred_check_branch
        %354 = sbr.rel (%p352) target = $region44
      $region43: #{_lambda_.20} parent=31 // pred_region
        %p355 = scmp.lt.s32.totalorder %s23, 3
        %s356 = scalar_select %p355, %s23, 3
        %s357 = smul.addr %s356, 4
        %s358 = smul.addr %s357, 4
        %s359 = scalar_lea.vmem %s2, %s358
      $region44: #{_lambda_.20} parent=31 // pred_fallthru
        _
      // Predicated region
      $region45: #{_lambda_.20} parent=31 // pred_check
        %p360 = pneg %p130
      $region46: #{_lambda_.20} parent=31 // pred_check_branch
        %362 = sbr.rel (%p360) target = $region48
      $region47: #{_lambda_.20} parent=31 // pred_region
        %p363 = scmp.lt.s32.totalorder %s23, 3
        %s364 = scalar_select %p363, %s23, 3
        %p365 = scmp.lt.s32.totalorder %s24, 0
        %s366 = scalar_select %p365, %s24, 0
        %s367 = sadd.s32 %s366, %s364
        %s368 = smul.addr %s367, 8
        %s369 = scalar_lea.vmem %s3, %s368
      $region48: #{_lambda_.20} parent=31 // pred_fallthru
        _
      // Predicated region
      $region49: #{_lambda_.20} parent=31 // pred_check
        %p370 = pneg %p158
      $region50: #{_lambda_.20} parent=31 // pred_check_branch
        %372 = sbr.rel (%p370) target = $region52
      $region51: #{_lambda_.20} parent=31 // pred_region
        %p373 = scmp.lt.s32.totalorder %s23, 3
        %s374 = scalar_select %p373, %s23, 3
        %p375 = scmp.lt.s32.totalorder %s24, 0
        %s376 = scalar_select %p375, %s24, 0
        %s377 = sadd.s32 %s376, %s374
        %s378 = smul.addr %s377, 8
        %s379 = scalar_lea.vmem %s4, %s378
      $region52: #{_lambda_.20} parent=31 // pred_fallthru
        _
      // Predicated region
      $region53: #{_lambda_.20} parent=31 // pred_check
        %p380 = pneg %p184
      $region54: #{_lambda_.20} parent=31 // pred_check_branch
        %382 = sbr.rel (%p380) target = $region56
      $region55: #{_lambda_.20} parent=31 // pred_region
        %p383 = scmp.lt.s32.totalorder %s23, 3
        %s384 = scalar_select %p383, %s23, 3
        %s385 = smul.addr %s384, 8
        %s386 = scalar_lea.vmem %s5, %s385
      $region56: #{_lambda_.20} parent=31 // pred_fallthru
        _
    $region32: #{_lambda_.20} parent=5 // pred_fallthru
      _
    %p387 = scmp.le.s32.totalorder 1, %s16
    %p388 = scmp.lt.s32.totalorder %s16, 5
    %p389 = pnand %p387, %p388
    %p390 = pneg %p389
    // Predicated region
    $region57: #{_lambda_.20} parent=5 // pred_check
      _
    $region58: #{_lambda_.20} parent=5 // pred_check_branch
      %392 = sbr.rel (%p389) target = $region60
    $region59: #{_lambda_.20} parent=5 // pred_region
      %s393 = ssub.s32 %s16, 1
      %p394 = scmp.lt.s32.totalorder %s25, 3
      %s395 = scalar_select %p394, %s25, 3
      %p396 = scmp.lt.s32.totalorder %s26, 0
      %s397 = scalar_select %p396, %s26, 0
      %s398 = smul.addr %s395, 4
      %s399 = sadd.s32 %s397, %s398
      %s400 = smul.addr %s399, 4
      %s401 = scalar_lea.vmem %s0, %s400
      %p402 = pneg %p56
      %p403 = pneg %p53
      %p404 = scmp.lt.s32.totalorder %s25, 3
      %s405 = scalar_select %p404, %s25, 3
      %s406 = smul.addr %s405, 4
      %s407 = smul.addr %s406, 4
      %s408 = scalar_lea.vmem %s1, %s407
      %p409 = pneg %p82
      %p410 = pneg %p79
      %p411 = scmp.lt.s32.totalorder %s25, 3
      %s412 = scalar_select %p411, %s25, 3
      %s413 = smul.addr %s412, 4
      %s414 = smul.addr %s413, 4
      %s415 = scalar_lea.vmem %s2, %s414
      %p416 = pneg %p108
      %p417 = pneg %p105
      %p418 = scmp.lt.s32.totalorder %s25, 3
      %s419 = scalar_select %p418, %s25, 3
      %p420 = scmp.lt.s32.totalorder %s26, 0
      %s421 = scalar_select %p420, %s26, 0
      %s422 = sadd.s32 %s421, %s419
      %s423 = smul.addr %s422, 8
      %s424 = scalar_lea.vmem %s3, %s423
      %p425 = pneg %p136
      %p426 = pneg %p133
      %p427 = scmp.lt.s32.totalorder %s25, 3
      %s428 = scalar_select %p427, %s25, 3
      %p429 = scmp.lt.s32.totalorder %s26, 0
      %s430 = scalar_select %p429, %s26, 0
      %s431 = sadd.s32 %s430, %s428
      %s432 = smul.addr %s431, 8
      %s433 = scalar_lea.vmem %s4, %s432
      %p434 = pneg %p164
      %p435 = pneg %p161
      %p436 = scmp.lt.s32.totalorder %s25, 3
      %s437 = scalar_select %p436, %s25, 3
      %s438 = smul.addr %s437, 8
      %s439 = scalar_lea.vmem %s5, %s438
      %p440 = pneg %p190
      %p441 = pneg %p187
      %p442 = pneg %p211
      %p443 = pneg %p208
      %p444 = pneg %p232
      %p445 = pneg %p229
      %p446 = pneg %p253
      %p447 = pneg %p250
      %p448 = pneg %p274
      %p449 = pneg %p271
      %p450 = pneg %p302
      %p451 = pneg %p299
      %p452 = scmp.lt.s32.totalorder %s25, 3
      %s453 = scalar_select %p452, %s25, 3
      %p454 = scmp.lt.s32.totalorder %s26, 0
      %s455 = scalar_select %p454, %s26, 0
      %s456 = sadd.s32 %s455, %s453
      %s457 = smul.addr %s456, 8
      %s458 = scalar_lea.vmem %s10, %s457
      %p459 = scmp.lt.s32.totalorder %s25, 3
      %s460 = scalar_select %p459, %s25, 3
      %p461 = scmp.lt.s32.totalorder %s26, 0
      %s462 = scalar_select %p461, %s26, 0
      %s463 = smul.addr %s460, 4
      %s464 = sadd.s32 %s462, %s463
      %s465 = smul.addr %s464, 4
      %s466 = scalar_lea.vmem %s0, %s465
      %p467 = scmp.lt.s32.totalorder %s25, 3
      %s468 = scalar_select %p467, %s25, 3
      %s469 = smul.addr %s468, 4
      %s470 = smul.addr %s469, 4
      %s471 = scalar_lea.vmem %s1, %s470
      %p472 = scmp.lt.s32.totalorder %s25, 3
      %s473 = scalar_select %p472, %s25, 3
      %s474 = smul.addr %s473, 4
      %s475 = smul.addr %s474, 4
      %s476 = scalar_lea.vmem %s2, %s475
      %p477 = scmp.lt.s32.totalorder %s25, 3
      %s478 = scalar_select %p477, %s25, 3
      %p479 = scmp.lt.s32.totalorder %s26, 0
      %s480 = scalar_select %p479, %s26, 0
      %s481 = sadd.s32 %s480, %s478
      %s482 = smul.addr %s481, 8
      %s483 = scalar_lea.vmem %s3, %s482
      %p484 = scmp.lt.s32.totalorder %s25, 3
      %s485 = scalar_select %p484, %s25, 3
      %p486 = scmp.lt.s32.totalorder %s26, 0
      %s487 = scalar_select %p486, %s26, 0
      %s488 = sadd.s32 %s487, %s485
      %s489 = smul.addr %s488, 8
      %s490 = scalar_lea.vmem %s4, %s489
      %p491 = scmp.lt.s32.totalorder %s25, 3
      %s492 = scalar_select %p491, %s25, 3
      %s493 = smul.addr %s492, 8
      %s494 = scalar_lea.vmem %s5, %s493
      %p495 = scmp.lt.s32.totalorder %s25, 3
      %s496 = scalar_select %p495, %s25, 3
      %p497 = scmp.lt.s32.totalorder %s26, 0
      %s498 = scalar_select %p497, %s26, 0
      %s499 = sadd.s32 %s498, %s496
      %s500 = smul.addr %s499, 8
      %s501 = scalar_lea.vmem %s10, %s500
      %v503 = vld [vmem:[%s466] sm:$0xf]
      %v504 = vld [vmem:[%s466 + $0x4] sm:$0xf]
      %v505 = vld [vmem:[%s466 + $0x8] sm:$0xf]
      %v506 = vld [vmem:[%s466 + $0xc] sm:$0xf]
      %v507 = vld [vmem:[%s471] sm:$0xf]
      %v508 = vld [vmem:[%s471 + $0x4] sm:$0xf]
      %v509 = vld [vmem:[%s471 + $0x8] sm:$0xf]
      %v510 = vld [vmem:[%s471 + $0xc] sm:$0xf]
      %v511 = vld [vmem:[%s476] sm:$0xf]
      %v512 = vld [vmem:[%s476 + $0x4] sm:$0xf]
      %v513 = vld [vmem:[%s476 + $0x8] sm:$0xf]
      %v514 = vld [vmem:[%s476 + $0xc] sm:$0xf]
      %vm515 = vcmask 64512
      %v517 = vsel %vm515, %v503, 0
      %v520 = vsel %vm515, %v507, 0
      %522 = vmatprep.subr.bf16.mxu0 0
      %523 = vmatpush1.bf16.xpose.msra.mxu0 %v520
      %524 = vmatprep.subr.bf16.mxu0 0
      %525 = vmatpush1.bf16.xpose.msra.mxu0 0
      %526 = vmatprep.subr.bf16.mxu0 0
      %527 = vmatpush1.bf16.xpose.msra.mxu0 0
      %528 = vmatprep.subr.bf16.mxu0 0
      %529 = vmatpush1.bf16.xpose.msra.mxu0 0
      %530 = vmatprep.subr.bf16.mxu0 0
      %531 = vmatpush1.bf16.xpose.msra.mxu0 0
      %532 = vmatprep.subr.bf16.mxu0 0
      %533 = vmatpush1.bf16.xpose.msra.mxu0 0
      %534 = vmatprep.subr.bf16.mxu0 0
      %535 = vmatpush1.bf16.xpose.msra.mxu0 0
      %536 = vmatprep.subr.bf16.mxu0 0
      %537 = vmatpush1.bf16.xpose.msra.mxu0 0
      %538 = vmatprep.subr.bf16.mxu0 0
      %539 = vmatpush1.bf16.xpose.msra.mxu0 0
      %540 = vmatprep.subr.bf16.mxu0 0
      %541 = vmatpush1.bf16.xpose.msra.mxu0 0
      %542 = vmatprep.subr.bf16.mxu0 0
      %543 = vmatpush1.bf16.xpose.msra.mxu0 0
      %544 = vmatprep.subr.bf16.mxu0 0
      %545 = vmatpush1.bf16.xpose.msra.mxu0 0
      %546 = vmatprep.subr.bf16.mxu0 0
      %547 = vmatpush1.bf16.xpose.msra.mxu0 0
      %548 = vmatprep.subr.bf16.mxu0 0
      %549 = vmatpush1.bf16.xpose.msra.mxu0 0
      %550 = vmatprep.subr.bf16.mxu0 0
      %551 = vmatpush1.bf16.xpose.msra.mxu0 0
      %552 = vmatprep.subr.bf16.mxu0 0
      %553 = vmatpush1.bf16.xpose.msra.mxu0 0
      %554 = vmatprep.mubr.bf16.mxu0 0
      %555 = vmatmul.mubr.bf16.gmra.mrb[0].mxu0 %v517
      %v556 = vpop.f32.mrb[0].mxu0
      %v557 = vadd.f32 0.0, %v556
      %v558 = vpop.f32.mrb[0].mxu0
      %v559 = vpop.f32.mrb[0].mxu0
      %v560 = vpop.f32.mrb[0].mxu0
      %561 = vdwg.mxu0
      %v563 = vsel %vm515, %v504, 0
      %v566 = vsel %vm515, %v508, 0
      %568 = vmatprep.subr.bf16.mxu0 0
      %569 = vmatpush1.bf16.xpose.msra.mxu0 %v566
      %570 = vmatprep.subr.bf16.mxu0 0
      %571 = vmatpush1.bf16.xpose.msra.mxu0 0
      %572 = vmatprep.subr.bf16.mxu0 0
      %573 = vmatpush1.bf16.xpose.msra.mxu0 0
      %574 = vmatprep.subr.bf16.mxu0 0
      %575 = vmatpush1.bf16.xpose.msra.mxu0 0
      %576 = vmatprep.subr.bf16.mxu0 0
      %577 = vmatpush1.bf16.xpose.msra.mxu0 0
      %578 = vmatprep.subr.bf16.mxu0 0
      %579 = vmatpush1.bf16.xpose.msra.mxu0 0
      %580 = vmatprep.subr.bf16.mxu0 0
      %581 = vmatpush1.bf16.xpose.msra.mxu0 0
      %582 = vmatprep.subr.bf16.mxu0 0
      %583 = vmatpush1.bf16.xpose.msra.mxu0 0
      %584 = vmatprep.subr.bf16.mxu0 0
      %585 = vmatpush1.bf16.xpose.msra.mxu0 0
      %586 = vmatprep.subr.bf16.mxu0 0
      %587 = vmatpush1.bf16.xpose.msra.mxu0 0
      %588 = vmatprep.subr.bf16.mxu0 0
      %589 = vmatpush1.bf16.xpose.msra.mxu0 0
      %590 = vmatprep.subr.bf16.mxu0 0
      %591 = vmatpush1.bf16.xpose.msra.mxu0 0
      %592 = vmatprep.subr.bf16.mxu0 0
      %593 = vmatpush1.bf16.xpose.msra.mxu0 0
      %594 = vmatprep.subr.bf16.mxu0 0
      %595 = vmatpush1.bf16.xpose.msra.mxu0 0
      %596 = vmatprep.subr.bf16.mxu0 0
      %597 = vmatpush1.bf16.xpose.msra.mxu0 0
      %598 = vmatprep.subr.bf16.mxu0 0
      %599 = vmatpush1.bf16.xpose.msra.mxu0 0
      %600 = vmatprep.mubr.bf16.mxu0 0
      %601 = vmatmul.mubr.bf16.gmra.mrb[0].mxu0 %v563
      %v602 = vpop.f32.mrb[0].mxu0
      %v603 = vadd.f32 0.0, %v602
      %v604 = vpop.f32.mrb[0].mxu0
      %v605 = vpop.f32.mrb[0].mxu0
      %v606 = vpop.f32.mrb[0].mxu0
      %607 = vdwg.mxu0
      %v609 = vsel %vm515, %v505, 0
      %v612 = vsel %vm515, %v509, 0
      %614 = vmatprep.subr.bf16.mxu0 0
      %615 = vmatpush1.bf16.xpose.msra.mxu0 %v612
      %616 = vmatprep.subr.bf16.mxu0 0
      %617 = vmatpush1.bf16.xpose.msra.mxu0 0
      %618 = vmatprep.subr.bf16.mxu0 0
      %619 = vmatpush1.bf16.xpose.msra.mxu0 0
      %620 = vmatprep.subr.bf16.mxu0 0
      %621 = vmatpush1.bf16.xpose.msra.mxu0 0
      %622 = vmatprep.subr.bf16.mxu0 0
      %623 = vmatpush1.bf16.xpose.msra.mxu0 0
      %624 = vmatprep.subr.bf16.mxu0 0
      %625 = vmatpush1.bf16.xpose.msra.mxu0 0
      %626 = vmatprep.subr.bf16.mxu0 0
      %627 = vmatpush1.bf16.xpose.msra.mxu0 0
      %628 = vmatprep.subr.bf16.mxu0 0
      %629 = vmatpush1.bf16.xpose.msra.mxu0 0
      %630 = vmatprep.subr.bf16.mxu0 0
      %631 = vmatpush1.bf16.xpose.msra.mxu0 0
      %632 = vmatprep.subr.bf16.mxu0 0
      %633 = vmatpush1.bf16.xpose.msra.mxu0 0
      %634 = vmatprep.subr.bf16.mxu0 0
      %635 = vmatpush1.bf16.xpose.msra.mxu0 0
      %636 = vmatprep.subr.bf16.mxu0 0
      %637 = vmatpush1.bf16.xpose.msra.mxu0 0
      %638 = vmatprep.subr.bf16.mxu0 0
      %639 = vmatpush1.bf16.xpose.msra.mxu0 0
      %640 = vmatprep.subr.bf16.mxu0 0
      %641 = vmatpush1.bf16.xpose.msra.mxu0 0
      %642 = vmatprep.subr.bf16.mxu0 0
      %643 = vmatpush1.bf16.xpose.msra.mxu0 0
      %644 = vmatprep.subr.bf16.mxu0 0
      %645 = vmatpush1.bf16.xpose.msra.mxu0 0
      %646 = vmatprep.mubr.bf16.mxu0 0
      %647 = vmatmul.mubr.bf16.gmra.mrb[0].mxu0 %v609
      %v648 = vpop.f32.mrb[0].mxu0
      %v649 = vadd.f32 0.0, %v648
      %v650 = vpop.f32.mrb[0].mxu0
      %v651 = vpop.f32.mrb[0].mxu0
      %v652 = vpop.f32.mrb[0].mxu0
      %653 = vdwg.mxu0
      %v655 = vsel %vm515, %v506, 0
      %v658 = vsel %vm515, %v510, 0
      %660 = vmatprep.subr.bf16.mxu0 0
      %661 = vmatpush1.bf16.xpose.msra.mxu0 %v658
      %662 = vmatprep.subr.bf16.mxu0 0
      %663 = vmatpush1.bf16.xpose.msra.mxu0 0
      %664 = vmatprep.subr.bf16.mxu0 0
      %665 = vmatpush1.bf16.xpose.msra.mxu0 0
      %666 = vmatprep.subr.bf16.mxu0 0
      %667 = vmatpush1.bf16.xpose.msra.mxu0 0
      %668 = vmatprep.subr.bf16.mxu0 0
      %669 = vmatpush1.bf16.xpose.msra.mxu0 0
      %670 = vmatprep.subr.bf16.mxu0 0
      %671 = vmatpush1.bf16.xpose.msra.mxu0 0
      %672 = vmatprep.subr.bf16.mxu0 0
      %673 = vmatpush1.bf16.xpose.msra.mxu0 0
      %674 = vmatprep.subr.bf16.mxu0 0
      %675 = vmatpush1.bf16.xpose.msra.mxu0 0
      %676 = vmatprep.subr.bf16.mxu0 0
      %677 = vmatpush1.bf16.xpose.msra.mxu0 0
      %678 = vmatprep.subr.bf16.mxu0 0
      %679 = vmatpush1.bf16.xpose.msra.mxu0 0
      %680 = vmatprep.subr.bf16.mxu0 0
      %681 = vmatpush1.bf16.xpose.msra.mxu0 0
      %682 = vmatprep.subr.bf16.mxu0 0
      %683 = vmatpush1.bf16.xpose.msra.mxu0 0
      %684 = vmatprep.subr.bf16.mxu0 0
      %685 = vmatpush1.bf16.xpose.msra.mxu0 0
      %686 = vmatprep.subr.bf16.mxu0 0
      %687 = vmatpush1.bf16.xpose.msra.mxu0 0
      %688 = vmatprep.subr.bf16.mxu0 0
      %689 = vmatpush1.bf16.xpose.msra.mxu0 0
      %690 = vmatprep.subr.bf16.mxu0 0
      %691 = vmatpush1.bf16.xpose.msra.mxu0 0
      %692 = vmatprep.mubr.bf16.mxu0 0
      %693 = vmatmul.mubr.bf16.gmra.mrb[0].mxu0 %v655
      %v694 = vpop.f32.mrb[0].mxu0
      %v695 = vadd.f32 0.0, %v694
      %v696 = vpop.f32.mrb[0].mxu0
      %v697 = vpop.f32.mrb[0].mxu0
      %v698 = vpop.f32.mrb[0].mxu0
      %699 = vdwg.mxu0
      %v700 = vmul.f32 %v557, 0.35355338
      %v701 = vmul.f32 %v603, 0.35355338
      %v702 = vmul.f32 %v649, 0.35355338
      %v703 = vmul.f32 %v695, 0.35355338
      %v704 = vld [vmem:[%s490] sm:$0xff]
      %v705 = vld [vmem:[%s494] sm:$0xff]
      %vm706 = vcmask 39936
      %v708 = vsel %vm706, %v704, 0
      %v711 = vsel %vm706, %v705, 0
      %713 = vmatprep.subr.mxu0 0.0
      %714 = vmatpush1.xpose.msra.mxu0 %v711
      %715 = vmatprep.subr.mxu0 0.0
      %716 = vmatpush1.xpose.msra.mxu0 0.0
      %717 = vmatprep.subr.mxu0 0.0
      %718 = vmatpush1.xpose.msra.mxu0 0.0
      %719 = vmatprep.subr.mxu0 0.0
      %720 = vmatpush1.xpose.msra.mxu0 0.0
      %721 = vmatprep.subr.mxu0 0.0
      %722 = vmatpush1.xpose.msra.mxu0 0.0
      %723 = vmatprep.subr.mxu0 0.0
      %724 = vmatpush1.xpose.msra.mxu0 0.0
      %725 = vmatprep.subr.mxu0 0.0
      %726 = vmatpush1.xpose.msra.mxu0 0.0
      %727 = vmatprep.subr.mxu0 0.0
      %728 = vmatpush1.xpose.msra.mxu0 0.0
      %729 = vmatprep.subr.mxu0 0.0
      %730 = vmatpush1.xpose.msra.mxu0 0.0
      %731 = vmatprep.subr.mxu0 0.0
      %732 = vmatpush1.xpose.msra.mxu0 0.0
      %733 = vmatprep.subr.mxu0 0.0
      %734 = vmatpush1.xpose.msra.mxu0 0.0
      %735 = vmatprep.subr.mxu0 0.0
      %736 = vmatpush1.xpose.msra.mxu0 0.0
      %737 = vmatprep.subr.mxu0 0.0
      %738 = vmatpush1.xpose.msra.mxu0 0.0
      %739 = vmatprep.subr.mxu0 0.0
      %740 = vmatpush1.xpose.msra.mxu0 0.0
      %741 = vmatprep.subr.mxu0 0.0
      %742 = vmatpush1.xpose.msra.mxu0 0.0
      %743 = vmatprep.subr.mxu0 0.0
      %744 = vmatpush1.xpose.msra.mxu0 0.0
      %745 = vmatprep.subr.mxu0 0.0
      %746 = vmatpush1.xpose.msra.mxu0 0.0
      %747 = vmatprep.subr.mxu0 0.0
      %748 = vmatpush1.xpose.msra.mxu0 0.0
      %749 = vmatprep.subr.mxu0 0.0
      %750 = vmatpush1.xpose.msra.mxu0 0.0
      %751 = vmatprep.subr.mxu0 0.0
      %752 = vmatpush1.xpose.msra.mxu0 0.0
      %753 = vmatprep.subr.mxu0 0.0
      %754 = vmatpush1.xpose.msra.mxu0 0.0
      %755 = vmatprep.subr.mxu0 0.0
      %756 = vmatpush1.xpose.msra.mxu0 0.0
      %757 = vmatprep.subr.mxu0 0.0
      %758 = vmatpush1.xpose.msra.mxu0 0.0
      %759 = vmatprep.subr.mxu0 0.0
      %760 = vmatpush1.xpose.msra.mxu0 0.0
      %761 = vmatprep.subr.mxu0 0.0
      %762 = vmatpush1.xpose.msra.mxu0 0.0
      %763 = vmatprep.subr.mxu0 0.0
      %764 = vmatpush1.xpose.msra.mxu0 0.0
      %765 = vmatprep.subr.mxu0 0.0
      %766 = vmatpush1.xpose.msra.mxu0 0.0
      %767 = vmatprep.subr.mxu0 0.0
      %768 = vmatpush1.xpose.msra.mxu0 0.0
      %769 = vmatprep.subr.mxu0 0.0
      %770 = vmatpush1.xpose.msra.mxu0 0.0
      %771 = vmatprep.subr.mxu0 0.0
      %772 = vmatpush1.xpose.msra.mxu0 0.0
      %773 = vmatprep.subr.mxu0 0.0
      %774 = vmatpush1.xpose.msra.mxu0 0.0
      %775 = vmatprep.subr.mxu0 0.0
      %776 = vmatpush1.xpose.msra.mxu0 0.0
      %777 = vmatprep.mubr.f32.mxu0 0.0
      %778 = vmatmul.mubr.f32.gmra.mrb[0].mxu0 %v708
      %v779 = vpop.f32.mrb[0].mxu0
      %v780 = vadd.f32 0.0, %v779
      %v781 = vpop.f32.mrb[0].mxu0
      %782 = vdwg.mxu0
      %vm783 = vcmp.ge.f32.partialorder %v780, 0.25
      %v784 = vsel %vm783, -1e+30, 0.0
      %v785 = vadd.f32 %v700, %v784
      %v786 = vadd.f32 %v701, %v784
      %v787 = vadd.f32 %v702, %v784
      %v788 = vadd.f32 %v703, %v784
      %v789 = vsel %vm515, %v785, -inf
      %790 = vmax.xlane.f32.xlu0 %v789
      %v791 = vpop.xlane.xlu0 %790
      %v792 = vsel %vm515, %v786, -inf
      %793 = vmax.xlane.f32.xlu0 %v792
      %v794 = vpop.xlane.xlu0 %793
      %v795 = vsel %vm515, %v787, -inf
      %796 = vmax.xlane.f32.xlu0 %v795
      %v797 = vpop.xlane.xlu0 %796
      %v798 = vsel %vm515, %v788, -inf
      %799 = vmax.xlane.f32.xlu0 %v798
      %v800 = vpop.xlane.xlu0 %799
      %v801 = vsub.f32 %v785, %v791
      %v802 = vsub.f32 %v786, %v794
      %v803 = vsub.f32 %v787, %v797
      %v804 = vsub.f32 %v788, %v800
      %v805 = vmul.f32 %v801, 1.442695
      %v806 = vpow.pop %v805
      %v807 = vmul.f32 %v802, 1.442695
      %v808 = vpow.pop %v807
      %v809 = vmul.f32 %v803, 1.442695
      %v810 = vpow.pop %v809
      %v811 = vmul.f32 %v804, 1.442695
      %v812 = vpow.pop %v811
      %v813 = vsel %vm515, %v806, 0.0
      %814 = vadd.xlane.f32.xlu0 %v813
      %v815 = vpop.xlane.xlu0 %814
      %v816 = vsel %vm515, %v808, 0.0
      %817 = vadd.xlane.f32.xlu0 %v816
      %v818 = vpop.xlane.xlu0 %817
      %v819 = vsel %vm515, %v810, 0.0
      %820 = vadd.xlane.f32.xlu0 %v819
      %v821 = vpop.xlane.xlu0 %820
      %v822 = vsel %vm515, %v812, 0.0
      %823 = vadd.xlane.f32.xlu0 %v822
      %v824 = vpop.xlane.xlu0 %823
      %v825 = vrcp.pop %v815
      %v826 = vrcp.pop %v818
      %v827 = vrcp.pop %v821
      %v828 = vrcp.pop %v824
      %v829 = vmul.f32 %v806, %v825
      %v830 = vmul.f32 %v808, %v826
      %v831 = vmul.f32 %v810, %v827
      %v832 = vmul.f32 %v812, %v828
      %v833 = vpack.c.bf16 %v829, %v829
      %v834 = vpack.c.bf16 %v830, %v830
      %v835 = vpack.c.bf16 %v831, %v831
      %v836 = vpack.c.bf16 %v832, %v832
      %v838 = vsel %vm515, %v833, 0
      %vm840 = vcmask 1043456
      %v842 = vsel %vm840, %v511, 0
      %844 = vmatprep.subr.bf16.mxu0 0
      %845 = vmatpush1.bf16.msra.mxu0 %v842
      %846 = vmatprep.subr.bf16.mxu0 0
      %847 = vmatpush1.bf16.msra.mxu0 0
      %848 = vmatprep.subr.bf16.mxu0 0
      %849 = vmatpush1.bf16.msra.mxu0 0
      %850 = vmatprep.subr.bf16.mxu0 0
      %851 = vmatpush1.bf16.msra.mxu0 0
      %852 = vmatprep.subr.bf16.mxu0 0
      %853 = vmatpush1.bf16.msra.mxu0 0
      %854 = vmatprep.subr.bf16.mxu0 0
      %855 = vmatpush1.bf16.msra.mxu0 0
      %856 = vmatprep.subr.bf16.mxu0 0
      %857 = vmatpush1.bf16.msra.mxu0 0
      %858 = vmatprep.subr.bf16.mxu0 0
      %859 = vmatpush1.bf16.msra.mxu0 0
      %860 = vmatprep.subr.bf16.mxu0 0
      %861 = vmatpush1.bf16.msra.mxu0 0
      %862 = vmatprep.subr.bf16.mxu0 0
      %863 = vmatpush1.bf16.msra.mxu0 0
      %864 = vmatprep.subr.bf16.mxu0 0
      %865 = vmatpush1.bf16.msra.mxu0 0
      %866 = vmatprep.subr.bf16.mxu0 0
      %867 = vmatpush1.bf16.msra.mxu0 0
      %868 = vmatprep.subr.bf16.mxu0 0
      %869 = vmatpush1.bf16.msra.mxu0 0
      %870 = vmatprep.subr.bf16.mxu0 0
      %871 = vmatpush1.bf16.msra.mxu0 0
      %872 = vmatprep.subr.bf16.mxu0 0
      %873 = vmatpush1.bf16.msra.mxu0 0
      %874 = vmatprep.subr.bf16.mxu0 0
      %875 = vmatpush1.bf16.msra.mxu0 0
      %876 = vmatprep.mubr.bf16.mxu0 0
      %877 = vmatmul.mubr.bf16.gmra.mrb[0].mxu0 %v838
      %v878 = vpop.f32.mrb[0].mxu0
      %v879 = vadd.f32 0.0, %v878
      %v880 = vpop.f32.mrb[0].mxu0
      %v881 = vpop.f32.mrb[0].mxu0
      %v882 = vpop.f32.mrb[0].mxu0
      %883 = vdwg.mxu0
      %v885 = vsel %vm515, %v834, 0
      %v888 = vsel %vm840, %v512, 0
      %890 = vmatprep.subr.bf16.mxu0 0
      %891 = vmatpush1.bf16.msra.mxu0 %v888
      %892 = vmatprep.subr.bf16.mxu0 0
      %893 = vmatpush1.bf16.msra.mxu0 0
      %894 = vmatprep.subr.bf16.mxu0 0
      %895 = vmatpush1.bf16.msra.mxu0 0
      %896 = vmatprep.subr.bf16.mxu0 0
      %897 = vmatpush1.bf16.msra.mxu0 0
      %898 = vmatprep.subr.bf16.mxu0 0
      %899 = vmatpush1.bf16.msra.mxu0 0
      %900 = vmatprep.subr.bf16.mxu0 0
      %901 = vmatpush1.bf16.msra.mxu0 0
      %902 = vmatprep.subr.bf16.mxu0 0
      %903 = vmatpush1.bf16.msra.mxu0 0
      %904 = vmatprep.subr.bf16.mxu0 0
      %905 = vmatpush1.bf16.msra.mxu0 0
      %906 = vmatprep.subr.bf16.mxu0 0
      %907 = vmatpush1.bf16.msra.mxu0 0
      %908 = vmatprep.subr.bf16.mxu0 0
      %909 = vmatpush1.bf16.msra.mxu0 0
      %910 = vmatprep.subr.bf16.mxu0 0
      %911 = vmatpush1.bf16.msra.mxu0 0
      %912 = vmatprep.subr.bf16.mxu0 0
      %913 = vmatpush1.bf16.msra.mxu0 0
      %914 = vmatprep.subr.bf16.mxu0 0
      %915 = vmatpush1.bf16.msra.mxu0 0
      %916 = vmatprep.subr.bf16.mxu0 0
      %917 = vmatpush1.bf16.msra.mxu0 0
      %918 = vmatprep.subr.bf16.mxu0 0
      %919 = vmatpush1.bf16.msra.mxu0 0
      %920 = vmatprep.subr.bf16.mxu0 0
      %921 = vmatpush1.bf16.msra.mxu0 0
      %922 = vmatprep.mubr.bf16.mxu0 0
      %923 = vmatmul.mubr.bf16.gmra.mrb[0].mxu0 %v885
      %v924 = vpop.f32.mrb[0].mxu0
      %v925 = vadd.f32 0.0, %v924
      %v926 = vpop.f32.mrb[0].mxu0
      %v927 = vpop.f32.mrb[0].mxu0
      %v928 = vpop.f32.mrb[0].mxu0
      %929 = vdwg.mxu0
      %v931 = vsel %vm515, %v835, 0
      %v934 = vsel %vm840, %v513, 0
      %936 = vmatprep.subr.bf16.mxu0 0
      %937 = vmatpush1.bf16.msra.mxu0 %v934
      %938 = vmatprep.subr.bf16.mxu0 0
      %939 = vmatpush1.bf16.msra.mxu0 0
      %940 = vmatprep.subr.bf16.mxu0 0
      %941 = vmatpush1.bf16.msra.mxu0 0
      %942 = vmatprep.subr.bf16.mxu0 0
      %943 = vmatpush1.bf16.msra.mxu0 0
      %944 = vmatprep.subr.bf16.mxu0 0
      %945 = vmatpush1.bf16.msra.mxu0 0
      %946 = vmatprep.subr.bf16.mxu0 0
      %947 = vmatpush1.bf16.msra.mxu0 0
      %948 = vmatprep.subr.bf16.mxu0 0
      %949 = vmatpush1.bf16.msra.mxu0 0
      %950 = vmatprep.subr.bf16.mxu0 0
      %951 = vmatpush1.bf16.msra.mxu0 0
      %952 = vmatprep.subr.bf16.mxu0 0
      %953 = vmatpush1.bf16.msra.mxu0 0
      %954 = vmatprep.subr.bf16.mxu0 0
      %955 = vmatpush1.bf16.msra.mxu0 0
      %956 = vmatprep.subr.bf16.mxu0 0
      %957 = vmatpush1.bf16.msra.mxu0 0
      %958 = vmatprep.subr.bf16.mxu0 0
      %959 = vmatpush1.bf16.msra.mxu0 0
      %960 = vmatprep.subr.bf16.mxu0 0
      %961 = vmatpush1.bf16.msra.mxu0 0
      %962 = vmatprep.subr.bf16.mxu0 0
      %963 = vmatpush1.bf16.msra.mxu0 0
      %964 = vmatprep.subr.bf16.mxu0 0
      %965 = vmatpush1.bf16.msra.mxu0 0
      %966 = vmatprep.subr.bf16.mxu0 0
      %967 = vmatpush1.bf16.msra.mxu0 0
      %968 = vmatprep.mubr.bf16.mxu0 0
      %969 = vmatmul.mubr.bf16.gmra.mrb[0].mxu0 %v931
      %v970 = vpop.f32.mrb[0].mxu0
      %v971 = vadd.f32 0.0, %v970
      %v972 = vpop.f32.mrb[0].mxu0
      %v973 = vpop.f32.mrb[0].mxu0
      %v974 = vpop.f32.mrb[0].mxu0
      %975 = vdwg.mxu0
      %v977 = vsel %vm515, %v836, 0
      %v980 = vsel %vm840, %v514, 0
      %982 = vmatprep.subr.bf16.mxu0 0
      %983 = vmatpush1.bf16.msra.mxu0 %v980
      %984 = vmatprep.subr.bf16.mxu0 0
      %985 = vmatpush1.bf16.msra.mxu0 0
      %986 = vmatprep.subr.bf16.mxu0 0
      %987 = vmatpush1.bf16.msra.mxu0 0
      %988 = vmatprep.subr.bf16.mxu0 0
      %989 = vmatpush1.bf16.msra.mxu0 0
      %990 = vmatprep.subr.bf16.mxu0 0
      %991 = vmatpush1.bf16.msra.mxu0 0
      %992 = vmatprep.subr.bf16.mxu0 0
      %993 = vmatpush1.bf16.msra.mxu0 0
      %994 = vmatprep.subr.bf16.mxu0 0
      %995 = vmatpush1.bf16.msra.mxu0 0
      %996 = vmatprep.subr.bf16.mxu0 0
      %997 = vmatpush1.bf16.msra.mxu0 0
      %998 = vmatprep.subr.bf16.mxu0 0
      %999 = vmatpush1.bf16.msra.mxu0 0
      %1000 = vmatprep.subr.bf16.mxu0 0
      %1001 = vmatpush1.bf16.msra.mxu0 0
      %1002 = vmatprep.subr.bf16.mxu0 0
      %1003 = vmatpush1.bf16.msra.mxu0 0
      %1004 = vmatprep.subr.bf16.mxu0 0
      %1005 = vmatpush1.bf16.msra.mxu0 0
      %1006 = vmatprep.subr.bf16.mxu0 0
      %1007 = vmatpush1.bf16.msra.mxu0 0
      %1008 = vmatprep.subr.bf16.mxu0 0
      %1009 = vmatpush1.bf16.msra.mxu0 0
      %1010 = vmatprep.subr.bf16.mxu0 0
      %1011 = vmatpush1.bf16.msra.mxu0 0
      %1012 = vmatprep.subr.bf16.mxu0 0
      %1013 = vmatpush1.bf16.msra.mxu0 0
      %1014 = vmatprep.mubr.bf16.mxu0 0
      %1015 = vmatmul.mubr.bf16.gmra.mrb[0].mxu0 %v977
      %v1016 = vpop.f32.mrb[0].mxu0
      %v1017 = vadd.f32 0.0, %v1016
      %v1018 = vpop.f32.mrb[0].mxu0
      %v1019 = vpop.f32.mrb[0].mxu0
      %v1020 = vpop.f32.mrb[0].mxu0
      %1021 = vdwg.mxu0
      %v1022 = vpack.c.bf16 %v879, %v879
      %v1023 = vpack.c.bf16 %v925, %v925
      %v1024 = vpack.c.bf16 %v971, %v971
      %v1025 = vpack.c.bf16 %v1017, %v1017
      %v1026 = vld [vmem:[%s6] sm:$0xf]
      %v1027 = vld [vmem:[%s6 + $0x4] sm:$0xf]
      %v1028 = vld [vmem:[%s6 + $0x8] sm:$0xf]
      %v1029 = vld [vmem:[%s6 + $0xc] sm:$0xf]
      %v1031 = vsel %vm515, %v1022, 0
      %v1034 = vsel %vm840, %v1026, 0
      %1036 = vmatprep.subr.bf16.mxu0 0
      %1037 = vmatpush1.bf16.msra.mxu0 %v1034
      %1038 = vmatprep.subr.bf16.mxu0 0
      %1039 = vmatpush1.bf16.msra.mxu0 0
      %1040 = vmatprep.subr.bf16.mxu0 0
      %1041 = vmatpush1.bf16.msra.mxu0 0
      %1042 = vmatprep.subr.bf16.mxu0 0
      %1043 = vmatpush1.bf16.msra.mxu0 0
      %1044 = vmatprep.subr.bf16.mxu0 0
      %1045 = vmatpush1.bf16.msra.mxu0 0
      %1046 = vmatprep.subr.bf16.mxu0 0
      %1047 = vmatpush1.bf16.msra.mxu0 0
      %1048 = vmatprep.subr.bf16.mxu0 0
      %1049 = vmatpush1.bf16.msra.mxu0 0
      %1050 = vmatprep.subr.bf16.mxu0 0
      %1051 = vmatpush1.bf16.msra.mxu0 0
      %1052 = vmatprep.subr.bf16.mxu0 0
      %1053 = vmatpush1.bf16.msra.mxu0 0
      %1054 = vmatprep.subr.bf16.mxu0 0
      %1055 = vmatpush1.bf16.msra.mxu0 0
      %1056 = vmatprep.subr.bf16.mxu0 0
      %1057 = vmatpush1.bf16.msra.mxu0 0
      %1058 = vmatprep.subr.bf16.mxu0 0
      %1059 = vmatpush1.bf16.msra.mxu0 0
      %1060 = vmatprep.subr.bf16.mxu0 0
      %1061 = vmatpush1.bf16.msra.mxu0 0
      %1062 = vmatprep.subr.bf16.mxu0 0
      %1063 = vmatpush1.bf16.msra.mxu0 0
      %1064 = vmatprep.subr.bf16.mxu0 0
      %1065 = vmatpush1.bf16.msra.mxu0 0
      %1066 = vmatprep.subr.bf16.mxu0 0
      %1067 = vmatpush1.bf16.msra.mxu0 0
      %1068 = vmatprep.mubr.bf16.mxu0 0
      %1069 = vmatmul.mubr.bf16.gmra.mrb[0].mxu0 %v1031
      %v1070 = vpop.f32.mrb[0].mxu0
      %v1071 = vadd.f32 0.0, %v1070
      %v1072 = vpop.f32.mrb[0].mxu0
      %v1073 = vpop.f32.mrb[0].mxu0
      %v1074 = vpop.f32.mrb[0].mxu0
      %1075 = vdwg.mxu0
      %v1077 = vsel %vm515, %v1023, 0
      %v1080 = vsel %vm840, %v1027, 0
      %1082 = vmatprep.subr.bf16.mxu0 0
      %1083 = vmatpush1.bf16.msra.mxu0 %v1080
      %1084 = vmatprep.subr.bf16.mxu0 0
      %1085 = vmatpush1.bf16.msra.mxu0 0
      %1086 = vmatprep.subr.bf16.mxu0 0
      %1087 = vmatpush1.bf16.msra.mxu0 0
      %1088 = vmatprep.subr.bf16.mxu0 0
      %1089 = vmatpush1.bf16.msra.mxu0 0
      %1090 = vmatprep.subr.bf16.mxu0 0
      %1091 = vmatpush1.bf16.msra.mxu0 0
      %1092 = vmatprep.subr.bf16.mxu0 0
      %1093 = vmatpush1.bf16.msra.mxu0 0
      %1094 = vmatprep.subr.bf16.mxu0 0
      %1095 = vmatpush1.bf16.msra.mxu0 0
      %1096 = vmatprep.subr.bf16.mxu0 0
      %1097 = vmatpush1.bf16.msra.mxu0 0
      %1098 = vmatprep.subr.bf16.mxu0 0
      %1099 = vmatpush1.bf16.msra.mxu0 0
      %1100 = vmatprep.subr.bf16.mxu0 0
      %1101 = vmatpush1.bf16.msra.mxu0 0
      %1102 = vmatprep.subr.bf16.mxu0 0
      %1103 = vmatpush1.bf16.msra.mxu0 0
      %1104 = vmatprep.subr.bf16.mxu0 0
      %1105 = vmatpush1.bf16.msra.mxu0 0
      %1106 = vmatprep.subr.bf16.mxu0 0
      %1107 = vmatpush1.bf16.msra.mxu0 0
      %1108 = vmatprep.subr.bf16.mxu0 0
      %1109 = vmatpush1.bf16.msra.mxu0 0
      %1110 = vmatprep.subr.bf16.mxu0 0
      %1111 = vmatpush1.bf16.msra.mxu0 0
      %1112 = vmatprep.subr.bf16.mxu0 0
      %1113 = vmatpush1.bf16.msra.mxu0 0
      %1114 = vmatprep.mubr.bf16.mxu0 0
      %1115 = vmatmul.mubr.bf16.gmra.mrb[0].mxu0 %v1077
      %v1116 = vpop.f32.mrb[0].mxu0
      %v1117 = vadd.f32 0.0, %v1116
      %v1118 = vpop.f32.mrb[0].mxu0
      %v1119 = vpop.f32.mrb[0].mxu0
      %v1120 = vpop.f32.mrb[0].mxu0
      %1121 = vdwg.mxu0
      %v1123 = vsel %vm515, %v1024, 0
      %v1126 = vsel %vm840, %v1028, 0
      %1128 = vmatprep.subr.bf16.mxu0 0
      %1129 = vmatpush1.bf16.msra.mxu0 %v1126
      %1130 = vmatprep.subr.bf16.mxu0 0
      %1131 = vmatpush1.bf16.msra.mxu0 0
      %1132 = vmatprep.subr.bf16.mxu0 0
      %1133 = vmatpush1.bf16.msra.mxu0 0
      %1134 = vmatprep.subr.bf16.mxu0 0
      %1135 = vmatpush1.bf16.msra.mxu0 0
      %1136 = vmatprep.subr.bf16.mxu0 0
      %1137 = vmatpush1.bf16.msra.mxu0 0
      %1138 = vmatprep.subr.bf16.mxu0 0
      %1139 = vmatpush1.bf16.msra.mxu0 0
      %1140 = vmatprep.subr.bf16.mxu0 0
      %1141 = vmatpush1.bf16.msra.mxu0 0
      %1142 = vmatprep.subr.bf16.mxu0 0
      %1143 = vmatpush1.bf16.msra.mxu0 0
      %1144 = vmatprep.subr.bf16.mxu0 0
      %1145 = vmatpush1.bf16.msra.mxu0 0
      %1146 = vmatprep.subr.bf16.mxu0 0
      %1147 = vmatpush1.bf16.msra.mxu0 0
      %1148 = vmatprep.subr.bf16.mxu0 0
      %1149 = vmatpush1.bf16.msra.mxu0 0
      %1150 = vmatprep.subr.bf16.mxu0 0
      %1151 = vmatpush1.bf16.msra.mxu0 0
      %1152 = vmatprep.subr.bf16.mxu0 0
      %1153 = vmatpush1.bf16.msra.mxu0 0
      %1154 = vmatprep.subr.bf16.mxu0 0
      %1155 = vmatpush1.bf16.msra.mxu0 0
      %1156 = vmatprep.subr.bf16.mxu0 0
      %1157 = vmatpush1.bf16.msra.mxu0 0
      %1158 = vmatprep.subr.bf16.mxu0 0
      %1159 = vmatpush1.bf16.msra.mxu0 0
      %1160 = vmatprep.mubr.bf16.mxu0 0
      %1161 = vmatmul.mubr.bf16.gmra.mrb[0].mxu0 %v1123
      %v1162 = vpop.f32.mrb[0].mxu0
      %v1163 = vadd.f32 0.0, %v1162
      %v1164 = vpop.f32.mrb[0].mxu0
      %v1165 = vpop.f32.mrb[0].mxu0
      %v1166 = vpop.f32.mrb[0].mxu0
      %1167 = vdwg.mxu0
      %v1169 = vsel %vm515, %v1025, 0
      %v1172 = vsel %vm840, %v1029, 0
      %1174 = vmatprep.subr.bf16.mxu0 0
      %1175 = vmatpush1.bf16.msra.mxu0 %v1172
      %1176 = vmatprep.subr.bf16.mxu0 0
      %1177 = vmatpush1.bf16.msra.mxu0 0
      %1178 = vmatprep.subr.bf16.mxu0 0
      %1179 = vmatpush1.bf16.msra.mxu0 0
      %1180 = vmatprep.subr.bf16.mxu0 0
      %1181 = vmatpush1.bf16.msra.mxu0 0
      %1182 = vmatprep.subr.bf16.mxu0 0
      %1183 = vmatpush1.bf16.msra.mxu0 0
      %1184 = vmatprep.subr.bf16.mxu0 0
      %1185 = vmatpush1.bf16.msra.mxu0 0
      %1186 = vmatprep.subr.bf16.mxu0 0
      %1187 = vmatpush1.bf16.msra.mxu0 0
      %1188 = vmatprep.subr.bf16.mxu0 0
      %1189 = vmatpush1.bf16.msra.mxu0 0
      %1190 = vmatprep.subr.bf16.mxu0 0
      %1191 = vmatpush1.bf16.msra.mxu0 0
      %1192 = vmatprep.subr.bf16.mxu0 0
      %1193 = vmatpush1.bf16.msra.mxu0 0
      %1194 = vmatprep.subr.bf16.mxu0 0
      %1195 = vmatpush1.bf16.msra.mxu0 0
      %1196 = vmatprep.subr.bf16.mxu0 0
      %1197 = vmatpush1.bf16.msra.mxu0 0
      %1198 = vmatprep.subr.bf16.mxu0 0
      %1199 = vmatpush1.bf16.msra.mxu0 0
      %1200 = vmatprep.subr.bf16.mxu0 0
      %1201 = vmatpush1.bf16.msra.mxu0 0
      %1202 = vmatprep.subr.bf16.mxu0 0
      %1203 = vmatpush1.bf16.msra.mxu0 0
      %1204 = vmatprep.subr.bf16.mxu0 0
      %1205 = vmatpush1.bf16.msra.mxu0 0
      %1206 = vmatprep.mubr.bf16.mxu0 0
      %1207 = vmatmul.mubr.bf16.gmra.mrb[0].mxu0 %v1169
      %v1208 = vpop.f32.mrb[0].mxu0
      %v1209 = vadd.f32 0.0, %v1208
      %v1210 = vpop.f32.mrb[0].mxu0
      %v1211 = vpop.f32.mrb[0].mxu0
      %v1212 = vpop.f32.mrb[0].mxu0
      %1213 = vdwg.mxu0
      %vm1214 = vcmask 261120
      %v1215 = vsel %vm1214, %v1071, 0.0
      %v1216 = vsel %vm1214, %v1117, 0.0
      %v1217 = vadd.f32 %v1215, %v1216
      %v1218 = vsel %vm1214, %v1163, 0.0
      %v1219 = vadd.f32 %v1217, %v1218
      %v1220 = vsel %vm1214, %v1209, 0.0
      %v1221 = vadd.f32 %v1219, %v1220
      %v1222 = vld [vmem:[%s7] sm:$0x1]
      %v1224 = vlaneseq
      %v1225 = vshrl.u32 %v1224, 7
      %v1226 = vsub.s32 0, %v1225
      %v1227 = vrot.slane %v1222, %v1226
      %v1229 = vadd.f32 %v1221, %v1227
      %v1230 = vld [vmem:[%s483] sm:$0xff]
      %v1231 = vadd.f32 %v1230, %v1229
      %v1232 = vld [vmem:[%s8] sm:$0x1]
      %v1233 = vld [vmem:[%s9] sm:$0x1]
      %v1234 = vsel %vm1214, %v1231, 0.0
      %1235 = vadd.xlane.f32.xlu0 %v1234
      %v1236 = vpop.xlane.xlu0 %1235
      %v1237 = vrcp.pop 32.0
      %v1238 = vmul.f32 %v1236, %v1237
      %v1239 = vsub.f32 %v1231, %v1238
      %v1240 = vmul.f32 %v1239, %v1239
      %v1241 = vsel %vm1214, %v1240, 0.0
      %1242 = vadd.xlane.f32.xlu0 %v1241
      %v1243 = vpop.xlane.xlu0 %1242
      %v1244 = vmul.f32 %v1243, %v1237
      %v1245 = vadd.f32 %v1244, 1e-05
      %v1246 = vrsqrt.pop %v1245
      %v1247 = vmul.f32 %v1239, %v1246
      %v1249 = vlaneseq
      %v1250 = vshrl.u32 %v1249, 7
      %v1251 = vsub.s32 0, %v1250
      %v1252 = vrot.slane %v1232, %v1251
      %v1254 = vmul.f32 %v1247, %v1252
      %v1256 = vlaneseq
      %v1257 = vshrl.u32 %v1256, 7
      %v1258 = vsub.s32 0, %v1257
      %v1259 = vrot.slane %v1233, %v1258
      %v1261 = vadd.f32 %v1254, %v1259
      %1262 = vst.msk [vmem:[%s501] sm:$0xff] %vm1214, %v1261
      %p1263 = scmp.lt.s32.totalorder %s25, 3
      %s1264 = scalar_select %p1263, %s25, 3
      %p1265 = scmp.lt.s32.totalorder %s26, 0
      %s1266 = scalar_select %p1265, %s26, 0
      %s1267 = sadd.s32 %s1266, %s1264
      %s1268 = smul.addr %s1267, 8
      %s1269 = scalar_lea.vmem %s10, %s1268
      // Predicated region
      $region61: #{_lambda_.20} parent=59 // pred_check
        %p1270 = pneg %p299
      $region62: #{_lambda_.20} parent=59 // pred_check_branch
        %1272 = sbr.rel (%p1270) target = $region64
      $region63: #{_lambda_.20} parent=59 // pred_region
        _
      $region64: #{_lambda_.20} parent=59 // pred_fallthru
        _
    $region60: #{_lambda_.20} parent=5 // pred_fallthru
      _
    %p1273 = scmp.le.s32.totalorder 2, %s16
    // Predicated region
    $region65: #{_lambda_.20} parent=5 // pred_check
      %p1274 = pneg %p1273
    $region66: #{_lambda_.20} parent=5 // pred_check_branch
      %1276 = sbr.rel (%p1274) target = $region68
    $region67: #{_lambda_.20} parent=5 // pred_region
      %s1277 = ssub.s32 %s16, 2
      // Predicated region
      $region69: #{_lambda_.20} parent=67 // pred_check
        %p1278 = pneg %p305
      $region70: #{_lambda_.20} parent=67 // pred_check_branch
        %1280 = sbr.rel (%p1278) target = $region72
      $region71: #{_lambda_.20} parent=67 // pred_region
        %p1281 = scmp.lt.s32.totalorder %s27, 3
        %s1282 = scalar_select %p1281, %s27, 3
        %p1283 = scmp.lt.s32.totalorder %s28, 0
        %s1284 = scalar_select %p1283, %s28, 0
        %s1285 = sadd.s32 %s1284, %s1282
        %s1286 = smul.addr %s1285, 8
        %s1287 = scalar_lea.vmem %s10, %s1286
      $region72: #{_lambda_.20} parent=67 // pred_fallthru
        _
    $region68: #{_lambda_.20} parent=5 // pred_fallthru
      _
  $region6: #{_lambda_.20} parent=0 // loop_footer
    %s20 = sadd.s32 1, %s16
  $region7: #{_lambda_.20} parent=0 // loop_footer_branch
    %15 = sbr.rel target = $region3
  $region8: #{_lambda_.20} parent=0 // loop_exit
    _

// kernel: _lambda_.33
$region0: #{_lambda_.33}
  #allocation0 [shape = 'u32[]', space=smem, size = 0x4, offset = 0x4, fixed_abs, tag = 'smem constant byte address 0x4 - core index']
  #allocation1 [shape = 'u32[144,128]{1,0:T(1,128)}', space=vmem, size = 0x12000, scoped, tag = 'internal scratch']
  %s0 = inlined_call_operand.vmem [shape: f32[16,32], index: 0, kind: input, shape index: {}]
  %s1 = inlined_call_operand.vmem [shape: f32[1,32], index: 1, kind: input, shape index: {}]
  %s2 = inlined_call_operand.vmem [shape: f32[1,32], index: 2, kind: input, shape index: {}]
  %s3 = inlined_call_operand.hbm [shape: f32[16,32], index: 3, kind: output, shape index: {}]
  %s4 = sld [smem:[#allocation0]]
  $region22: #{_lambda_.33} parent=0
    _
  %s6 = ssub.s32 1, %s4
  %s7 = scalar_select 0, %s6, %s4
  $region1: #{_lambda_.33} parent=0
    #allocation2 [shape = 'u8[8192]{0}', space=vmem, size = 0x2000, scoped, tag = 'output window, operand 0, single buffered']
    #allocation3 [shape = 's32[1]{0}', space=sflag, size = 0x4, scoped, tag = 'scoped memory for _lambda_.33']
    %8 = vsyncpa [#allocation3], 0
    // Predicated region
    $region2: #{_lambda_.33} parent=1 // pred_check
      _
    $region3: #{_lambda_.33} parent=1 // pred_check_branch
      %10 = sbr.rel (0) target = $region5
    $region4: #{_lambda_.33} parent=1 // pred_region
      _
    $region5: #{_lambda_.33} parent=1 // pred_fallthru
      _
    // Predicated region
    $region6: #{_lambda_.33} parent=1 // pred_check
      _
    $region7: #{_lambda_.33} parent=1 // pred_check_branch
      %12 = sbr.rel (0) target = $region9
    $region8: #{_lambda_.33} parent=1 // pred_region
      _
    $region9: #{_lambda_.33} parent=1 // pred_fallthru
      _
    // Predicated region
    $region10: #{_lambda_.33} parent=1 // pred_check
      _
    $region11: #{_lambda_.33} parent=1 // pred_check_branch
      %14 = sbr.rel (0) target = $region13
    $region12: #{_lambda_.33} parent=1 // pred_region
      _
    $region13: #{_lambda_.33} parent=1 // pred_fallthru
      _
    %v15 = vld [vmem:[%s0] sm:$0xff]
    %v16 = vld [vmem:[%s0 + $0x8] sm:$0xff]
    %v17 = vld [vmem:[%s1] sm:$0x1]
    %v18 = vld [vmem:[%s2] sm:$0x1]
    %vm19 = vcmask 261120
    %v20 = vsel %vm19, %v15, 0.0
    %21 = vadd.xlane.f32.xlu0 %v20
    %v22 = vpop.xlane.xlu0 %21
    %v23 = vsel %vm19, %v16, 0.0
    %24 = vadd.xlane.f32.xlu0 %v23
    %v25 = vpop.xlane.xlu0 %24
    %v26 = vrcp.pop 32.0
    %v27 = vmul.f32 %v22, %v26
    %v28 = vmul.f32 %v25, %v26
    %v29 = vsub.f32 %v15, %v27
    %v30 = vsub.f32 %v16, %v28
    %v31 = vmul.f32 %v29, %v29
    %v32 = vmul.f32 %v30, %v30
    %v33 = vsel %vm19, %v31, 0.0
    %34 = vadd.xlane.f32.xlu0 %v33
    %v35 = vpop.xlane.xlu0 %34
    %v36 = vsel %vm19, %v32, 0.0
    %37 = vadd.xlane.f32.xlu0 %v36
    %v38 = vpop.xlane.xlu0 %37
    %v39 = vmul.f32 %v35, %v26
    %v40 = vmul.f32 %v38, %v26
    %v41 = vadd.f32 %v39, 1e-05
    %v42 = vadd.f32 %v40, 1e-05
    %v43 = vrsqrt.pop %v41
    %v44 = vrsqrt.pop %v42
    %v45 = vmul.f32 %v29, %v43
    %v46 = vmul.f32 %v30, %v44
    %v48 = vlaneseq
    %v49 = vshrl.u32 %v48, 7
    %v50 = vsub.s32 0, %v49
    %v51 = vrot.slane %v17, %v50
    %v53 = vmul.f32 %v45, %v51
    %v54 = vmul.f32 %v46, %v51
    %v56 = vlaneseq
    %v57 = vshrl.u32 %v56, 7
    %v58 = vsub.s32 0, %v57
    %v59 = vrot.slane %v18, %v58
    %v61 = vadd.f32 %v53, %v59
    %v62 = vadd.f32 %v54, %v59
    %63 = vst.msk [vmem:[#allocation2] sm:$0xff] %vm19, %v61
    %64 = vst.msk [vmem:[#allocation2 + $0x8] sm:$0xff] %vm19, %v62
    // Predicated region
    $region14: #{_lambda_.33} parent=1 // pred_check
      _
    $region15: #{_lambda_.33} parent=1 // pred_check_branch
      %66 = sbr.rel (0) target = $region17
    $region16: #{_lambda_.33} parent=1 // pred_region
      %s68 = ssub.s32 256, 256
      %69 = vsyncadd [#allocation3], %s68
      %s70 = sshll.u32 [#allocation2], 4
      %s71 = int_to_ptr.vmem [resolvable:$true] %s70
      %76 = dma.vmem_to_hbm [thread:$0]  %s71, 256, %s3, [#allocation3], 128, 128, 8
    $region17: #{_lambda_.33} parent=1 // pred_fallthru
      _
    // Predicated region
    $region18: #{_lambda_.33} parent=1 // pred_check
      _
    $region19: #{_lambda_.33} parent=1 // pred_check_branch
      %78 = sbr.rel (0) target = $region21
    $region20: #{_lambda_.33} parent=1 // pred_region
      %79 = dma.done [#allocation3], 256
    $region21: #{_lambda_.33} parent=1 // pred_fallthru
      _
    %80 = vsyncpa [#allocation3], 1

// kernel: _lambda_.30
$region0: #{_lambda_.30}
  #allocation0 [shape = 'u32[]', space=smem, size = 0x4, offset = 0x4, fixed_abs, tag = 'smem constant byte address 0x4 - core index']
  #allocation1 [shape = 'u32[144,128]{1,0:T(1,128)}', space=vmem, size = 0x12000, scoped, tag = 'internal scratch']
  %s0 = inlined_call_operand.vmem [shape: bf16[4,4,8,8], index: 0, kind: input, shape index: {}]
  %s1 = inlined_call_operand.vmem [shape: bf16[4,4,8,8], index: 1, kind: input, shape index: {}]
  %s2 = inlined_call_operand.vmem [shape: bf16[4,4,8,8], index: 2, kind: input, shape index: {}]
  %s3 = inlined_call_operand.vmem [shape: f32[4,8,32], index: 3, kind: input, shape index: {}]
  %s4 = inlined_call_operand.vmem [shape: f32[4,8,5], index: 4, kind: input, shape index: {}]
  %s5 = inlined_call_operand.vmem [shape: f32[4,8,5], index: 5, kind: input, shape index: {}]
  %s6 = inlined_call_operand.vmem [shape: bf16[4,8,32], index: 6, kind: input, shape index: {}]
  %s7 = inlined_call_operand.vmem [shape: f32[1,32], index: 7, kind: input, shape index: {}, may-alias: {7,9}]
  %s8 = inlined_call_operand.vmem [shape: f32[1,32], index: 8, kind: input, shape index: {}]
  %s9 = inlined_call_operand.vmem [shape: f32[1,32], index: 9, kind: input, shape index: {}, may-alias: {7,9}]
  %s10 = inlined_call_operand.vmem [shape: f32[4,8,32], index: 10, kind: output, shape index: {}]
  %s11 = sld [smem:[#allocation0]]
  $region73: #{_lambda_.30} parent=0
    _
  %s13 = ssub.s32 1, %s11
  %s14 = scalar_select 0, %s13, %s11
  loop: start=0, step=1, limit=6
  $region2: #{_lambda_.30} parent=0 // loop_pre_header
    _
  $region3: #{_lambda_.30} parent=0 // loop_header
    %s16 = sphi 0, %s20
    %p17 = scmp.ge.s32.totalorder %s16, 6
    %s23 = sphi 0, %s35
    %s24 = sphi 0, %s31
    %s25 = sphi 0, %s23
    %s26 = sphi 0, %s24
    %s27 = sphi 0, %s25
    %s28 = sphi 0, %s26
    %s40 = sphi 0, %s42
    %s43 = sphi 0, %s40
    %s44 = sphi 0, %s43
    %s60 = sphi 0, %s44
    %s66 = sphi 0, %s68
    %s69 = sphi 0, %s66
    %s70 = sphi 0, %s69
    %s86 = sphi 0, %s70
    %s92 = sphi 0, %s94
    %s95 = sphi 0, %s92
    %s96 = sphi 0, %s95
    %s112 = sphi 0, %s96
    %s120 = sphi 0, %s122
    %s123 = sphi 0, %s120
    %s124 = sphi 0, %s123
    %s140 = sphi 0, %s124
    %s148 = sphi 0, %s150
    %s151 = sphi 0, %s148
    %s152 = sphi 0, %s151
    %s168 = sphi 0, %s152
    %s174 = sphi 0, %s176
    %s177 = sphi 0, %s174
    %s178 = sphi 0, %s177
    %s194 = sphi 0, %s178
    %s198 = sphi 0, %s198
    %s200 = sphi 0, %s198
    %s201 = sphi 0, %s200
    %s215 = sphi 0, %s201
    %s219 = sphi 0, %s219
    %s221 = sphi 0, %s219
    %s222 = sphi 0, %s221
    %s236 = sphi 0, %s222
    %s240 = sphi 0, %s240
    %s242 = sphi 0, %s240
    %s243 = sphi 0, %s242
    %s257 = sphi 0, %s243
    %s261 = sphi 0, %s261
    %s263 = sphi 0, %s261
    %s264 = sphi 0, %s263
    %s278 = sphi 0, %s264
    %s286 = sphi 0, %s288
    %s289 = sphi 0, %s286
    %s290 = sphi 0, %s289
    %s306 = sphi 0, %s290
  $region4: #{_lambda_.30} parent=0 // loop_header_branch
    %19 = sbr.rel (%p17) target = $region8
  $region5: #{_lambda_.30} parent=0 // loop_body
    %s21 = ssub.s32 %s16, 1
    %s22 = ssub.s32 %s16, 2
    %s29 = sadd.s32 1, %s24
    %p30 = scmp.ge.s32.totalorder %s29, 1
    %s31 = scalar_select %p30, 0, %s29
    %s32 = sadd.s32 1, %s23
    %s33 = scalar_select %p30, %s32, %s23
    %p34 = scmp.ge.s32.totalorder %s33, 4
    %s35 = scalar_select %p34, 0, %s33
    %s36 = ssub.s32 %s23, %s35
    %s37 = ssub.s32 %s24, %s31
    %s38 = sor.u32 %s36, %s37
    %p39 = scmp.eq.s32.totalorder %s38, 0
    %s41 = sadd.s32 %s40, 1
    %s42 = scalar_select %p39, %s40, %s41
    %p45 = pneg %p39
    %p46 = scmp.eq.s32.totalorder %s16, 3
    %p47 = por %p45, %p46
    %p48 = scmp.ne.s32.totalorder %s40, %s43
    %p49 = scmp.eq.s32.totalorder %s16, 0
    %p50 = por %p48, %p49
    %p51 = scmp.ne.s32.totalorder %s40, %s43
    %p52 = scmp.eq.s32.totalorder %s21, 3
    %p53 = por %p51, %p52
    %p54 = scmp.ne.s32.totalorder %s43, %s44
    %p55 = scmp.eq.s32.totalorder %s21, 0
    %p56 = por %p54, %p55
    %p57 = scmp.ne.s32.totalorder %s43, %s44
    %p58 = scmp.eq.s32.totalorder %s22, 3
    %p59 = por %p57, %p58
    %p61 = scmp.ne.s32.totalorder %s44, %s60
    %p62 = scmp.eq.s32.totalorder %s22, 0
    %p63 = por %p61, %p62
    %s64 = ssub.s32 %s23, %s35
    %p65 = scmp.eq.s32.totalorder %s64, 0
    %s67 = sadd.s32 %s66, 1
    %s68 = scalar_select %p65, %s66, %s67
    %p71 = pneg %p65
    %p72 = scmp.eq.s32.totalorder %s16, 3
    %p73 = por %p71, %p72
    %p74 = scmp.ne.s32.totalorder %s66, %s69
    %p75 = scmp.eq.s32.totalorder %s16, 0
    %p76 = por %p74, %p75
    %p77 = scmp.ne.s32.totalorder %s66, %s69
    %p78 = scmp.eq.s32.totalorder %s21, 3
    %p79 = por %p77, %p78
    %p80 = scmp.ne.s32.totalorder %s69, %s70
    %p81 = scmp.eq.s32.totalorder %s21, 0
    %p82 = por %p80, %p81
    %p83 = scmp.ne.s32.totalorder %s69, %s70
    %p84 = scmp.eq.s32.totalorder %s22, 3
    %p85 = por %p83, %p84
    %p87 = scmp.ne.s32.totalorder %s70, %s86
    %p88 = scmp.eq.s32.totalorder %s22, 0
    %p89 = por %p87, %p88
    %s90 = ssub.s32 %s23, %s35
    %p91 = scmp.eq.s32.totalorder %s90, 0
    %s93 = sadd.s32 %s92, 1
    %s94 = scalar_select %p91, %s92, %s93
    %p97 = pneg %p91
    %p98 = scmp.eq.s32.totalorder %s16, 3
    %p99 = por %p97, %p98
    %p100 = scmp.ne.s32.totalorder %s92, %s95
    %p101 = scmp.eq.s32.totalorder %s16, 0
    %p102 = por %p100, %p101
    %p103 = scmp.ne.s32.totalorder %s92, %s95
    %p104 = scmp.eq.s32.totalorder %s21, 3
    %p105 = por %p103, %p104
    %p106 = scmp.ne.s32.totalorder %s95, %s96
    %p107 = scmp.eq.s32.totalorder %s21, 0
    %p108 = por %p106, %p107
    %p109 = scmp.ne.s32.totalorder %s95, %s96
    %p110 = scmp.eq.s32.totalorder %s22, 3
    %p111 = por %p109, %p110
    %p113 = scmp.ne.s32.totalorder %s96, %s112
    %p114 = scmp.eq.s32.totalorder %s22, 0
    %p115 = por %p113, %p114
    %s116 = ssub.s32 %s23, %s35
    %s117 = ssub.s32 %s24, %s31
    %s118 = sor.u32 %s116, %s117
    %p119 = scmp.eq.s32.totalorder %s118, 0
    %s121 = sadd.s32 %s120, 1
    %s122 = scalar_select %p119, %s120, %s121
    %p125 = pneg %p119
    %p126 = scmp.eq.s32.totalorder %s16, 3
    %p127 = por %p125, %p126
    %p128 = scmp.ne.s32.totalorder %s120, %s123
    %p129 = scmp.eq.s32.totalorder %s16, 0
    %p130 = por %p128, %p129
    %p131 = scmp.ne.s32.totalorder %s120, %s123
    %p132 = scmp.eq.s32.totalorder %s21, 3
    %p133 = por %p131, %p132
    %p134 = scmp.ne.s32.totalorder %s123, %s124
    %p135 = scmp.eq.s32.totalorder %s21, 0
    %p136 = por %p134, %p135
    %p137 = scmp.ne.s32.totalorder %s123, %s124
    %p138 = scmp.eq.s32.totalorder %s22, 3
    %p139 = por %p137, %p138
    %p141 = scmp.ne.s32.totalorder %s124, %s140
    %p142 = scmp.eq.s32.totalorder %s22, 0
    %p143 = por %p141, %p142
    %s144 = ssub.s32 %s23, %s35
    %s145 = ssub.s32 %s24, %s31
    %s146 = sor.u32 %s144, %s145
    %p147 = scmp.eq.s32.totalorder %s146, 0
    %s149 = sadd.s32 %s148, 1
    %s150 = scalar_select %p147, %s148, %s149
    %p153 = pneg %p147
    %p154 = scmp.eq.s32.totalorder %s16, 3
    %p155 = por %p153, %p154
    %p156 = scmp.ne.s32.totalorder %s148, %s151
    %p157 = scmp.eq.s32.totalorder %s16, 0
    %p158 = por %p156, %p157
    %p159 = scmp.ne.s32.totalorder %s148, %s151
    %p160 = scmp.eq.s32.totalorder %s21, 3
    %p161 = por %p159, %p160
    %p162 = scmp.ne.s32.totalorder %s151, %s152
    %p163 = scmp.eq.s32.totalorder %s21, 0
    %p164 = por %p162, %p163
    %p165 = scmp.ne.s32.totalorder %s151, %s152
    %p166 = scmp.eq.s32.totalorder %s22, 3
    %p167 = por %p165, %p166
    %p169 = scmp.ne.s32.totalorder %s152, %s168
    %p170 = scmp.eq.s32.totalorder %s22, 0
    %p171 = por %p169, %p170
    %s172 = ssub.s32 %s23, %s35
    %p173 = scmp.eq.s32.totalorder %s172, 0
    %s175 = sadd.s32 %s174, 1
    %s176 = scalar_select %p173, %s174, %s175
    %p179 = pneg %p173
    %p180 = scmp.eq.s32.totalorder %s16, 3
    %p181 = por %p179, %p180
    %p182 = scmp.ne.s32.totalorder %s174, %s177
    %p183 = scmp.eq.s32.totalorder %s16, 0
    %p184 = por %p182, %p183
    %p185 = scmp.ne.s32.totalorder %s174, %s177
    %p186 = scmp.eq.s32.totalorder %s21, 3
    %p187 = por %p185, %p186
    %p188 = scmp.ne.s32.totalorder %s177, %s178
    %p189 = scmp.eq.s32.totalorder %s21, 0
    %p190 = por %p188, %p189
    %p191 = scmp.ne.s32.totalorder %s177, %s178
    %p192 = scmp.eq.s32.totalorder %s22, 3
    %p193 = por %p191, %p192
    %p195 = scmp.ne.s32.totalorder %s178, %s194
    %p196 = scmp.eq.s32.totalorder %s22, 0
    %p197 = por %p195, %p196
    %s199 = sadd.s32 %s198, 1
    %p202 = scmp.eq.s32.totalorder %s16, 3
    %p203 = scmp.ne.s32.totalorder %s198, %s200
    %p204 = scmp.eq.s32.totalorder %s16, 0
    %p205 = por %p203, %p204
    %p206 = scmp.ne.s32.totalorder %s198, %s200
    %p207 = scmp.eq.s32.totalorder %s21, 3
    %p208 = por %p206, %p207
    %p209 = scmp.ne.s32.totalorder %s200, %s201
    %p210 = scmp.eq.s32.totalorder %s21, 0
    %p211 = por %p209, %p210
    %p212 = scmp.ne.s32.totalorder %s200, %s201
    %p213 = scmp.eq.s32.totalorder %s22, 3
    %p214 = por %p212, %p213
    %p216 = scmp.ne.s32.totalorder %s201, %s215
    %p217 = scmp.eq.s32.totalorder %s22, 0
    %p218 = por %p216, %p217
    %s220 = sadd.s32 %s219, 1
    %p223 = scmp.eq.s32.totalorder %s16, 3
    %p224 = scmp.ne.s32.totalorder %s219, %s221
    %p225 = scmp.eq.s32.totalorder %s16, 0
    %p226 = por %p224, %p225
    %p227 = scmp.ne.s32.totalorder %s219, %s221
    %p228 = scmp.eq.s32.totalorder %s21, 3
    %p229 = por %p227, %p228
    %p230 = scmp.ne.s32.totalorder %s221, %s222
    %p231 = scmp.eq.s32.totalorder %s21, 0
    %p232 = por %p230, %p231
    %p233 = scmp.ne.s32.totalorder %s221, %s222
    %p234 = scmp.eq.s32.totalorder %s22, 3
    %p235 = por %p233, %p234
    %p237 = scmp.ne.s32.totalorder %s222, %s236
    %p238 = scmp.eq.s32.totalorder %s22, 0
    %p239 = por %p237, %p238
    %s241 = sadd.s32 %s240, 1
    %p244 = scmp.eq.s32.totalorder %s16, 3
    %p245 = scmp.ne.s32.totalorder %s240, %s242
    %p246 = scmp.eq.s32.totalorder %s16, 0
    %p247 = por %p245, %p246
    %p248 = scmp.ne.s32.totalorder %s240, %s242
    %p249 = scmp.eq.s32.totalorder %s21, 3
    %p250 = por %p248, %p249
    %p251 = scmp.ne.s32.totalorder %s242, %s243
    %p252 = scmp.eq.s32.totalorder %s21, 0
    %p253 = por %p251, %p252
    %p254 = scmp.ne.s32.totalorder %s242, %s243
    %p255 = scmp.eq.s32.totalorder %s22, 3
    %p256 = por %p254, %p255
    %p258 = scmp.ne.s32.totalorder %s243, %s257
    %p259 = scmp.eq.s32.totalorder %s22, 0
    %p260 = por %p258, %p259
    %s262 = sadd.s32 %s261, 1
    %p265 = scmp.eq.s32.totalorder %s16, 3
    %p266 = scmp.ne.s32.totalorder %s261, %s263
    %p267 = scmp.eq.s32.totalorder %s16, 0
    %p268 = por %p266, %p267
    %p269 = scmp.ne.s32.totalorder %s261, %s263
    %p270 = scmp.eq.s32.totalorder %s21, 3
    %p271 = por %p269, %p270
    %p272 = scmp.ne.s32.totalorder %s263, %s264
    %p273 = scmp.eq.s32.totalorder %s21, 0
    %p274 = por %p272, %p273
    %p275 = scmp.ne.s32.totalorder %s263, %s264
    %p276 = scmp.eq.s32.totalorder %s22, 3
    %p277 = por %p275, %p276
    %p279 = scmp.ne.s32.totalorder %s264, %s278
    %p280 = scmp.eq.s32.totalorder %s22, 0
    %p281 = por %p279, %p280
    %s282 = ssub.s32 %s23, %s35
    %s283 = ssub.s32 %s24, %s31
    %s284 = sor.u32 %s282, %s283
    %p285 = scmp.eq.s32.totalorder %s284, 0
    %s287 = sadd.s32 %s286, 1
    %s288 = scalar_select %p285, %s286, %s287
    %p291 = pneg %p285
    %p292 = scmp.eq.s32.totalorder %s16, 3
    %p293 = por %p291, %p292
    %p294 = scmp.ne.s32.totalorder %s286, %s289
    %p295 = scmp.eq.s32.totalorder %s16, 0
    %p296 = por %p294, %p295
    %p297 = scmp.ne.s32.totalorder %s286, %s289
    %p298 = scmp.eq.s32.totalorder %s21, 3
    %p299 = por %p297, %p298
    %p300 = scmp.ne.s32.totalorder %s289, %s290
    %p301 = scmp.eq.s32.totalorder %s21, 0
    %p302 = por %p300, %p301
    %p303 = scmp.ne.s32.totalorder %s289, %s290
    %p304 = scmp.eq.s32.totalorder %s22, 3
    %p305 = por %p303, %p304
    %p307 = scmp.ne.s32.totalorder %s290, %s306
    %p308 = scmp.eq.s32.totalorder %s22, 0
    %p309 = por %p307, %p308
    %p310 = scmp.le.s32.totalorder 1, %s16
    %p311 = scmp.lt.s32.totalorder %s16, 5
    %p312 = pnand %p310, %p311
    %p313 = pneg %p312
    // Predicated region
    $region9: #{_lambda_.30} parent=5 // pred_check
      _
    $region10: #{_lambda_.30} parent=5 // pred_check_branch
      %315 = sbr.rel (%p312) target = $region12
    $region11: #{_lambda_.30} parent=5 // pred_region
      %s316 = ssub.s32 %s16, 1
      // Predicated region
      $region13: #{_lambda_.30} parent=11 // pred_check
        %p317 = pneg %p211
      $region14: #{_lambda_.30} parent=11 // pred_check_branch
        %319 = sbr.rel (%p317) target = $region16
      $region15: #{_lambda_.30} parent=11 // pred_region
        _
      $region16: #{_lambda_.30} parent=11 // pred_fallthru
        _
      // Predicated region
      $region17: #{_lambda_.30} parent=11 // pred_check
        %p320 = pneg %p232
      $region18: #{_lambda_.30} parent=11 // pred_check_branch
        %322 = sbr.rel (%p320) target = $region20
      $region19: #{_lambda_.30} parent=11 // pred_region
        _
      $region20: #{_lambda_.30} parent=11 // pred_fallthru
        _
      // Predicated region
      $region21: #{_lambda_.30} parent=11 // pred_check
        %p323 = pneg %p253
      $region22: #{_lambda_.30} parent=11 // pred_check_branch
        %325 = sbr.rel (%p323) target = $region24
      $region23: #{_lambda_.30} parent=11 // pred_region
        _
      $region24: #{_lambda_.30} parent=11 // pred_fallthru
        _
      // Predicated region
      $region25: #{_lambda_.30} parent=11 // pred_check
        %p326 = pneg %p274
      $region26: #{_lambda_.30} parent=11 // pred_check_branch
        %328 = sbr.rel (%p326) target = $region28
      $region27: #{_lambda_.30} parent=11 // pred_region
        _
      $region28: #{_lambda_.30} parent=11 // pred_fallthru
        _
    $region12: #{_lambda_.30} parent=5 // pred_fallthru
      _
    %p329 = scmp.lt.s32.totalorder %s16, 4
    // Predicated region
    $region29: #{_lambda_.30} parent=5 // pred_check
      %p330 = pneg %p329
    $region30: #{_lambda_.30} parent=5 // pred_check_branch
      %332 = sbr.rel (%p330) target = $region32
    $region31: #{_lambda_.30} parent=5 // pred_region
      // Predicated region
      $region33: #{_lambda_.30} parent=31 // pred_check
        %p333 = pneg %p50
      $region34: #{_lambda_.30} parent=31 // pred_check_branch
        %335 = sbr.rel (%p333) target = $region36
      $region35: #{_lambda_.30} parent=31 // pred_region
        %p336 = scmp.lt.s32.totalorder %s23, 3
        %s337 = scalar_select %p336, %s23, 3
        %p338 = scmp.lt.s32.totalorder %s24, 0
        %s339 = scalar_select %p338, %s24, 0
        %s340 = smul.addr %s337, 4
        %s341 = sadd.s32 %s339, %s340
        %s342 = smul.addr %s341, 4
        %s343 = scalar_lea.vmem %s0, %s342
      $region36: #{_lambda_.30} parent=31 // pred_fallthru
        _
      // Predicated region
      $region37: #{_lambda_.30} parent=31 // pred_check
        %p344 = pneg %p76
      $region38: #{_lambda_.30} parent=31 // pred_check_branch
        %346 = sbr.rel (%p344) target = $region40
      $region39: #{_lambda_.30} parent=31 // pred_region
        %p347 = scmp.lt.s32.totalorder %s23, 3
        %s348 = scalar_select %p347, %s23, 3
        %s349 = smul.addr %s348, 4
        %s350 = smul.addr %s349, 4
        %s351 = scalar_lea.vmem %s1, %s350
      $region40: #{_lambda_.30} parent=31 // pred_fallthru
        _
      // Predicated region
      $region41: #{_lambda_.30} parent=31 // pred_check
        %p352 = pneg %p102
      $region42: #{_lambda_.30} parent=31 // pred_check_branch
        %354 = sbr.rel (%p352) target = $region44
      $region43: #{_lambda_.30} parent=31 // pred_region
        %p355 = scmp.lt.s32.totalorder %s23, 3
        %s356 = scalar_select %p355, %s23, 3
        %s357 = smul.addr %s356, 4
        %s358 = smul.addr %s357, 4
        %s359 = scalar_lea.vmem %s2, %s358
      $region44: #{_lambda_.30} parent=31 // pred_fallthru
        _
      // Predicated region
      $region45: #{_lambda_.30} parent=31 // pred_check
        %p360 = pneg %p130
      $region46: #{_lambda_.30} parent=31 // pred_check_branch
        %362 = sbr.rel (%p360) target = $region48
      $region47: #{_lambda_.30} parent=31 // pred_region
        %p363 = scmp.lt.s32.totalorder %s23, 3
        %s364 = scalar_select %p363, %s23, 3
        %p365 = scmp.lt.s32.totalorder %s24, 0
        %s366 = scalar_select %p365, %s24, 0
        %s367 = sadd.s32 %s366, %s364
        %s368 = smul.addr %s367, 8
        %s369 = scalar_lea.vmem %s3, %s368
      $region48: #{_lambda_.30} parent=31 // pred_fallthru
        _
      // Predicated region
      $region49: #{_lambda_.30} parent=31 // pred_check
        %p370 = pneg %p158
      $region50: #{_lambda_.30} parent=31 // pred_check_branch
        %372 = sbr.rel (%p370) target = $region52
      $region51: #{_lambda_.30} parent=31 // pred_region
        %p373 = scmp.lt.s32.totalorder %s23, 3
        %s374 = scalar_select %p373, %s23, 3
        %p375 = scmp.lt.s32.totalorder %s24, 0
        %s376 = scalar_select %p375, %s24, 0
        %s377 = sadd.s32 %s376, %s374
        %s378 = smul.addr %s377, 8
        %s379 = scalar_lea.vmem %s4, %s378
      $region52: #{_lambda_.30} parent=31 // pred_fallthru
        _
      // Predicated region
      $region53: #{_lambda_.30} parent=31 // pred_check
        %p380 = pneg %p184
      $region54: #{_lambda_.30} parent=31 // pred_check_branch
        %382 = sbr.rel (%p380) target = $region56
      $region55: #{_lambda_.30} parent=31 // pred_region
        %p383 = scmp.lt.s32.totalorder %s23, 3
        %s384 = scalar_select %p383, %s23, 3
        %s385 = smul.addr %s384, 8
        %s386 = scalar_lea.vmem %s5, %s385
      $region56: #{_lambda_.30} parent=31 // pred_fallthru
        _
    $region32: #{_lambda_.30} parent=5 // pred_fallthru
      _
    %p387 = scmp.le.s32.totalorder 1, %s16
    %p388 = scmp.lt.s32.totalorder %s16, 5
    %p389 = pnand %p387, %p388
    %p390 = pneg %p389
    // Predicated region
    $region57: #{_lambda_.30} parent=5 // pred_check
      _
    $region58: #{_lambda_.30} parent=5 // pred_check_branch
      %392 = sbr.rel (%p389) target = $region60
    $region59: #{_lambda_.30} parent=5 // pred_region
      %s393 = ssub.s32 %s16, 1
      %p394 = scmp.lt.s32.totalorder %s25, 3
      %s395 = scalar_select %p394, %s25, 3
      %p396 = scmp.lt.s32.totalorder %s26, 0
      %s397 = scalar_select %p396, %s26, 0
      %s398 = smul.addr %s395, 4
      %s399 = sadd.s32 %s397, %s398
      %s400 = smul.addr %s399, 4
      %s401 = scalar_lea.vmem %s0, %s400
      %p402 = pneg %p56
      %p403 = pneg %p53
      %p404 = scmp.lt.s32.totalorder %s25, 3
      %s405 = scalar_select %p404, %s25, 3
      %s406 = smul.addr %s405, 4
      %s407 = smul.addr %s406, 4
      %s408 = scalar_lea.vmem %s1, %s407
      %p409 = pneg %p82
      %p410 = pneg %p79
      %p411 = scmp.lt.s32.totalorder %s25, 3
      %s412 = scalar_select %p411, %s25, 3
      %s413 = smul.addr %s412, 4
      %s414 = smul.addr %s413, 4
      %s415 = scalar_lea.vmem %s2, %s414
      %p416 = pneg %p108
      %p417 = pneg %p105
      %p418 = scmp.lt.s32.totalorder %s25, 3
      %s419 = scalar_select %p418, %s25, 3
      %p420 = scmp.lt.s32.totalorder %s26, 0
      %s421 = scalar_select %p420, %s26, 0
      %s422 = sadd.s32 %s421, %s419
      %s423 = smul.addr %s422, 8
      %s424 = scalar_lea.vmem %s3, %s423
      %p425 = pneg %p136
      %p426 = pneg %p133
      %p427 = scmp.lt.s32.totalorder %s25, 3
      %s428 = scalar_select %p427, %s25, 3
      %p429 = scmp.lt.s32.totalorder %s26, 0
      %s430 = scalar_select %p429, %s26, 0
      %s431 = sadd.s32 %s430, %s428
      %s432 = smul.addr %s431, 8
      %s433 = scalar_lea.vmem %s4, %s432
      %p434 = pneg %p164
      %p435 = pneg %p161
      %p436 = scmp.lt.s32.totalorder %s25, 3
      %s437 = scalar_select %p436, %s25, 3
      %s438 = smul.addr %s437, 8
      %s439 = scalar_lea.vmem %s5, %s438
      %p440 = pneg %p190
      %p441 = pneg %p187
      %p442 = pneg %p211
      %p443 = pneg %p208
      %p444 = pneg %p232
      %p445 = pneg %p229
      %p446 = pneg %p253
      %p447 = pneg %p250
      %p448 = pneg %p274
      %p449 = pneg %p271
      %p450 = pneg %p302
      %p451 = pneg %p299
      %p452 = scmp.lt.s32.totalorder %s25, 3
      %s453 = scalar_select %p452, %s25, 3
      %p454 = scmp.lt.s32.totalorder %s26, 0
      %s455 = scalar_select %p454, %s26, 0
      %s456 = sadd.s32 %s455, %s453
      %s457 = smul.addr %s456, 8
      %s458 = scalar_lea.vmem %s10, %s457
      %p459 = scmp.lt.s32.totalorder %s25, 3
      %s460 = scalar_select %p459, %s25, 3
      %p461 = scmp.lt.s32.totalorder %s26, 0
      %s462 = scalar_select %p461, %s26, 0
      %s463 = smul.addr %s460, 4
      %s464 = sadd.s32 %s462, %s463
      %s465 = smul.addr %s464, 4
      %s466 = scalar_lea.vmem %s0, %s465
      %p467 = scmp.lt.s32.totalorder %s25, 3
      %s468 = scalar_select %p467, %s25, 3
      %s469 = smul.addr %s468, 4
      %s470 = smul.addr %s469, 4
      %s471 = scalar_lea.vmem %s1, %s470
      %p472 = scmp.lt.s32.totalorder %s25, 3
      %s473 = scalar_select %p472, %s25, 3
      %s474 = smul.addr %s473, 4
      %s475 = smul.addr %s474, 4
      %s476 = scalar_lea.vmem %s2, %s475
      %p477 = scmp.lt.s32.totalorder %s25, 3
      %s478 = scalar_select %p477, %s25, 3
      %p479 = scmp.lt.s32.totalorder %s26, 0
      %s480 = scalar_select %p479, %s26, 0
      %s481 = sadd.s32 %s480, %s478
      %s482 = smul.addr %s481, 8
      %s483 = scalar_lea.vmem %s3, %s482
      %p484 = scmp.lt.s32.totalorder %s25, 3
      %s485 = scalar_select %p484, %s25, 3
      %p486 = scmp.lt.s32.totalorder %s26, 0
      %s487 = scalar_select %p486, %s26, 0
      %s488 = sadd.s32 %s487, %s485
      %s489 = smul.addr %s488, 8
      %s490 = scalar_lea.vmem %s4, %s489
      %p491 = scmp.lt.s32.totalorder %s25, 3
      %s492 = scalar_select %p491, %s25, 3
      %s493 = smul.addr %s492, 8
      %s494 = scalar_lea.vmem %s5, %s493
      %p495 = scmp.lt.s32.totalorder %s25, 3
      %s496 = scalar_select %p495, %s25, 3
      %p497 = scmp.lt.s32.totalorder %s26, 0
      %s498 = scalar_select %p497, %s26, 0
      %s499 = sadd.s32 %s498, %s496
      %s500 = smul.addr %s499, 8
      %s501 = scalar_lea.vmem %s10, %s500
      %v503 = vld [vmem:[%s466] sm:$0xf]
      %v504 = vld [vmem:[%s466 + $0x4] sm:$0xf]
      %v505 = vld [vmem:[%s466 + $0x8] sm:$0xf]
      %v506 = vld [vmem:[%s466 + $0xc] sm:$0xf]
      %v507 = vld [vmem:[%s471] sm:$0xf]
      %v508 = vld [vmem:[%s471 + $0x4] sm:$0xf]
      %v509 = vld [vmem:[%s471 + $0x8] sm:$0xf]
      %v510 = vld [vmem:[%s471 + $0xc] sm:$0xf]
      %v511 = vld [vmem:[%s476] sm:$0xf]
      %v512 = vld [vmem:[%s476 + $0x4] sm:$0xf]
      %v513 = vld [vmem:[%s476 + $0x8] sm:$0xf]
      %v514 = vld [vmem:[%s476 + $0xc] sm:$0xf]
      %vm515 = vcmask 64512
      %v517 = vsel %vm515, %v503, 0
      %v520 = vsel %vm515, %v507, 0
      %522 = vmatprep.subr.bf16.mxu0 0
      %523 = vmatpush1.bf16.xpose.msra.mxu0 %v520
      %524 = vmatprep.subr.bf16.mxu0 0
      %525 = vmatpush1.bf16.xpose.msra.mxu0 0
      %526 = vmatprep.subr.bf16.mxu0 0
      %527 = vmatpush1.bf16.xpose.msra.mxu0 0
      %528 = vmatprep.subr.bf16.mxu0 0
      %529 = vmatpush1.bf16.xpose.msra.mxu0 0
      %530 = vmatprep.subr.bf16.mxu0 0
      %531 = vmatpush1.bf16.xpose.msra.mxu0 0
      %532 = vmatprep.subr.bf16.mxu0 0
      %533 = vmatpush1.bf16.xpose.msra.mxu0 0
      %534 = vmatprep.subr.bf16.mxu0 0
      %535 = vmatpush1.bf16.xpose.msra.mxu0 0
      %536 = vmatprep.subr.bf16.mxu0 0
      %537 = vmatpush1.bf16.xpose.msra.mxu0 0
      %538 = vmatprep.subr.bf16.mxu0 0
      %539 = vmatpush1.bf16.xpose.msra.mxu0 0
      %540 = vmatprep.subr.bf16.mxu0 0
      %541 = vmatpush1.bf16.xpose.msra.mxu0 0
      %542 = vmatprep.subr.bf16.mxu0 0
      %543 = vmatpush1.bf16.xpose.msra.mxu0 0
      %544 = vmatprep.subr.bf16.mxu0 0
      %545 = vmatpush1.bf16.xpose.msra.mxu0 0
      %546 = vmatprep.subr.bf16.mxu0 0
      %547 = vmatpush1.bf16.xpose.msra.mxu0 0
      %548 = vmatprep.subr.bf16.mxu0 0
      %549 = vmatpush1.bf16.xpose.msra.mxu0 0
      %550 = vmatprep.subr.bf16.mxu0 0
      %551 = vmatpush1.bf16.xpose.msra.mxu0 0
      %552 = vmatprep.subr.bf16.mxu0 0
      %553 = vmatpush1.bf16.xpose.msra.mxu0 0
      %554 = vmatprep.mubr.bf16.mxu0 0
      %555 = vmatmul.mubr.bf16.gmra.mrb[0].mxu0 %v517
      %v556 = vpop.f32.mrb[0].mxu0
      %v557 = vadd.f32 0.0, %v556
      %v558 = vpop.f32.mrb[0].mxu0
      %v559 = vpop.f32.mrb[0].mxu0
      %v560 = vpop.f32.mrb[0].mxu0
      %561 = vdwg.mxu0
      %v563 = vsel %vm515, %v504, 0
      %v566 = vsel %vm515, %v508, 0
      %568 = vmatprep.subr.bf16.mxu0 0
      %569 = vmatpush1.bf16.xpose.msra.mxu0 %v566
      %570 = vmatprep.subr.bf16.mxu0 0
      %571 = vmatpush1.bf16.xpose.msra.mxu0 0
      %572 = vmatprep.subr.bf16.mxu0 0
      %573 = vmatpush1.bf16.xpose.msra.mxu0 0
      %574 = vmatprep.subr.bf16.mxu0 0
      %575 = vmatpush1.bf16.xpose.msra.mxu0 0
      %576 = vmatprep.subr.bf16.mxu0 0
      %577 = vmatpush1.bf16.xpose.msra.mxu0 0
      %578 = vmatprep.subr.bf16.mxu0 0
      %579 = vmatpush1.bf16.xpose.msra.mxu0 0
      %580 = vmatprep.subr.bf16.mxu0 0
      %581 = vmatpush1.bf16.xpose.msra.mxu0 0
      %582 = vmatprep.subr.bf16.mxu0 0
      %583 = vmatpush1.bf16.xpose.msra.mxu0 0
      %584 = vmatprep.subr.bf16.mxu0 0
      %585 = vmatpush1.bf16.xpose.msra.mxu0 0
      %586 = vmatprep.subr.bf16.mxu0 0
      %587 = vmatpush1.bf16.xpose.msra.mxu0 0
      %588 = vmatprep.subr.bf16.mxu0 0
      %589 = vmatpush1.bf16.xpose.msra.mxu0 0
      %590 = vmatprep.subr.bf16.mxu0 0
      %591 = vmatpush1.bf16.xpose.msra.mxu0 0
      %592 = vmatprep.subr.bf16.mxu0 0
      %593 = vmatpush1.bf16.xpose.msra.mxu0 0
      %594 = vmatprep.subr.bf16.mxu0 0
      %595 = vmatpush1.bf16.xpose.msra.mxu0 0
      %596 = vmatprep.subr.bf16.mxu0 0
      %597 = vmatpush1.bf16.xpose.msra.mxu0 0
      %598 = vmatprep.subr.bf16.mxu0 0
      %599 = vmatpush1.bf16.xpose.msra.mxu0 0
      %600 = vmatprep.mubr.bf16.mxu0 0
      %601 = vmatmul.mubr.bf16.gmra.mrb[0].mxu0 %v563
      %v602 = vpop.f32.mrb[0].mxu0
      %v603 = vadd.f32 0.0, %v602
      %v604 = vpop.f32.mrb[0].mxu0
      %v605 = vpop.f32.mrb[0].mxu0
      %v606 = vpop.f32.mrb[0].mxu0
      %607 = vdwg.mxu0
      %v609 = vsel %vm515, %v505, 0
      %v612 = vsel %vm515, %v509, 0
      %614 = vmatprep.subr.bf16.mxu0 0
      %615 = vmatpush1.bf16.xpose.msra.mxu0 %v612
      %616 = vmatprep.subr.bf16.mxu0 0
      %617 = vmatpush1.bf16.xpose.msra.mxu0 0
      %618 = vmatprep.subr.bf16.mxu0 0
      %619 = vmatpush1.bf16.xpose.msra.mxu0 0
      %620 = vmatprep.subr.bf16.mxu0 0
      %621 = vmatpush1.bf16.xpose.msra.mxu0 0
      %622 = vmatprep.subr.bf16.mxu0 0
      %623 = vmatpush1.bf16.xpose.msra.mxu0 0
      %624 = vmatprep.subr.bf16.mxu0 0
      %625 = vmatpush1.bf16.xpose.msra.mxu0 0
      %626 = vmatprep.subr.bf16.mxu0 0
      %627 = vmatpush1.bf16.xpose.msra.mxu0 0
      %628 = vmatprep.subr.bf16.mxu0 0
      %629 = vmatpush1.bf16.xpose.msra.mxu0 0
      %630 = vmatprep.subr.bf16.mxu0 0
      %631 = vmatpush1.bf16.xpose.msra.mxu0 0
      %632 = vmatprep.subr.bf16.mxu0 0
      %633 = vmatpush1.bf16.xpose.msra.mxu0 0
      %634 = vmatprep.subr.bf16.mxu0 0
      %635 = vmatpush1.bf16.xpose.msra.mxu0 0
      %636 = vmatprep.subr.bf16.mxu0 0
      %637 = vmatpush1.bf16.xpose.msra.mxu0 0
      %638 = vmatprep.subr.bf16.mxu0 0
      %639 = vmatpush1.bf16.xpose.msra.mxu0 0
      %640 = vmatprep.subr.bf16.mxu0 0
      %641 = vmatpush1.bf16.xpose.msra.mxu0 0
      %642 = vmatprep.subr.bf16.mxu0 0
      %643 = vmatpush1.bf16.xpose.msra.mxu0 0
      %644 = vmatprep.subr.bf16.mxu0 0
      %645 = vmatpush1.bf16.xpose.msra.mxu0 0
      %646 = vmatprep.mubr.bf16.mxu0 0
      %647 = vmatmul.mubr.bf16.gmra.mrb[0].mxu0 %v609
      %v648 = vpop.f32.mrb[0].mxu0
      %v649 = vadd.f32 0.0, %v648
      %v650 = vpop.f32.mrb[0].mxu0
      %v651 = vpop.f32.mrb[0].mxu0
      %v652 = vpop.f32.mrb[0].mxu0
      %653 = vdwg.mxu0
      %v655 = vsel %vm515, %v506, 0
      %v658 = vsel %vm515, %v510, 0
      %660 = vmatprep.subr.bf16.mxu0 0
      %661 = vmatpush1.bf16.xpose.msra.mxu0 %v658
      %662 = vmatprep.subr.bf16.mxu0 0
      %663 = vmatpush1.bf16.xpose.msra.mxu0 0
      %664 = vmatprep.subr.bf16.mxu0 0
      %665 = vmatpush1.bf16.xpose.msra.mxu0 0
      %666 = vmatprep.subr.bf16.mxu0 0
      %667 = vmatpush1.bf16.xpose.msra.mxu0 0
      %668 = vmatprep.subr.bf16.mxu0 0
      %669 = vmatpush1.bf16.xpose.msra.mxu0 0
      %670 = vmatprep.subr.bf16.mxu0 0
      %671 = vmatpush1.bf16.xpose.msra.mxu0 0
      %672 = vmatprep.subr.bf16.mxu0 0
      %673 = vmatpush1.bf16.xpose.msra.mxu0 0
      %674 = vmatprep.subr.bf16.mxu0 0
      %675 = vmatpush1.bf16.xpose.msra.mxu0 0
      %676 = vmatprep.subr.bf16.mxu0 0
      %677 = vmatpush1.bf16.xpose.msra.mxu0 0
      %678 = vmatprep.subr.bf16.mxu0 0
      %679 = vmatpush1.bf16.xpose.msra.mxu0 0
      %680 = vmatprep.subr.bf16.mxu0 0
      %681 = vmatpush1.bf16.xpose.msra.mxu0 0
      %682 = vmatprep.subr.bf16.mxu0 0
      %683 = vmatpush1.bf16.xpose.msra.mxu0 0
      %684 = vmatprep.subr.bf16.mxu0 0
      %685 = vmatpush1.bf16.xpose.msra.mxu0 0
      %686 = vmatprep.subr.bf16.mxu0 0
      %687 = vmatpush1.bf16.xpose.msra.mxu0 0
      %688 = vmatprep.subr.bf16.mxu0 0
      %689 = vmatpush1.bf16.xpose.msra.mxu0 0
      %690 = vmatprep.subr.bf16.mxu0 0
      %691 = vmatpush1.bf16.xpose.msra.mxu0 0
      %692 = vmatprep.mubr.bf16.mxu0 0
      %693 = vmatmul.mubr.bf16.gmra.mrb[0].mxu0 %v655
      %v694 = vpop.f32.mrb[0].mxu0
      %v695 = vadd.f32 0.0, %v694
      %v696 = vpop.f32.mrb[0].mxu0
      %v697 = vpop.f32.mrb[0].mxu0
      %v698 = vpop.f32.mrb[0].mxu0
      %699 = vdwg.mxu0
      %v700 = vmul.f32 %v557, 0.35355338
      %v701 = vmul.f32 %v603, 0.35355338
      %v702 = vmul.f32 %v649, 0.35355338
      %v703 = vmul.f32 %v695, 0.35355338
      %v704 = vld [vmem:[%s490] sm:$0xff]
      %v705 = vld [vmem:[%s494] sm:$0xff]
      %vm706 = vcmask 39936
      %v708 = vsel %vm706, %v704, 0
      %v711 = vsel %vm706, %v705, 0
      %713 = vmatprep.subr.mxu0 0.0
      %714 = vmatpush1.xpose.msra.mxu0 %v711
      %715 = vmatprep.subr.mxu0 0.0
      %716 = vmatpush1.xpose.msra.mxu0 0.0
      %717 = vmatprep.subr.mxu0 0.0
      %718 = vmatpush1.xpose.msra.mxu0 0.0
      %719 = vmatprep.subr.mxu0 0.0
      %720 = vmatpush1.xpose.msra.mxu0 0.0
      %721 = vmatprep.subr.mxu0 0.0
      %722 = vmatpush1.xpose.msra.mxu0 0.0
      %723 = vmatprep.subr.mxu0 0.0
      %724 = vmatpush1.xpose.msra.mxu0 0.0
      %725 = vmatprep.subr.mxu0 0.0
      %726 = vmatpush1.xpose.msra.mxu0 0.0
      %727 = vmatprep.subr.mxu0 0.0
      %728 = vmatpush1.xpose.msra.mxu0 0.0
      %729 = vmatprep.subr.mxu0 0.0
      %730 = vmatpush1.xpose.msra.mxu0 0.0
      %731 = vmatprep.subr.mxu0 0.0
      %732 = vmatpush1.xpose.msra.mxu0 0.0
      %733 = vmatprep.subr.mxu0 0.0
      %734 = vmatpush1.xpose.msra.mxu0 0.0
      %735 = vmatprep.subr.mxu0 0.0
      %736 = vmatpush1.xpose.msra.mxu0 0.0
      %737 = vmatprep.subr.mxu0 0.0
      %738 = vmatpush1.xpose.msra.mxu0 0.0
      %739 = vmatprep.subr.mxu0 0.0
      %740 = vmatpush1.xpose.msra.mxu0 0.0
      %741 = vmatprep.subr.mxu0 0.0
      %742 = vmatpush1.xpose.msra.mxu0 0.0
      %743 = vmatprep.subr.mxu0 0.0
      %744 = vmatpush1.xpose.msra.mxu0 0.0
      %745 = vmatprep.subr.mxu0 0.0
      %746 = vmatpush1.xpose.msra.mxu0 0.0
      %747 = vmatprep.subr.mxu0 0.0
      %748 = vmatpush1.xpose.msra.mxu0 0.0
      %749 = vmatprep.subr.mxu0 0.0
      %750 = vmatpush1.xpose.msra.mxu0 0.0
      %751 = vmatprep.subr.mxu0 0.0
      %752 = vmatpush1.xpose.msra.mxu0 0.0
      %753 = vmatprep.subr.mxu0 0.0
      %754 = vmatpush1.xpose.msra.mxu0 0.0
      %755 = vmatprep.subr.mxu0 0.0
      %756 = vmatpush1.xpose.msra.mxu0 0.0
      %757 = vmatprep.subr.mxu0 0.0
      %758 = vmatpush1.xpose.msra.mxu0 0.0
      %759 = vmatprep.subr.mxu0 0.0
      %760 = vmatpush1.xpose.msra.mxu0 0.0
      %761 = vmatprep.subr.mxu0 0.0
      %762 = vmatpush1.xpose.msra.mxu0 0.0
      %763 = vmatprep.subr.mxu0 0.0
      %764 = vmatpush1.xpose.msra.mxu0 0.0
      %765 = vmatprep.subr.mxu0 0.0
      %766 = vmatpush1.xpose.msra.mxu0 0.0
      %767 = vmatprep.subr.mxu0 0.0
      %768 = vmatpush1.xpose.msra.mxu0 0.0
      %769 = vmatprep.subr.mxu0 0.0
      %770 = vmatpush1.xpose.msra.mxu0 0.0
      %771 = vmatprep.subr.mxu0 0.0
      %772 = vmatpush1.xpose.msra.mxu0 0.0
      %773 = vmatprep.subr.mxu0 0.0
      %774 = vmatpush1.xpose.msra.mxu0 0.0
      %775 = vmatprep.subr.mxu0 0.0
      %776 = vmatpush1.xpose.msra.mxu0 0.0
      %777 = vmatprep.mubr.f32.mxu0 0.0
      %778 = vmatmul.mubr.f32.gmra.mrb[0].mxu0 %v708
      %v779 = vpop.f32.mrb[0].mxu0
      %v780 = vadd.f32 0.0, %v779
      %v781 = vpop.f32.mrb[0].mxu0
      %782 = vdwg.mxu0
      %vm783 = vcmp.ge.f32.partialorder %v780, 1.0
      %v784 = vsel %vm783, -1e+30, 0.0
      %v785 = vadd.f32 %v700, %v784
      %v786 = vadd.f32 %v701, %v784
      %v787 = vadd.f32 %v702, %v784
      %v788 = vadd.f32 %v703, %v784
      %v789 = vsel %vm515, %v785, -inf
      %790 = vmax.xlane.f32.xlu0 %v789
      %v791 = vpop.xlane.xlu0 %790
      %v792 = vsel %vm515, %v786, -inf
      %793 = vmax.xlane.f32.xlu0 %v792
      %v794 = vpop.xlane.xlu0 %793
      %v795 = vsel %vm515, %v787, -inf
      %796 = vmax.xlane.f32.xlu0 %v795
      %v797 = vpop.xlane.xlu0 %796
      %v798 = vsel %vm515, %v788, -inf
      %799 = vmax.xlane.f32.xlu0 %v798
      %v800 = vpop.xlane.xlu0 %799
      %v801 = vsub.f32 %v785, %v791
      %v802 = vsub.f32 %v786, %v794
      %v803 = vsub.f32 %v787, %v797
      %v804 = vsub.f32 %v788, %v800
      %v805 = vmul.f32 %v801, 1.442695
      %v806 = vpow.pop %v805
      %v807 = vmul.f32 %v802, 1.442695
      %v808 = vpow.pop %v807
      %v809 = vmul.f32 %v803, 1.442695
      %v810 = vpow.pop %v809
      %v811 = vmul.f32 %v804, 1.442695
      %v812 = vpow.pop %v811
      %v813 = vsel %vm515, %v806, 0.0
      %814 = vadd.xlane.f32.xlu0 %v813
      %v815 = vpop.xlane.xlu0 %814
      %v816 = vsel %vm515, %v808, 0.0
      %817 = vadd.xlane.f32.xlu0 %v816
      %v818 = vpop.xlane.xlu0 %817
      %v819 = vsel %vm515, %v810, 0.0
      %820 = vadd.xlane.f32.xlu0 %v819
      %v821 = vpop.xlane.xlu0 %820
      %v822 = vsel %vm515, %v812, 0.0
      %823 = vadd.xlane.f32.xlu0 %v822
      %v824 = vpop.xlane.xlu0 %823
      %v825 = vrcp.pop %v815
      %v826 = vrcp.pop %v818
      %v827 = vrcp.pop %v821
      %v828 = vrcp.pop %v824
      %v829 = vmul.f32 %v806, %v825
      %v830 = vmul.f32 %v808, %v826
      %v831 = vmul.f32 %v810, %v827
      %v832 = vmul.f32 %v812, %v828
      %v833 = vpack.c.bf16 %v829, %v829
      %v834 = vpack.c.bf16 %v830, %v830
      %v835 = vpack.c.bf16 %v831, %v831
      %v836 = vpack.c.bf16 %v832, %v832
      %v838 = vsel %vm515, %v833, 0
      %vm840 = vcmask 1043456
      %v842 = vsel %vm840, %v511, 0
      %844 = vmatprep.subr.bf16.mxu0 0
      %845 = vmatpush1.bf16.msra.mxu0 %v842
      %846 = vmatprep.subr.bf16.mxu0 0
      %847 = vmatpush1.bf16.msra.mxu0 0
      %848 = vmatprep.subr.bf16.mxu0 0
      %849 = vmatpush1.bf16.msra.mxu0 0
      %850 = vmatprep.subr.bf16.mxu0 0
      %851 = vmatpush1.bf16.msra.mxu0 0
      %852 = vmatprep.subr.bf16.mxu0 0
      %853 = vmatpush1.bf16.msra.mxu0 0
      %854 = vmatprep.subr.bf16.mxu0 0
      %855 = vmatpush1.bf16.msra.mxu0 0
      %856 = vmatprep.subr.bf16.mxu0 0
      %857 = vmatpush1.bf16.msra.mxu0 0
      %858 = vmatprep.subr.bf16.mxu0 0
      %859 = vmatpush1.bf16.msra.mxu0 0
      %860 = vmatprep.subr.bf16.mxu0 0
      %861 = vmatpush1.bf16.msra.mxu0 0
      %862 = vmatprep.subr.bf16.mxu0 0
      %863 = vmatpush1.bf16.msra.mxu0 0
      %864 = vmatprep.subr.bf16.mxu0 0
      %865 = vmatpush1.bf16.msra.mxu0 0
      %866 = vmatprep.subr.bf16.mxu0 0
      %867 = vmatpush1.bf16.msra.mxu0 0
      %868 = vmatprep.subr.bf16.mxu0 0
      %869 = vmatpush1.bf16.msra.mxu0 0
      %870 = vmatprep.subr.bf16.mxu0 0
      %871 = vmatpush1.bf16.msra.mxu0 0
      %872 = vmatprep.subr.bf16.mxu0 0
      %873 = vmatpush1.bf16.msra.mxu0 0
      %874 = vmatprep.subr.bf16.mxu0 0
      %875 = vmatpush1.bf16.msra.mxu0 0
      %876 = vmatprep.mubr.bf16.mxu0 0
      %877 = vmatmul.mubr.bf16.gmra.mrb[0].mxu0 %v838
      %v878 = vpop.f32.mrb[0].mxu0
      %v879 = vadd.f32 0.0, %v878
      %v880 = vpop.f32.mrb[0].mxu0
      %v881 = vpop.f32.mrb[0].mxu0
      %v882 = vpop.f32.mrb[0].mxu0
      %883 = vdwg.mxu0
      %v885 = vsel %vm515, %v834, 0
      %v888 = vsel %vm840, %v512, 0
      %890 = vmatprep.subr.bf16.mxu0 0
      %891 = vmatpush1.bf16.msra.mxu0 %v888
      %892 = vmatprep.subr.bf16.mxu0 0
      %893 = vmatpush1.bf16.msra.mxu0 0
      %894 = vmatprep.subr.bf16.mxu0 0
      %895 = vmatpush1.bf16.msra.mxu0 0
      %896 = vmatprep.subr.bf16.mxu0 0
      %897 = vmatpush1.bf16.msra.mxu0 0
      %898 = vmatprep.subr.bf16.mxu0 0
      %899 = vmatpush1.bf16.msra.mxu0 0
      %900 = vmatprep.subr.bf16.mxu0 0
      %901 = vmatpush1.bf16.msra.mxu0 0
      %902 = vmatprep.subr.bf16.mxu0 0
      %903 = vmatpush1.bf16.msra.mxu0 0
      %904 = vmatprep.subr.bf16.mxu0 0
      %905 = vmatpush1.bf16.msra.mxu0 0
      %906 = vmatprep.subr.bf16.mxu0 0
      %907 = vmatpush1.bf16.msra.mxu0 0
      %908 = vmatprep.subr.bf16.mxu0 0
      %909 = vmatpush1.bf16.msra.mxu0 0
      %910 = vmatprep.subr.bf16.mxu0 0
      %911 = vmatpush1.bf16.msra.mxu0 0
      %912 = vmatprep.subr.bf16.mxu0 0
      %913 = vmatpush1.bf16.msra.mxu0 0
      %914 = vmatprep.subr.bf16.mxu0 0
      %915 = vmatpush1.bf16.msra.mxu0 0
      %916 = vmatprep.subr.bf16.mxu0 0
      %917 = vmatpush1.bf16.msra.mxu0 0
      %918 = vmatprep.subr.bf16.mxu0 0
      %919 = vmatpush1.bf16.msra.mxu0 0
      %920 = vmatprep.subr.bf16.mxu0 0
      %921 = vmatpush1.bf16.msra.mxu0 0
      %922 = vmatprep.mubr.bf16.mxu0 0
      %923 = vmatmul.mubr.bf16.gmra.mrb[0].mxu0 %v885
      %v924 = vpop.f32.mrb[0].mxu0
      %v925 = vadd.f32 0.0, %v924
      %v926 = vpop.f32.mrb[0].mxu0
      %v927 = vpop.f32.mrb[0].mxu0
      %v928 = vpop.f32.mrb[0].mxu0
      %929 = vdwg.mxu0
      %v931 = vsel %vm515, %v835, 0
      %v934 = vsel %vm840, %v513, 0
      %936 = vmatprep.subr.bf16.mxu0 0
      %937 = vmatpush1.bf16.msra.mxu0 %v934
      %938 = vmatprep.subr.bf16.mxu0 0
      %939 = vmatpush1.bf16.msra.mxu0 0
      %940 = vmatprep.subr.bf16.mxu0 0
      %941 = vmatpush1.bf16.msra.mxu0 0
      %942 = vmatprep.subr.bf16.mxu0 0
      %943 = vmatpush1.bf16.msra.mxu0 0
      %944 = vmatprep.subr.bf16.mxu0 0
      %945 = vmatpush1.bf16.msra.mxu0 0
      %946 = vmatprep.subr.bf16.mxu0 0
      %947 = vmatpush1.bf16.msra.mxu0 0
      %948 = vmatprep.subr.bf16.mxu0 0
      %949 = vmatpush1.bf16.msra.mxu0 0
      %950 = vmatprep.subr.bf16.mxu0 0
      %951 = vmatpush1.bf16.msra.mxu0 0
      %952 = vmatprep.subr.bf16.mxu0 0
      %953 = vmatpush1.bf16.msra.mxu0 0
      %954 = vmatprep.subr.bf16.mxu0 0
      %955 = vmatpush1.bf16.msra.mxu0 0
      %956 = vmatprep.subr.bf16.mxu0 0
      %957 = vmatpush1.bf16.msra.mxu0 0
      %958 = vmatprep.subr.bf16.mxu0 0
      %959 = vmatpush1.bf16.msra.mxu0 0
      %960 = vmatprep.subr.bf16.mxu0 0
      %961 = vmatpush1.bf16.msra.mxu0 0
      %962 = vmatprep.subr.bf16.mxu0 0
      %963 = vmatpush1.bf16.msra.mxu0 0
      %964 = vmatprep.subr.bf16.mxu0 0
      %965 = vmatpush1.bf16.msra.mxu0 0
      %966 = vmatprep.subr.bf16.mxu0 0
      %967 = vmatpush1.bf16.msra.mxu0 0
      %968 = vmatprep.mubr.bf16.mxu0 0
      %969 = vmatmul.mubr.bf16.gmra.mrb[0].mxu0 %v931
      %v970 = vpop.f32.mrb[0].mxu0
      %v971 = vadd.f32 0.0, %v970
      %v972 = vpop.f32.mrb[0].mxu0
      %v973 = vpop.f32.mrb[0].mxu0
      %v974 = vpop.f32.mrb[0].mxu0
      %975 = vdwg.mxu0
      %v977 = vsel %vm515, %v836, 0
      %v980 = vsel %vm840, %v514, 0
      %982 = vmatprep.subr.bf16.mxu0 0
      %983 = vmatpush1.bf16.msra.mxu0 %v980
      %984 = vmatprep.subr.bf16.mxu0 0
      %985 = vmatpush1.bf16.msra.mxu0 0
      %986 = vmatprep.subr.bf16.mxu0 0
      %987 = vmatpush1.bf16.msra.mxu0 0
      %988 = vmatprep.subr.bf16.mxu0 0
      %989 = vmatpush1.bf16.msra.mxu0 0
      %990 = vmatprep.subr.bf16.mxu0 0
      %991 = vmatpush1.bf16.msra.mxu0 0
      %992 = vmatprep.subr.bf16.mxu0 0
      %993 = vmatpush1.bf16.msra.mxu0 0
      %994 = vmatprep.subr.bf16.mxu0 0
      %995 = vmatpush1.bf16.msra.mxu0 0
      %996 = vmatprep.subr.bf16.mxu0 0
      %997 = vmatpush1.bf16.msra.mxu0 0
      %998 = vmatprep.subr.bf16.mxu0 0
      %999 = vmatpush1.bf16.msra.mxu0 0
      %1000 = vmatprep.subr.bf16.mxu0 0
      %1001 = vmatpush1.bf16.msra.mxu0 0
      %1002 = vmatprep.subr.bf16.mxu0 0
      %1003 = vmatpush1.bf16.msra.mxu0 0
      %1004 = vmatprep.subr.bf16.mxu0 0
      %1005 = vmatpush1.bf16.msra.mxu0 0
      %1006 = vmatprep.subr.bf16.mxu0 0
      %1007 = vmatpush1.bf16.msra.mxu0 0
      %1008 = vmatprep.subr.bf16.mxu0 0
      %1009 = vmatpush1.bf16.msra.mxu0 0
      %1010 = vmatprep.subr.bf16.mxu0 0
      %1011 = vmatpush1.bf16.msra.mxu0 0
      %1012 = vmatprep.subr.bf16.mxu0 0
      %1013 = vmatpush1.bf16.msra.mxu0 0
      %1014 = vmatprep.mubr.bf16.mxu0 0
      %1015 = vmatmul.mubr.bf16.gmra.mrb[0].mxu0 %v977
      %v1016 = vpop.f32.mrb[0].mxu0
      %v1017 = vadd.f32 0.0, %v1016
      %v1018 = vpop.f32.mrb[0].mxu0
      %v1019 = vpop.f32.mrb[0].mxu0
      %v1020 = vpop.f32.mrb[0].mxu0
      %1021 = vdwg.mxu0
      %v1022 = vpack.c.bf16 %v879, %v879
      %v1023 = vpack.c.bf16 %v925, %v925
      %v1024 = vpack.c.bf16 %v971, %v971
      %v1025 = vpack.c.bf16 %v1017, %v1017
      %v1026 = vld [vmem:[%s6] sm:$0xf]
      %v1027 = vld [vmem:[%s6 + $0x4] sm:$0xf]
      %v1028 = vld [vmem:[%s6 + $0x8] sm:$0xf]
      %v1029 = vld [vmem:[%s6 + $0xc] sm:$0xf]
      %v1031 = vsel %vm515, %v1022, 0
      %v1034 = vsel %vm840, %v1026, 0
      %1036 = vmatprep.subr.bf16.mxu0 0
      %1037 = vmatpush1.bf16.msra.mxu0 %v1034
      %1038 = vmatprep.subr.bf16.mxu0 0
      %1039 = vmatpush1.bf16.msra.mxu0 0
      %1040 = vmatprep.subr.bf16.mxu0 0
      %1041 = vmatpush1.bf16.msra.mxu0 0
      %1042 = vmatprep.subr.bf16.mxu0 0
      %1043 = vmatpush1.bf16.msra.mxu0 0
      %1044 = vmatprep.subr.bf16.mxu0 0
      %1045 = vmatpush1.bf16.msra.mxu0 0
      %1046 = vmatprep.subr.bf16.mxu0 0
      %1047 = vmatpush1.bf16.msra.mxu0 0
      %1048 = vmatprep.subr.bf16.mxu0 0
      %1049 = vmatpush1.bf16.msra.mxu0 0
      %1050 = vmatprep.subr.bf16.mxu0 0
      %1051 = vmatpush1.bf16.msra.mxu0 0
      %1052 = vmatprep.subr.bf16.mxu0 0
      %1053 = vmatpush1.bf16.msra.mxu0 0
      %1054 = vmatprep.subr.bf16.mxu0 0
      %1055 = vmatpush1.bf16.msra.mxu0 0
      %1056 = vmatprep.subr.bf16.mxu0 0
      %1057 = vmatpush1.bf16.msra.mxu0 0
      %1058 = vmatprep.subr.bf16.mxu0 0
      %1059 = vmatpush1.bf16.msra.mxu0 0
      %1060 = vmatprep.subr.bf16.mxu0 0
      %1061 = vmatpush1.bf16.msra.mxu0 0
      %1062 = vmatprep.subr.bf16.mxu0 0
      %1063 = vmatpush1.bf16.msra.mxu0 0
      %1064 = vmatprep.subr.bf16.mxu0 0
      %1065 = vmatpush1.bf16.msra.mxu0 0
      %1066 = vmatprep.subr.bf16.mxu0 0
      %1067 = vmatpush1.bf16.msra.mxu0 0
      %1068 = vmatprep.mubr.bf16.mxu0 0
      %1069 = vmatmul.mubr.bf16.gmra.mrb[0].mxu0 %v1031
      %v1070 = vpop.f32.mrb[0].mxu0
      %v1071 = vadd.f32 0.0, %v1070
      %v1072 = vpop.f32.mrb[0].mxu0
      %v1073 = vpop.f32.mrb[0].mxu0
      %v1074 = vpop.f32.mrb[0].mxu0
      %1075 = vdwg.mxu0
      %v1077 = vsel %vm515, %v1023, 0
      %v1080 = vsel %vm840, %v1027, 0
      %1082 = vmatprep.subr.bf16.mxu0 0
      %1083 = vmatpush1.bf16.msra.mxu0 %v1080
      %1084 = vmatprep.subr.bf16.mxu0 0
      %1085 = vmatpush1.bf16.msra.mxu0 0
      %1086 = vmatprep.subr.bf16.mxu0 0
      %1087 = vmatpush1.bf16.msra.mxu0 0
      %1088 = vmatprep.subr.bf16.mxu0 0
      %1089 = vmatpush1.bf16.msra.mxu0 0
      %1090 = vmatprep.subr.bf16.mxu0 0
      %1091 = vmatpush1.bf16.msra.mxu0 0
      %1092 = vmatprep.subr.bf16.mxu0 0
      %1093 = vmatpush1.bf16.msra.mxu0 0
      %1094 = vmatprep.subr.bf16.mxu0 0
      %1095 = vmatpush1.bf16.msra.mxu0 0
      %1096 = vmatprep.subr.bf16.mxu0 0
      %1097 = vmatpush1.bf16.msra.mxu0 0
      %1098 = vmatprep.subr.bf16.mxu0 0
      %1099 = vmatpush1.bf16.msra.mxu0 0
      %1100 = vmatprep.subr.bf16.mxu0 0
      %1101 = vmatpush1.bf16.msra.mxu0 0
      %1102 = vmatprep.subr.bf16.mxu0 0
      %1103 = vmatpush1.bf16.msra.mxu0 0
      %1104 = vmatprep.subr.bf16.mxu0 0
      %1105 = vmatpush1.bf16.msra.mxu0 0
      %1106 = vmatprep.subr.bf16.mxu0 0
      %1107 = vmatpush1.bf16.msra.mxu0 0
      %1108 = vmatprep.subr.bf16.mxu0 0
      %1109 = vmatpush1.bf16.msra.mxu0 0
      %1110 = vmatprep.subr.bf16.mxu0 0
      %1111 = vmatpush1.bf16.msra.mxu0 0
      %1112 = vmatprep.subr.bf16.mxu0 0
      %1113 = vmatpush1.bf16.msra.mxu0 0
      %1114 = vmatprep.mubr.bf16.mxu0 0
      %1115 = vmatmul.mubr.bf16.gmra.mrb[0].mxu0 %v1077
      %v1116 = vpop.f32.mrb[0].mxu0
      %v1117 = vadd.f32 0.0, %v1116
      %v1118 = vpop.f32.mrb[0].mxu0
      %v1119 = vpop.f32.mrb[0].mxu0
      %v1120 = vpop.f32.mrb[0].mxu0
      %1121 = vdwg.mxu0
      %v1123 = vsel %vm515, %v1024, 0
      %v1126 = vsel %vm840, %v1028, 0
      %1128 = vmatprep.subr.bf16.mxu0 0
      %1129 = vmatpush1.bf16.msra.mxu0 %v1126
      %1130 = vmatprep.subr.bf16.mxu0 0
      %1131 = vmatpush1.bf16.msra.mxu0 0
      %1132 = vmatprep.subr.bf16.mxu0 0
      %1133 = vmatpush1.bf16.msra.mxu0 0
      %1134 = vmatprep.subr.bf16.mxu0 0
      %1135 = vmatpush1.bf16.msra.mxu0 0
      %1136 = vmatprep.subr.bf16.mxu0 0
      %1137 = vmatpush1.bf16.msra.mxu0 0
      %1138 = vmatprep.subr.bf16.mxu0 0
      %1139 = vmatpush1.bf16.msra.mxu0 0
      %1140 = vmatprep.subr.bf16.mxu0 0
      %1141 = vmatpush1.bf16.msra.mxu0 0
      %1142 = vmatprep.subr.bf16.mxu0 0
      %1143 = vmatpush1.bf16.msra.mxu0 0
      %1144 = vmatprep.subr.bf16.mxu0 0
      %1145 = vmatpush1.bf16.msra.mxu0 0
      %1146 = vmatprep.subr.bf16.mxu0 0
      %1147 = vmatpush1.bf16.msra.mxu0 0
      %1148 = vmatprep.subr.bf16.mxu0 0
      %1149 = vmatpush1.bf16.msra.mxu0 0
      %1150 = vmatprep.subr.bf16.mxu0 0
      %1151 = vmatpush1.bf16.msra.mxu0 0
      %1152 = vmatprep.subr.bf16.mxu0 0
      %1153 = vmatpush1.bf16.msra.mxu0 0
      %1154 = vmatprep.subr.bf16.mxu0 0
      %1155 = vmatpush1.bf16.msra.mxu0 0
      %1156 = vmatprep.subr.bf16.mxu0 0
      %1157 = vmatpush1.bf16.msra.mxu0 0
      %1158 = vmatprep.subr.bf16.mxu0 0
      %1159 = vmatpush1.bf16.msra.mxu0 0
      %1160 = vmatprep.mubr.bf16.mxu0 0
      %1161 = vmatmul.mubr.bf16.gmra.mrb[0].mxu0 %v1123
      %v1162 = vpop.f32.mrb[0].mxu0
      %v1163 = vadd.f32 0.0, %v1162
      %v1164 = vpop.f32.mrb[0].mxu0
      %v1165 = vpop.f32.mrb[0].mxu0
      %v1166 = vpop.f32.mrb[0].mxu0
      %1167 = vdwg.mxu0
      %v1169 = vsel %vm515, %v1025, 0
      %v1172 = vsel %vm840, %v1029, 0
      %1174 = vmatprep.subr.bf16.mxu0 0
      %1175 = vmatpush1.bf16.msra.mxu0 %v1172
      %1176 = vmatprep.subr.bf16.mxu0 0
      %1177 = vmatpush1.bf16.msra.mxu0 0
      %1178 = vmatprep.subr.bf16.mxu0 0
      %1179 = vmatpush1.bf16.msra.mxu0 0
      %1180 = vmatprep.subr.bf16.mxu0 0
      %1181 = vmatpush1.bf16.msra.mxu0 0
      %1182 = vmatprep.subr.bf16.mxu0 0
      %1183 = vmatpush1.bf16.msra.mxu0 0
      %1184 = vmatprep.subr.bf16.mxu0 0
      %1185 = vmatpush1.bf16.msra.mxu0 0
      %1186 = vmatprep.subr.bf16.mxu0 0
      %1187 = vmatpush1.bf16.msra.mxu0 0
      %1188 = vmatprep.subr.bf16.mxu0 0
      %1189 = vmatpush1.bf16.msra.mxu0 0
      %1190 = vmatprep.subr.bf16.mxu0 0
      %1191 = vmatpush1.bf16.msra.mxu0 0
      %1192 = vmatprep.subr.bf16.mxu0 0
      %1193 = vmatpush1.bf16.msra.mxu0 0
      %1194 = vmatprep.subr.bf16.mxu0 0
      %1195 = vmatpush1.bf16.msra.mxu0 0
      %1196 = vmatprep.subr.bf16.mxu0 0
      %1197 = vmatpush1.bf16.msra.mxu0 0
      %1198 = vmatprep.subr.bf16.mxu0 0
      %1199 = vmatpush1.bf16.msra.mxu0 0
      %1200 = vmatprep.subr.bf16.mxu0 0
      %1201 = vmatpush1.bf16.msra.mxu0 0
      %1202 = vmatprep.subr.bf16.mxu0 0
      %1203 = vmatpush1.bf16.msra.mxu0 0
      %1204 = vmatprep.subr.bf16.mxu0 0
      %1205 = vmatpush1.bf16.msra.mxu0 0
      %1206 = vmatprep.mubr.bf16.mxu0 0
      %1207 = vmatmul.mubr.bf16.gmra.mrb[0].mxu0 %v1169
      %v1208 = vpop.f32.mrb[0].mxu0
      %v1209 = vadd.f32 0.0, %v1208
      %v1210 = vpop.f32.mrb[0].mxu0
      %v1211 = vpop.f32.mrb[0].mxu0
      %v1212 = vpop.f32.mrb[0].mxu0
      %1213 = vdwg.mxu0
      %vm1214 = vcmask 261120
      %v1215 = vsel %vm1214, %v1071, 0.0
      %v1216 = vsel %vm1214, %v1117, 0.0
      %v1217 = vadd.f32 %v1215, %v1216
      %v1218 = vsel %vm1214, %v1163, 0.0
      %v1219 = vadd.f32 %v1217, %v1218
      %v1220 = vsel %vm1214, %v1209, 0.0
      %v1221 = vadd.f32 %v1219, %v1220
      %v1222 = vld [vmem:[%s7] sm:$0x1]
      %v1224 = vlaneseq
      %v1225 = vshrl.u32 %v1224, 7
      %v1226 = vsub.s32 0, %v1225
      %v1227 = vrot.slane %v1222, %v1226
      %v1229 = vadd.f32 %v1221, %v1227
      %v1230 = vld [vmem:[%s483] sm:$0xff]
      %v1231 = vadd.f32 %v1230, %v1229
      %v1232 = vld [vmem:[%s8] sm:$0x1]
      %v1233 = vld [vmem:[%s9] sm:$0x1]
      %v1234 = vsel %vm1214, %v1231, 0.0
      %1235 = vadd.xlane.f32.xlu0 %v1234
      %v1236 = vpop.xlane.xlu0 %1235
      %v1237 = vrcp.pop 32.0
      %v1238 = vmul.f32 %v1236, %v1237
      %v1239 = vsub.f32 %v1231, %v1238
      %v1240 = vmul.f32 %v1239, %v1239
      %v1241 = vsel %vm1214, %v1240, 0.0
      %1242 = vadd.xlane.f32.xlu0 %v1241
      %v1243 = vpop.xlane.xlu0 %1242
      %v1244 = vmul.f32 %v1243, %v1237
      %v1245 = vadd.f32 %v1244, 1e-05
      %v1246 = vrsqrt.pop %v1245
      %v1247 = vmul.f32 %v1239, %v1246
      %v1249 = vlaneseq
      %v1250 = vshrl.u32 %v1249, 7
      %v1251 = vsub.s32 0, %v1250
      %v1252 = vrot.slane %v1232, %v1251
      %v1254 = vmul.f32 %v1247, %v1252
      %v1256 = vlaneseq
      %v1257 = vshrl.u32 %v1256, 7
      %v1258 = vsub.s32 0, %v1257
      %v1259 = vrot.slane %v1233, %v1258
      %v1261 = vadd.f32 %v1254, %v1259
      %1262 = vst.msk [vmem:[%s501] sm:$0xff] %vm1214, %v1261
      %p1263 = scmp.lt.s32.totalorder %s25, 3
      %s1264 = scalar_select %p1263, %s25, 3
      %p1265 = scmp.lt.s32.totalorder %s26, 0
      %s1266 = scalar_select %p1265, %s26, 0
      %s1267 = sadd.s32 %s1266, %s1264
      %s1268 = smul.addr %s1267, 8
      %s1269 = scalar_lea.vmem %s10, %s1268
      // Predicated region
      $region61: #{_lambda_.30} parent=59 // pred_check
        %p1270 = pneg %p299
      $region62: #{_lambda_.30} parent=59 // pred_check_branch
        %1272 = sbr.rel (%p1270) target = $region64
      $region63: #{_lambda_.30} parent=59 // pred_region
        _
      $region64: #{_lambda_.30} parent=59 // pred_fallthru
        _
    $region60: #{_lambda_.30} parent=5 // pred_fallthru
      _
    %p1273 = scmp.le.s32.totalorder 2, %s16
    // Predicated region
    $region65: #{_lambda_.30} parent=5 // pred_check
      %p1274 = pneg %p1273
    $region66: #{_lambda_.30} parent=5 // pred_check_branch
      %1276 = sbr.rel (%p1274) target = $region68
    $region67: #{_lambda_.30} parent=5 // pred_region
      %s1277 = ssub.s32 %s16, 2
      // Predicated region
      $region69: #{_lambda_.30} parent=67 // pred_check
        %p1278 = pneg %p305
      $region70: #{_lambda_.30} parent=67 // pred_check_branch
        %1280 = sbr.rel (%p1278) target = $region72
      $region71: #{_lambda_.30} parent=67 // pred_region
        %p1281 = scmp.lt.s32.totalorder %s27, 3
        %s1282 = scalar_select %p1281, %s27, 3
        %p1283 = scmp.lt.s32.totalorder %s28, 0
        %s1284 = scalar_select %p1283, %s28, 0
        %s1285 = sadd.s32 %s1284, %s1282
        %s1286 = smul.addr %s1285, 8
        %s1287 = scalar_lea.vmem %s10, %s1286
      $region72: #{_lambda_.30} parent=67 // pred_fallthru
        _
    $region68: #{_lambda_.30} parent=5 // pred_fallthru
      _
  $region6: #{_lambda_.30} parent=0 // loop_footer
    %s20 = sadd.s32 1, %s16
  $region7: #{_lambda_.30} parent=0 // loop_footer_branch
    %15 = sbr.rel target = $region3
  $region8: #{_lambda_.30} parent=0 // loop_exit
    _

</llo_original>
